<compile_context>
chip_gen: v6e
topology: v6e:2x2x1
jax: 0.10.0
libtpu: 0.0.40
codegen_flags: <defaults>
</compile_context>

<pallas_src>
import jax
import jax.numpy as jnp
from jax.experimental import pallas as pl
from jax.experimental.pallas import tpu as pltpu

LANE = 128  # vreg lane width / padded channel count


# ----------------------------------------------------------------------------
# Pallas kernels
# ----------------------------------------------------------------------------
def _conv_relu_pool_kernel(p00_ref, p01_ref, p10_ref, p11_ref, w_ref, b_ref,
                           o_ref):
    """Fused conv (as im2col matmul) + bias + ReLU + 2x2 maxpool.

    Each p??_ref holds the im2col patches of one pooling-window corner, with
    rows ordered (n, pooled_y, pooled_x).  relu(max(z)+b) == max(relu(z+b)).
    """
    w = w_ref[...]
    m00 = jnp.dot(p00_ref[...], w, preferred_element_type=jnp.float32)
    m01 = jnp.dot(p01_ref[...], w, preferred_element_type=jnp.float32)
    m10 = jnp.dot(p10_ref[...], w, preferred_element_type=jnp.float32)
    m11 = jnp.dot(p11_ref[...], w, preferred_element_type=jnp.float32)
    m = jnp.maximum(jnp.maximum(m00, m01), jnp.maximum(m10, m11))
    o_ref[...] = jnp.maximum(m + b_ref[...], 0.0).astype(o_ref.dtype)


def _fc_stack_kernel(x_ref, w1_ref, b1_ref, w2_ref, b2_ref, w3_ref, b3_ref,
                     o_ref):
    """fc1+ReLU -> fc2+ReLU -> fc3, chained entirely in VMEM/vregs.

    Matmuls run bf16 on the MXU with f32 accumulation; bias/ReLU stay f32 and
    the activation is only downcast when fed back to the next matmul.
    """
    h = jnp.dot(x_ref[...], w1_ref[...],
                preferred_element_type=jnp.float32) + b1_ref[...]
    h = jnp.maximum(h, 0.0)
    h = jnp.dot(h.astype(w2_ref.dtype), w2_ref[...],
                preferred_element_type=jnp.float32) + b2_ref[...]
    h = jnp.maximum(h, 0.0)
    o = jnp.dot(h.astype(w3_ref.dtype), w3_ref[...],
                preferred_element_type=jnp.float32) + b3_ref[...]
    o_ref[...] = o.astype(o_ref.dtype)


# ----------------------------------------------------------------------------
# Wrappers
# ----------------------------------------------------------------------------
def _pick_tile_m(m, cap=512):
    """Largest row tile <= cap that divides m and is a multiple of 8; else full."""
    if m <= cap or m % 8 != 0:
        return m
    for cand in range(cap, 7, -8):
        if m % cand == 0:
            return cand
    return m


def conv_relu_pool(x_nhwc, w_mat, b_mat, *, kh=5, kw=5):
    """Fused valid conv (stride 1) + ReLU + 2x2/2 maxpool.

    x_nhwc: (N, H, W, Cin) activation.
    w_mat : (Kpad, 128) bf16, rows ordered (kh, kw, cin), zero-padded.
    b_mat : (1, 128) f32, zero-padded.
    Returns (N, OH//2, OW//2, 128) bf16 (padded channels are exactly 0).
    """
    n, h, w, cin = x_nhwc.shape
    kpad, cpad = w_mat.shape
    oh, ow = h - kh + 1, w - kw + 1
    oh2, ow2 = oh // 2, ow // 2
    kreal = kh * kw * cin
    assert kreal <= kpad and oh % 2 == 0 and ow % 2 == 0

    # im2col per pooling-window corner (XLA glue).  Column order (i, j, cin)
    # matches the (kh, kw, cin) weight-row flattening.
    corners = []
    for dy in range(2):
        for dx in range(2):
            cols = []
            for i in range(kh):
                for j in range(kw):
                    cols.append(x_nhwc[:, dy + i:dy + i + 2 * oh2:2,
                                       dx + j:dx + j + 2 * ow2:2, :])
            p = jnp.stack(cols, axis=3).reshape(n * oh2 * ow2, kreal)
            p = jnp.pad(p, ((0, 0), (0, kpad - kreal))).astype(jnp.bfloat16)
            corners.append(p)

    m_rows = n * oh2 * ow2
    tile_m = _pick_tile_m(m_rows)
    grid = (m_rows // tile_m,)

    act_spec = pl.BlockSpec((tile_m, kpad), lambda i: (i, 0))
    cost = pl.CostEstimate(
        flops=2 * 4 * m_rows * kpad * cpad,
        transcendentals=0,
        bytes_accessed=(4 * m_rows * kpad * 2 + kpad * cpad * 2 + cpad * 4
                        + m_rows * cpad * 2),
    )
    out = pl.pallas_call(
        _conv_relu_pool_kernel,
        out_shape=jax.ShapeDtypeStruct((m_rows, cpad), jnp.bfloat16),
        grid=grid,
        in_specs=[act_spec, act_spec, act_spec, act_spec,
                  pl.BlockSpec((kpad, cpad), lambda i: (0, 0)),
                  pl.BlockSpec((1, cpad), lambda i: (0, 0))],
        out_specs=pl.BlockSpec((tile_m, cpad), lambda i: (i, 0)),
        compiler_params=pltpu.CompilerParams(
            dimension_semantics=("parallel",)),
        cost_estimate=cost,
    )(*corners, w_mat, b_mat)
    return out.reshape(n, oh2, ow2, cpad)


def fc_stack(x_flat, p):
    """Single pallas_call for the whole fc1/fc2/fc3 stack.  x_flat: (N, 3200) bf16."""
    n, kin = x_flat.shape
    cost = pl.CostEstimate(
        flops=2 * n * (kin * LANE + LANE * LANE + LANE * LANE),
        transcendentals=0,
        bytes_accessed=(n * kin * 2 + kin * LANE * 2 + 2 * LANE * LANE * 2
                        + 3 * LANE * 4 + n * LANE * 4),
    )

    def full(shape):
        return pl.BlockSpec(shape, lambda i: (0, 0))

    return pl.pallas_call(
        _fc_stack_kernel,
        out_shape=jax.ShapeDtypeStruct((n, LANE), jnp.float32),
        grid=(1,),
        in_specs=[full((n, kin)),
                  full((kin, LANE)), full((1, LANE)),
                  full((LANE, LANE)), full((1, LANE)),
                  full((LANE, LANE)), full((1, LANE))],
        out_specs=full((n, LANE)),
        compiler_params=pltpu.CompilerParams(
            dimension_semantics=("arbitrary",)),
        cost_estimate=cost,
    )(x_flat, p["fc1_w"], p["fc1_b"], p["fc2_w"], p["fc2_b"],
      p["fc3_w"], p["fc3_b"])


# ----------------------------------------------------------------------------
# Parameter prep (one-time): pad to lane width, fold layout permutations in.
# ----------------------------------------------------------------------------
def prepare_params(params):
    def conv_mat(wt, bt, kpad):
        cout, cin, kh, kw = wt.shape
        wm = jnp.transpose(wt, (2, 3, 1, 0)).reshape(kh * kw * cin, cout)
        wm = jnp.pad(wm, ((0, kpad - kh * kw * cin), (0, LANE - cout)))
        bm = jnp.pad(bt, (0, LANE - cout)).reshape(1, LANE)
        return wm.astype(jnp.bfloat16), bm.astype(jnp.float32)

    p = {}
    p["conv1_w"], p["conv1_b"] = conv_mat(params["conv1_w"],
                                          params["conv1_b"], 128)
    p["conv2_w"], p["conv2_b"] = conv_mat(params["conv2_w"],
                                          params["conv2_b"], 256)

    # fc1: PyTorch flattens NCHW (16,5,5) as (c,h,w); our kernel feeds an
    # NHWC-flattened (h,w,c_pad=128) vector, so permute + zero-scatter the
    # weight rows once here (rows for padded channels stay 0).
    w1 = params["fc1_w"].reshape(120, 16, 5, 5)        # (out, c, h, w)
    w1 = jnp.transpose(w1, (2, 3, 1, 0))               # (h, w, c, out)
    w1_full = jnp.zeros((5, 5, LANE, 120), jnp.float32).at[:, :, :16, :].set(w1)
    w1_full = w1_full.reshape(5 * 5 * LANE, 120)
    p["fc1_w"] = jnp.pad(w1_full, ((0, 0), (0, LANE - 120))).astype(jnp.bfloat16)
    p["fc1_b"] = jnp.pad(params["fc1_b"],
                         (0, LANE - 120)).reshape(1, LANE).astype(jnp.float32)

    w2 = jnp.pad(params["fc2_w"].T, ((0, LANE - 120), (0, LANE - 84)))
    p["fc2_w"] = w2.astype(jnp.bfloat16)
    p["fc2_b"] = jnp.pad(params["fc2_b"],
                         (0, LANE - 84)).reshape(1, LANE).astype(jnp.float32)

    w3 = jnp.pad(params["fc3_w"].T, ((0, LANE - 84), (0, LANE - 10)))
    p["fc3_w"] = w3.astype(jnp.bfloat16)
    p["fc3_b"] = jnp.pad(params["fc3_b"],
                         (0, LANE - 10)).reshape(1, LANE).astype(jnp.float32)
    return p


# ----------------------------------------------------------------------------
# Full forward pass (NHWC end-to-end)
# ----------------------------------------------------------------------------
def net_forward(x_nchw, prepped):
    x = jnp.transpose(x_nchw, (0, 2, 3, 1)).astype(jnp.float32)   # NHWC, once
    x = conv_relu_pool(x, prepped["conv1_w"], prepped["conv1_b"])  # (N,14,14,128)
    x = x[..., :6]                                                 # real conv1 chans
    x = conv_relu_pool(x, prepped["conv2_w"], prepped["conv2_b"])  # (N,5,5,128)
    n = x.shape[0]
    x = x.reshape(n, 5 * 5 * LANE)     # contiguous flatten, padding carried
    logits = fc_stack(x, prepped)      # (N, 128) f32
    return logits[:, :10]


def init_params(key):
    """Deterministic synthetic params in PyTorch layouts (fan-in uniform)."""
    def uni(k, shape, fan_in):
        bound = 1.0 / jnp.sqrt(fan_in)
        return jax.random.uniform(k, shape, jnp.float32, -bound, bound)

    ks = jax.random.split(key, 10)
    return {
        "conv1_w": uni(ks[0], (6, 3, 5, 5), 3 * 5 * 5),
        "conv1_b": uni(ks[1], (6,), 3 * 5 * 5),
        "conv2_w": uni(ks[2], (16, 6, 5, 5), 6 * 5 * 5),
        "conv2_b": uni(ks[3], (16,), 6 * 5 * 5),
        "fc1_w": uni(ks[4], (120, 400), 400),   # nn.Linear layout (out, in)
        "fc1_b": uni(ks[5], (120,), 400),
        "fc2_w": uni(ks[6], (84, 120), 120),
        "fc2_b": uni(ks[7], (84,), 120),
        "fc3_w": uni(ks[8], (10, 84), 84),
        "fc3_b": uni(ks[9], (10,), 84),
    }


if __name__ == "__main__":
    key = jax.random.PRNGKey(0)
    k_x, k_p = jax.random.split(key)
    # Spatial size is fixed to 32x32 by the fc1 = Linear(16*5*5, 120) contract.
    x = jax.random.normal(k_x, (2, 3, 32, 32), dtype=jnp.float32)  # NCHW
    params = init_params(k_p)
    prepped = prepare_params(params)

    out = jax.jit(net_forward)(x, prepped)
    out = jax.block_until_ready(out)
    assert out.shape == (2, 10), out.shape
    assert bool(jnp.all(jnp.isfinite(out)))
    print("KERNEL_OK")
</pallas_src>

<mosaic_0001>
module attributes {stable_mosaic.version = 11 : i64} {
  func.func @_conv_relu_pool_kernel(%arg0: i32, %arg1: memref<392x128xbf16, #tpu.memory_space<vmem>>, %arg2: memref<392x128xbf16, #tpu.memory_space<vmem>>, %arg3: memref<392x128xbf16, #tpu.memory_space<vmem>>, %arg4: memref<392x128xbf16, #tpu.memory_space<vmem>>, %arg5: memref<128x128xbf16, #tpu.memory_space<vmem>>, %arg6: memref<1x128xf32, #tpu.memory_space<vmem>>, %arg7: memref<392x128xbf16, #tpu.memory_space<vmem>>) attributes {dimension_semantics = [#tpu.dimension_semantics<parallel>], iteration_bounds = array<i64: 1>, scalar_prefetch = 0 : i64, scratch_operands = 0 : i64, tpu.core_type = #tpu.core_type<tc>, window_params = [{transform_indices = @transform_0, window_bounds = array<i64: 392, 128>}, {transform_indices = @transform_1, window_bounds = array<i64: 392, 128>}, {transform_indices = @transform_2, window_bounds = array<i64: 392, 128>}, {transform_indices = @transform_3, window_bounds = array<i64: 392, 128>}, {pipeline_mode = #tpu.pipeline_mode<synchronous>, transform_indices = @transform_4, window_bounds = array<i64: 128, 128>}, {pipeline_mode = #tpu.pipeline_mode<synchronous>, transform_indices = @transform_5, window_bounds = array<i64: 1, 128>}, {transform_indices = @transform_6, window_bounds = array<i64: 392, 128>}]} {
    %c0 = arith.constant 0 : index
    %c0_0 = arith.constant 0 : index
    %0 = vector.load %arg5[%c0, %c0_0] : memref<128x128xbf16, #tpu.memory_space<vmem>>, vector<128x128xbf16>
    %c0_1 = arith.constant 0 : index
    %c0_2 = arith.constant 0 : index
    %1 = vector.load %arg1[%c0_1, %c0_2] : memref<392x128xbf16, #tpu.memory_space<vmem>>, vector<392x128xbf16>
    %cst = arith.constant dense<0.000000e+00> : vector<392x128xf32>
    %2 = tpu.matmul %1, %0, %cst {dimension_numbers = #tpu.dot_dimension_numbers<[1], [0], [0], [1], [0, 0, 1, 1], [], []>} : vector<392x128xbf16>, vector<128x128xbf16>, vector<392x128xf32> -> vector<392x128xf32>
    %c0_3 = arith.constant 0 : index
    %c0_4 = arith.constant 0 : index
    %3 = vector.load %arg2[%c0_3, %c0_4] : memref<392x128xbf16, #tpu.memory_space<vmem>>, vector<392x128xbf16>
    %cst_5 = arith.constant dense<0.000000e+00> : vector<392x128xf32>
    %4 = tpu.matmul %3, %0, %cst_5 {dimension_numbers = #tpu.dot_dimension_numbers<[1], [0], [0], [1], [0, 0, 1, 1], [], []>} : vector<392x128xbf16>, vector<128x128xbf16>, vector<392x128xf32> -> vector<392x128xf32>
    %c0_6 = arith.constant 0 : index
    %c0_7 = arith.constant 0 : index
    %5 = vector.load %arg3[%c0_6, %c0_7] : memref<392x128xbf16, #tpu.memory_space<vmem>>, vector<392x128xbf16>
    %cst_8 = arith.constant dense<0.000000e+00> : vector<392x128xf32>
    %6 = tpu.matmul %5, %0, %cst_8 {dimension_numbers = #tpu.dot_dimension_numbers<[1], [0], [0], [1], [0, 0, 1, 1], [], []>} : vector<392x128xbf16>, vector<128x128xbf16>, vector<392x128xf32> -> vector<392x128xf32>
    %c0_9 = arith.constant 0 : index
    %c0_10 = arith.constant 0 : index
    %7 = vector.load %arg4[%c0_9, %c0_10] : memref<392x128xbf16, #tpu.memory_space<vmem>>, vector<392x128xbf16>
    %cst_11 = arith.constant dense<0.000000e+00> : vector<392x128xf32>
    %8 = tpu.matmul %7, %0, %cst_11 {dimension_numbers = #tpu.dot_dimension_numbers<[1], [0], [0], [1], [0, 0, 1, 1], [], []>} : vector<392x128xbf16>, vector<128x128xbf16>, vector<392x128xf32> -> vector<392x128xf32>
    %9 = arith.maximumf %2, %4 : vector<392x128xf32>
    %10 = arith.maximumf %6, %8 : vector<392x128xf32>
    %11 = arith.maximumf %9, %10 : vector<392x128xf32>
    %c0_12 = arith.constant 0 : index
    %c0_13 = arith.constant 0 : index
    %12 = vector.load %arg6[%c0_12, %c0_13] : memref<1x128xf32, #tpu.memory_space<vmem>>, vector<1x128xf32>
    %13 = vector.broadcast %12 : vector<1x128xf32> to vector<392x128xf32>
    %14 = arith.addf %11, %13 : vector<392x128xf32>
    %cst_14 = arith.constant 0.000000e+00 : f32
    %15 = vector.broadcast %cst_14 : f32 to vector<392x128xf32>
    %16 = arith.maximumf %14, %15 : vector<392x128xf32>
    %17 = arith.truncf %16 : vector<392x128xf32> to vector<392x128xbf16>
    %c0_15 = arith.constant 0 : index
    %c0_16 = arith.constant 0 : index
    %18 = vector.load %arg7[%c0_15, %c0_16] : memref<392x128xbf16, #tpu.memory_space<vmem>>, vector<392x128xbf16>
    tpu.vector_store %arg7[%c0_15, %c0_16], %17 {strides = array<i32>} : memref<392x128xbf16, #tpu.memory_space<vmem>>, vector<392x128xbf16>,
    return
  }
  func.func @transform_0(%arg0: i32) -> (i32, i32) {
    %c0_i32 = arith.constant 0 : i32
    %c0_i32_0 = arith.constant 0 : i32
    return %arg0, %c0_i32 : i32, i32
  }
  func.func @transform_1(%arg0: i32) -> (i32, i32) {
    %c0_i32 = arith.constant 0 : i32
    %c0_i32_0 = arith.constant 0 : i32
    return %arg0, %c0_i32 : i32, i32
  }
  func.func @transform_2(%arg0: i32) -> (i32, i32) {
    %c0_i32 = arith.constant 0 : i32
    %c0_i32_0 = arith.constant 0 : i32
    return %arg0, %c0_i32 : i32, i32
  }
  func.func @transform_3(%arg0: i32) -> (i32, i32) {
    %c0_i32 = arith.constant 0 : i32
    %c0_i32_0 = arith.constant 0 : i32
    return %arg0, %c0_i32 : i32, i32
  }
  func.func @transform_4(%arg0: i32) -> (i32, i32) {
    %c0_i32 = arith.constant 0 : i32
    %c0_i32_0 = arith.constant 0 : i32
    %c0_i32_1 = arith.constant 0 : i32
    return %c0_i32, %c0_i32_0 : i32, i32
  }
  func.func @transform_5(%arg0: i32) -> (i32, i32) {
    %c0_i32 = arith.constant 0 : i32
    %c0_i32_0 = arith.constant 0 : i32
    %c0_i32_1 = arith.constant 0 : i32
    return %c0_i32, %c0_i32_0 : i32, i32
  }
  func.func @transform_6(%arg0: i32) -> (i32, i32) {
    %c0_i32 = arith.constant 0 : i32
    %c0_i32_0 = arith.constant 0 : i32
    return %arg0, %c0_i32 : i32, i32
  }
}

module attributes {stable_mosaic.version = 11 : i64} {
  func.func @_conv_relu_pool_kernel(%arg0: i32, %arg1: memref<50x256xbf16, #tpu.memory_space<vmem>>, %arg2: memref<50x256xbf16, #tpu.memory_space<vmem>>, %arg3: memref<50x256xbf16, #tpu.memory_space<vmem>>, %arg4: memref<50x256xbf16, #tpu.memory_space<vmem>>, %arg5: memref<256x128xbf16, #tpu.memory_space<vmem>>, %arg6: memref<1x128xf32, #tpu.memory_space<vmem>>, %arg7: memref<50x128xbf16, #tpu.memory_space<vmem>>) attributes {dimension_semantics = [#tpu.dimension_semantics<parallel>], iteration_bounds = array<i64: 1>, scalar_prefetch = 0 : i64, scratch_operands = 0 : i64, tpu.core_type = #tpu.core_type<tc>, window_params = [{transform_indices = @transform_0, window_bounds = array<i64: 50, 256>}, {transform_indices = @transform_1, window_bounds = array<i64: 50, 256>}, {transform_indices = @transform_2, window_bounds = array<i64: 50, 256>}, {transform_indices = @transform_3, window_bounds = array<i64: 50, 256>}, {pipeline_mode = #tpu.pipeline_mode<synchronous>, transform_indices = @transform_4, window_bounds = array<i64: 256, 128>}, {pipeline_mode = #tpu.pipeline_mode<synchronous>, transform_indices = @transform_5, window_bounds = array<i64: 1, 128>}, {transform_indices = @transform_6, window_bounds = array<i64: 50, 128>}]} {
    %c0 = arith.constant 0 : index
    %c0_0 = arith.constant 0 : index
    %0 = vector.load %arg5[%c0, %c0_0] : memref<256x128xbf16, #tpu.memory_space<vmem>>, vector<256x128xbf16>
    %c0_1 = arith.constant 0 : index
    %c0_2 = arith.constant 0 : index
    %1 = vector.load %arg1[%c0_1, %c0_2] : memref<50x256xbf16, #tpu.memory_space<vmem>>, vector<50x256xbf16>
    %cst = arith.constant dense<0.000000e+00> : vector<50x128xf32>
    %2 = tpu.matmul %1, %0, %cst {dimension_numbers = #tpu.dot_dimension_numbers<[1], [0], [0], [1], [0, 0, 1, 1], [], []>} : vector<50x256xbf16>, vector<256x128xbf16>, vector<50x128xf32> -> vector<50x128xf32>
    %c0_3 = arith.constant 0 : index
    %c0_4 = arith.constant 0 : index
    %3 = vector.load %arg2[%c0_3, %c0_4] : memref<50x256xbf16, #tpu.memory_space<vmem>>, vector<50x256xbf16>
    %cst_5 = arith.constant dense<0.000000e+00> : vector<50x128xf32>
    %4 = tpu.matmul %3, %0, %cst_5 {dimension_numbers = #tpu.dot_dimension_numbers<[1], [0], [0], [1], [0, 0, 1, 1], [], []>} : vector<50x256xbf16>, vector<256x128xbf16>, vector<50x128xf32> -> vector<50x128xf32>
    %c0_6 = arith.constant 0 : index
    %c0_7 = arith.constant 0 : index
    %5 = vector.load %arg3[%c0_6, %c0_7] : memref<50x256xbf16, #tpu.memory_space<vmem>>, vector<50x256xbf16>
    %cst_8 = arith.constant dense<0.000000e+00> : vector<50x128xf32>
    %6 = tpu.matmul %5, %0, %cst_8 {dimension_numbers = #tpu.dot_dimension_numbers<[1], [0], [0], [1], [0, 0, 1, 1], [], []>} : vector<50x256xbf16>, vector<256x128xbf16>, vector<50x128xf32> -> vector<50x128xf32>
    %c0_9 = arith.constant 0 : index
    %c0_10 = arith.constant 0 : index
    %7 = vector.load %arg4[%c0_9, %c0_10] : memref<50x256xbf16, #tpu.memory_space<vmem>>, vector<50x256xbf16>
    %cst_11 = arith.constant dense<0.000000e+00> : vector<50x128xf32>
    %8 = tpu.matmul %7, %0, %cst_11 {dimension_numbers = #tpu.dot_dimension_numbers<[1], [0], [0], [1], [0, 0, 1, 1], [], []>} : vector<50x256xbf16>, vector<256x128xbf16>, vector<50x128xf32> -> vector<50x128xf32>
    %9 = arith.maximumf %2, %4 : vector<50x128xf32>
    %10 = arith.maximumf %6, %8 : vector<50x128xf32>
    %11 = arith.maximumf %9, %10 : vector<50x128xf32>
    %c0_12 = arith.constant 0 : index
    %c0_13 = arith.constant 0 : index
    %12 = vector.load %arg6[%c0_12, %c0_13] : memref<1x128xf32, #tpu.memory_space<vmem>>, vector<1x128xf32>
    %13 = vector.broadcast %12 : vector<1x128xf32> to vector<50x128xf32>
    %14 = arith.addf %11, %13 : vector<50x128xf32>
    %cst_14 = arith.constant 0.000000e+00 : f32
    %15 = vector.broadcast %cst_14 : f32 to vector<50x128xf32>
    %16 = arith.maximumf %14, %15 : vector<50x128xf32>
    %17 = arith.truncf %16 : vector<50x128xf32> to vector<50x128xbf16>
    %c0_15 = arith.constant 0 : index
    %c0_16 = arith.constant 0 : index
    %18 = vector.load %arg7[%c0_15, %c0_16] : memref<50x128xbf16, #tpu.memory_space<vmem>>, vector<50x128xbf16>
    tpu.vector_store %arg7[%c0_15, %c0_16], %17 {strides = array<i32>} : memref<50x128xbf16, #tpu.memory_space<vmem>>, vector<50x128xbf16>,
    return
  }
  func.func @transform_0(%arg0: i32) -> (i32, i32) {
    %c0_i32 = arith.constant 0 : i32
    %c0_i32_0 = arith.constant 0 : i32
    return %arg0, %c0_i32 : i32, i32
  }
  func.func @transform_1(%arg0: i32) -> (i32, i32) {
    %c0_i32 = arith.constant 0 : i32
    %c0_i32_0 = arith.constant 0 : i32
    return %arg0, %c0_i32 : i32, i32
  }
  func.func @transform_2(%arg0: i32) -> (i32, i32) {
    %c0_i32 = arith.constant 0 : i32
    %c0_i32_0 = arith.constant 0 : i32
    return %arg0, %c0_i32 : i32, i32
  }
  func.func @transform_3(%arg0: i32) -> (i32, i32) {
    %c0_i32 = arith.constant 0 : i32
    %c0_i32_0 = arith.constant 0 : i32
    return %arg0, %c0_i32 : i32, i32
  }
  func.func @transform_4(%arg0: i32) -> (i32, i32) {
    %c0_i32 = arith.constant 0 : i32
    %c0_i32_0 = arith.constant 0 : i32
    %c0_i32_1 = arith.constant 0 : i32
    return %c0_i32, %c0_i32_0 : i32, i32
  }
  func.func @transform_5(%arg0: i32) -> (i32, i32) {
    %c0_i32 = arith.constant 0 : i32
    %c0_i32_0 = arith.constant 0 : i32
    %c0_i32_1 = arith.constant 0 : i32
    return %c0_i32, %c0_i32_0 : i32, i32
  }
  func.func @transform_6(%arg0: i32) -> (i32, i32) {
    %c0_i32 = arith.constant 0 : i32
    %c0_i32_0 = arith.constant 0 : i32
    return %arg0, %c0_i32 : i32, i32
  }
}

module attributes {stable_mosaic.version = 11 : i64} {
  func.func @_fc_stack_kernel(%arg0: i32, %arg1: memref<2x3200xbf16, #tpu.memory_space<vmem>>, %arg2: memref<3200x128xbf16, #tpu.memory_space<vmem>>, %arg3: memref<1x128xf32, #tpu.memory_space<vmem>>, %arg4: memref<128x128xbf16, #tpu.memory_space<vmem>>, %arg5: memref<1x128xf32, #tpu.memory_space<vmem>>, %arg6: memref<128x128xbf16, #tpu.memory_space<vmem>>, %arg7: memref<1x128xf32, #tpu.memory_space<vmem>>, %arg8: memref<2x128xf32, #tpu.memory_space<vmem>>) attributes {dimension_semantics = [#tpu.dimension_semantics<arbitrary>], iteration_bounds = array<i64: 1>, scalar_prefetch = 0 : i64, scratch_operands = 0 : i64, tpu.core_type = #tpu.core_type<tc>, window_params = [{pipeline_mode = #tpu.pipeline_mode<synchronous>, transform_indices = @transform_0, window_bounds = array<i64: 2, 3200>}, {pipeline_mode = #tpu.pipeline_mode<synchronous>, transform_indices = @transform_1, window_bounds = array<i64: 3200, 128>}, {pipeline_mode = #tpu.pipeline_mode<synchronous>, transform_indices = @transform_2, window_bounds = array<i64: 1, 128>}, {pipeline_mode = #tpu.pipeline_mode<synchronous>, transform_indices = @transform_3, window_bounds = array<i64: 128, 128>}, {pipeline_mode = #tpu.pipeline_mode<synchronous>, transform_indices = @transform_4, window_bounds = array<i64: 1, 128>}, {pipeline_mode = #tpu.pipeline_mode<synchronous>, transform_indices = @transform_5, window_bounds = array<i64: 128, 128>}, {pipeline_mode = #tpu.pipeline_mode<synchronous>, transform_indices = @transform_6, window_bounds = array<i64: 1, 128>}, {pipeline_mode = #tpu.pipeline_mode<synchronous>, transform_indices = @transform_7, window_bounds = array<i64: 2, 128>}]} {
    %c0 = arith.constant 0 : index
    %c0_0 = arith.constant 0 : index
    %0 = vector.load %arg1[%c0, %c0_0] : memref<2x3200xbf16, #tpu.memory_space<vmem>>, vector<2x3200xbf16>
    %c0_1 = arith.constant 0 : index
    %c0_2 = arith.constant 0 : index
    %1 = vector.load %arg2[%c0_1, %c0_2] : memref<3200x128xbf16, #tpu.memory_space<vmem>>, vector<3200x128xbf16>
    %cst = arith.constant dense<0.000000e+00> : vector<2x128xf32>
    %2 = tpu.matmul %0, %1, %cst {dimension_numbers = #tpu.dot_dimension_numbers<[1], [0], [0], [1], [0, 0, 1, 1], [], []>} : vector<2x3200xbf16>, vector<3200x128xbf16>, vector<2x128xf32> -> vector<2x128xf32>
    %c0_3 = arith.constant 0 : index
    %c0_4 = arith.constant 0 : index
    %3 = vector.load %arg3[%c0_3, %c0_4] : memref<1x128xf32, #tpu.memory_space<vmem>>, vector<1x128xf32>
    %4 = vector.broadcast %3 : vector<1x128xf32> to vector<2x128xf32>
    %5 = arith.addf %2, %4 : vector<2x128xf32>
    %cst_5 = arith.constant 0.000000e+00 : f32
    %6 = vector.broadcast %cst_5 : f32 to vector<2x128xf32>
    %7 = arith.maximumf %5, %6 : vector<2x128xf32>
    %8 = arith.truncf %7 : vector<2x128xf32> to vector<2x128xbf16>
    %c0_6 = arith.constant 0 : index
    %c0_7 = arith.constant 0 : index
    %9 = vector.load %arg4[%c0_6, %c0_7] : memref<128x128xbf16, #tpu.memory_space<vmem>>, vector<128x128xbf16>
    %cst_8 = arith.constant dense<0.000000e+00> : vector<2x128xf32>
    %10 = tpu.matmul %8, %9, %cst_8 {dimension_numbers = #tpu.dot_dimension_numbers<[1], [0], [0], [1], [0, 0, 1, 1], [], []>} : vector<2x128xbf16>, vector<128x128xbf16>, vector<2x128xf32> -> vector<2x128xf32>
    %c0_9 = arith.constant 0 : index
    %c0_10 = arith.constant 0 : index
    %11 = vector.load %arg5[%c0_9, %c0_10] : memref<1x128xf32, #tpu.memory_space<vmem>>, vector<1x128xf32>
    %12 = vector.broadcast %11 : vector<1x128xf32> to vector<2x128xf32>
    %13 = arith.addf %10, %12 : vector<2x128xf32>
    %cst_11 = arith.constant 0.000000e+00 : f32
    %14 = vector.broadcast %cst_11 : f32 to vector<2x128xf32>
    %15 = arith.maximumf %13, %14 : vector<2x128xf32>
    %16 = arith.truncf %15 : vector<2x128xf32> to vector<2x128xbf16>
    %c0_12 = arith.constant 0 : index
    %c0_13 = arith.constant 0 : index
    %17 = vector.load %arg6[%c0_12, %c0_13] : memref<128x128xbf16, #tpu.memory_space<vmem>>, vector<128x128xbf16>
    %cst_14 = arith.constant dense<0.000000e+00> : vector<2x128xf32>
    %18 = tpu.matmul %16, %17, %cst_14 {dimension_numbers = #tpu.dot_dimension_numbers<[1], [0], [0], [1], [0, 0, 1, 1], [], []>} : vector<2x128xbf16>, vector<128x128xbf16>, vector<2x128xf32> -> vector<2x128xf32>
    %c0_15 = arith.constant 0 : index
    %c0_16 = arith.constant 0 : index
    %19 = vector.load %arg7[%c0_15, %c0_16] : memref<1x128xf32, #tpu.memory_space<vmem>>, vector<1x128xf32>
    %20 = vector.broadcast %19 : vector<1x128xf32> to vector<2x128xf32>
    %21 = arith.addf %18, %20 : vector<2x128xf32>
    %c0_17 = arith.constant 0 : index
    %c0_18 = arith.constant 0 : index
    %22 = vector.load %arg8[%c0_17, %c0_18] : memref<2x128xf32, #tpu.memory_space<vmem>>, vector<2x128xf32>
    tpu.vector_store %arg8[%c0_17, %c0_18], %21 {strides = array<i32>} : memref<2x128xf32, #tpu.memory_space<vmem>>, vector<2x128xf32>,
    return
  }
  func.func @transform_0(%arg0: i32) -> (i32, i32) {
    %c0_i32 = arith.constant 0 : i32
    %c0_i32_0 = arith.constant 0 : i32
    %c0_i32_1 = arith.constant 0 : i32
    return %c0_i32, %c0_i32_0 : i32, i32
  }
  func.func @transform_1(%arg0: i32) -> (i32, i32) {
    %c0_i32 = arith.constant 0 : i32
    %c0_i32_0 = arith.constant 0 : i32
    %c0_i32_1 = arith.constant 0 : i32
    return %c0_i32, %c0_i32_0 : i32, i32
  }
  func.func @transform_2(%arg0: i32) -> (i32, i32) {
    %c0_i32 = arith.constant 0 : i32
    %c0_i32_0 = arith.constant 0 : i32
    %c0_i32_1 = arith.constant 0 : i32
    return %c0_i32, %c0_i32_0 : i32, i32
  }
  func.func @transform_3(%arg0: i32) -> (i32, i32) {
    %c0_i32 = arith.constant 0 : i32
    %c0_i32_0 = arith.constant 0 : i32
    %c0_i32_1 = arith.constant 0 : i32
    return %c0_i32, %c0_i32_0 : i32, i32
  }
  func.func @transform_4(%arg0: i32) -> (i32, i32) {
    %c0_i32 = arith.constant 0 : i32
    %c0_i32_0 = arith.constant 0 : i32
    %c0_i32_1 = arith.constant 0 : i32
    return %c0_i32, %c0_i32_0 : i32, i32
  }
  func.func @transform_5(%arg0: i32) -> (i32, i32) {
    %c0_i32 = arith.constant 0 : i32
    %c0_i32_0 = arith.constant 0 : i32
    %c0_i32_1 = arith.constant 0 : i32
    return %c0_i32, %c0_i32_0 : i32, i32
  }
  func.func @transform_6(%arg0: i32) -> (i32, i32) {
    %c0_i32 = arith.constant 0 : i32
    %c0_i32_0 = arith.constant 0 : i32
    %c0_i32_1 = arith.constant 0 : i32
    return %c0_i32, %c0_i32_0 : i32, i32
  }
  func.func @transform_7(%arg0: i32) -> (i32, i32) {
    %c0_i32 = arith.constant 0 : i32
    %c0_i32_0 = arith.constant 0 : i32
    %c0_i32_1 = arith.constant 0 : i32
    return %c0_i32, %c0_i32_0 : i32, i32
  }
}

</mosaic_0001>

<llo_original>
// kernel: net_forward.3
$region0: #{net_forward.3}
  #allocation0 [shape = 'u32[]', space=smem, size = 0x4, offset = 0x4, fixed_abs, tag = 'smem constant byte address 0x4 - core index']
  #allocation1 [shape = 'u32[144,128]{1,0:T(1,128)}', space=vmem, size = 0x12000, scoped, tag = 'internal scratch']
  %s0 = inlined_call_operand.vmem [shape: bf16[392,128], index: 0, kind: input, shape index: {}]
  %s1 = inlined_call_operand.vmem [shape: bf16[392,128], index: 1, kind: input, shape index: {}]
  %s2 = inlined_call_operand.vmem [shape: bf16[392,128], index: 2, kind: input, shape index: {}]
  %s3 = inlined_call_operand.vmem [shape: bf16[392,128], index: 3, kind: input, shape index: {}]
  %s4 = inlined_call_operand.vmem [shape: bf16[128,128], index: 4, kind: input, shape index: {}]
  %s5 = inlined_call_operand.vmem [shape: f32[1,128], index: 5, kind: input, shape index: {}]
  %s6 = inlined_call_operand.vmem [shape: bf16[392,128], index: 6, kind: output, shape index: {}]
  %s7 = sld [smem:[#allocation0]]
  $region34: #{net_forward.3} parent=0
    _
  %s9 = ssub.s32 1, %s7
  %s10 = scalar_select 0, %s9, %s7
  // Predicated region
  $region2: #{net_forward.3} parent=0 // pred_check
    _
  $region3: #{net_forward.3} parent=0 // pred_check_branch
    %12 = sbr.rel (0) target = $region5
  $region4: #{net_forward.3} parent=0 // pred_region
    _
  $region5: #{net_forward.3} parent=0 // pred_fallthru
    _
  // Predicated region
  $region6: #{net_forward.3} parent=0 // pred_check
    _
  $region7: #{net_forward.3} parent=0 // pred_check_branch
    %14 = sbr.rel (0) target = $region9
  $region8: #{net_forward.3} parent=0 // pred_region
    _
  $region9: #{net_forward.3} parent=0 // pred_fallthru
    _
  // Predicated region
  $region10: #{net_forward.3} parent=0 // pred_check
    _
  $region11: #{net_forward.3} parent=0 // pred_check_branch
    %16 = sbr.rel (0) target = $region13
  $region12: #{net_forward.3} parent=0 // pred_region
    _
  $region13: #{net_forward.3} parent=0 // pred_fallthru
    _
  // Predicated region
  $region14: #{net_forward.3} parent=0 // pred_check
    _
  $region15: #{net_forward.3} parent=0 // pred_check_branch
    %18 = sbr.rel (0) target = $region17
  $region16: #{net_forward.3} parent=0 // pred_region
    _
  $region17: #{net_forward.3} parent=0 // pred_fallthru
    _
  // Predicated region
  $region18: #{net_forward.3} parent=0 // pred_check
    _
  $region19: #{net_forward.3} parent=0 // pred_check_branch
    %20 = sbr.rel (0) target = $region21
  $region20: #{net_forward.3} parent=0 // pred_region
    _
  $region21: #{net_forward.3} parent=0 // pred_fallthru
    _
  // Predicated region
  $region22: #{net_forward.3} parent=0 // pred_check
    _
  $region23: #{net_forward.3} parent=0 // pred_check_branch
    %22 = sbr.rel (0) target = $region25
  $region24: #{net_forward.3} parent=0 // pred_region
    _
  $region25: #{net_forward.3} parent=0 // pred_fallthru
    _
  %v24 = vld [vmem:[%s4] sm:$0xf]
  %v25 = vld [vmem:[%s4 + $0x4] sm:$0xf]
  %v26 = vld [vmem:[%s4 + $0x8] sm:$0xf]
  %v27 = vld [vmem:[%s4 + $0xc] sm:$0xf]
  %v28 = vld [vmem:[%s4 + $0x10] sm:$0xf]
  %v29 = vld [vmem:[%s4 + $0x14] sm:$0xf]
  %v30 = vld [vmem:[%s4 + $0x18] sm:$0xf]
  %v31 = vld [vmem:[%s4 + $0x1c] sm:$0xf]
  %v32 = vld [vmem:[%s4 + $0x20] sm:$0xf]
  %v33 = vld [vmem:[%s4 + $0x24] sm:$0xf]
  %v34 = vld [vmem:[%s4 + $0x28] sm:$0xf]
  %v35 = vld [vmem:[%s4 + $0x2c] sm:$0xf]
  %v36 = vld [vmem:[%s4 + $0x30] sm:$0xf]
  %v37 = vld [vmem:[%s4 + $0x34] sm:$0xf]
  %v38 = vld [vmem:[%s4 + $0x38] sm:$0xf]
  %v39 = vld [vmem:[%s4 + $0x3c] sm:$0xf]
  %v40 = vld [vmem:[%s0] sm:$0xf]
  %v41 = vld [vmem:[%s0 + $0x4] sm:$0xf]
  %v42 = vld [vmem:[%s0 + $0x8] sm:$0xf]
  %v43 = vld [vmem:[%s0 + $0xc] sm:$0xf]
  %v44 = vld [vmem:[%s0 + $0x10] sm:$0xf]
  %v45 = vld [vmem:[%s0 + $0x14] sm:$0xf]
  %v46 = vld [vmem:[%s0 + $0x18] sm:$0xf]
  %v47 = vld [vmem:[%s0 + $0x1c] sm:$0xf]
  %v48 = vld [vmem:[%s0 + $0x20] sm:$0xf]
  %v49 = vld [vmem:[%s0 + $0x24] sm:$0xf]
  %v50 = vld [vmem:[%s0 + $0x28] sm:$0xf]
  %v51 = vld [vmem:[%s0 + $0x2c] sm:$0xf]
  %v52 = vld [vmem:[%s0 + $0x30] sm:$0xf]
  %v53 = vld [vmem:[%s0 + $0x34] sm:$0xf]
  %v54 = vld [vmem:[%s0 + $0x38] sm:$0xf]
  %v55 = vld [vmem:[%s0 + $0x3c] sm:$0xf]
  %v56 = vld [vmem:[%s0 + $0x40] sm:$0xf]
  %v57 = vld [vmem:[%s0 + $0x44] sm:$0xf]
  %v58 = vld [vmem:[%s0 + $0x48] sm:$0xf]
  %v59 = vld [vmem:[%s0 + $0x4c] sm:$0xf]
  %v60 = vld [vmem:[%s0 + $0x50] sm:$0xf]
  %v61 = vld [vmem:[%s0 + $0x54] sm:$0xf]
  %v62 = vld [vmem:[%s0 + $0x58] sm:$0xf]
  %v63 = vld [vmem:[%s0 + $0x5c] sm:$0xf]
  %v64 = vld [vmem:[%s0 + $0x60] sm:$0xf]
  %v65 = vld [vmem:[%s0 + $0x64] sm:$0xf]
  %v66 = vld [vmem:[%s0 + $0x68] sm:$0xf]
  %v67 = vld [vmem:[%s0 + $0x6c] sm:$0xf]
  %v68 = vld [vmem:[%s0 + $0x70] sm:$0xf]
  %v69 = vld [vmem:[%s0 + $0x74] sm:$0xf]
  %v70 = vld [vmem:[%s0 + $0x78] sm:$0xf]
  %v71 = vld [vmem:[%s0 + $0x7c] sm:$0xf]
  %v72 = vld [vmem:[%s0 + $0x80] sm:$0xf]
  %v73 = vld [vmem:[%s0 + $0x84] sm:$0xf]
  %v74 = vld [vmem:[%s0 + $0x88] sm:$0xf]
  %v75 = vld [vmem:[%s0 + $0x8c] sm:$0xf]
  %v76 = vld [vmem:[%s0 + $0x90] sm:$0xf]
  %v77 = vld [vmem:[%s0 + $0x94] sm:$0xf]
  %v78 = vld [vmem:[%s0 + $0x98] sm:$0xf]
  %v79 = vld [vmem:[%s0 + $0x9c] sm:$0xf]
  %v80 = vld [vmem:[%s0 + $0xa0] sm:$0xf]
  %v81 = vld [vmem:[%s0 + $0xa4] sm:$0xf]
  %v82 = vld [vmem:[%s0 + $0xa8] sm:$0xf]
  %v83 = vld [vmem:[%s0 + $0xac] sm:$0xf]
  %v84 = vld [vmem:[%s0 + $0xb0] sm:$0xf]
  %v85 = vld [vmem:[%s0 + $0xb4] sm:$0xf]
  %v86 = vld [vmem:[%s0 + $0xb8] sm:$0xf]
  %v87 = vld [vmem:[%s0 + $0xbc] sm:$0xf]
  %v88 = vld [vmem:[%s0 + $0xc0] sm:$0xf]
  %v138 = vunpack.c.l.b16 %v40
  %v139 = vunpack.c.l.b16 %v41
  %v140 = vunpack.c.l.b16 %v42
  %v141 = vunpack.c.l.b16 %v43
  %v142 = vunpack.c.l.b16 %v44
  %v143 = vunpack.c.l.b16 %v45
  %v144 = vunpack.c.l.b16 %v46
  %v145 = vunpack.c.l.b16 %v47
  %v146 = vunpack.c.l.b16 %v48
  %v147 = vunpack.c.l.b16 %v49
  %v148 = vunpack.c.l.b16 %v50
  %v149 = vunpack.c.l.b16 %v51
  %v150 = vunpack.c.l.b16 %v52
  %v151 = vunpack.c.l.b16 %v53
  %v152 = vunpack.c.l.b16 %v54
  %v153 = vunpack.c.l.b16 %v55
  %v154 = vunpack.c.l.b16 %v56
  %v155 = vunpack.c.l.b16 %v57
  %v156 = vunpack.c.l.b16 %v58
  %v157 = vunpack.c.l.b16 %v59
  %v158 = vunpack.c.l.b16 %v60
  %v159 = vunpack.c.l.b16 %v61
  %v160 = vunpack.c.l.b16 %v62
  %v161 = vunpack.c.l.b16 %v63
  %v162 = vunpack.c.l.b16 %v64
  %v163 = vunpack.c.l.b16 %v65
  %v164 = vunpack.c.l.b16 %v66
  %v165 = vunpack.c.l.b16 %v67
  %v166 = vunpack.c.l.b16 %v68
  %v167 = vunpack.c.l.b16 %v69
  %v168 = vunpack.c.l.b16 %v70
  %v169 = vunpack.c.l.b16 %v71
  %v170 = vunpack.c.l.b16 %v72
  %v171 = vunpack.c.l.b16 %v73
  %v172 = vunpack.c.l.b16 %v74
  %v173 = vunpack.c.l.b16 %v75
  %v174 = vunpack.c.l.b16 %v76
  %v175 = vunpack.c.l.b16 %v77
  %v176 = vunpack.c.l.b16 %v78
  %v177 = vunpack.c.l.b16 %v79
  %v178 = vunpack.c.l.b16 %v80
  %v179 = vunpack.c.l.b16 %v81
  %v180 = vunpack.c.l.b16 %v82
  %v181 = vunpack.c.l.b16 %v83
  %v182 = vunpack.c.l.b16 %v84
  %v183 = vunpack.c.l.b16 %v85
  %v184 = vunpack.c.l.b16 %v86
  %v185 = vunpack.c.l.b16 %v87
  %v186 = vunpack.c.l.b16 %v88
  %v187 = vpack.c.b16 %v139, %v138
  %v188 = vpack.c.b16 %v141, %v140
  %v189 = vpack.c.b16 %v143, %v142
  %v190 = vpack.c.b16 %v145, %v144
  %v191 = vpack.c.b16 %v147, %v146
  %v192 = vpack.c.b16 %v149, %v148
  %v193 = vpack.c.b16 %v151, %v150
  %v194 = vpack.c.b16 %v153, %v152
  %v195 = vpack.c.b16 %v155, %v154
  %v196 = vpack.c.b16 %v157, %v156
  %v197 = vpack.c.b16 %v159, %v158
  %v198 = vpack.c.b16 %v161, %v160
  %v199 = vpack.c.b16 %v163, %v162
  %v200 = vpack.c.b16 %v165, %v164
  %v201 = vpack.c.b16 %v167, %v166
  %v202 = vpack.c.b16 %v169, %v168
  %v203 = vpack.c.b16 %v171, %v170
  %v204 = vpack.c.b16 %v173, %v172
  %v205 = vpack.c.b16 %v175, %v174
  %v206 = vpack.c.b16 %v177, %v176
  %v207 = vpack.c.b16 %v179, %v178
  %v208 = vpack.c.b16 %v181, %v180
  %v209 = vpack.c.b16 %v183, %v182
  %v210 = vpack.c.b16 %v185, %v184
  %v211 = vpack.c.b16 %v186, %v186
  %v253 = vunpack.c.l.b16 %v24
  %v254 = vunpack.c.l.b16 %v25
  %v255 = vunpack.c.l.b16 %v26
  %v256 = vunpack.c.l.b16 %v27
  %v257 = vunpack.c.l.b16 %v28
  %v258 = vunpack.c.l.b16 %v29
  %v259 = vunpack.c.l.b16 %v30
  %v260 = vunpack.c.l.b16 %v31
  %v261 = vunpack.c.l.b16 %v32
  %v262 = vunpack.c.l.b16 %v33
  %v263 = vunpack.c.l.b16 %v34
  %v264 = vunpack.c.l.b16 %v35
  %v265 = vunpack.c.l.b16 %v36
  %v266 = vunpack.c.l.b16 %v37
  %v267 = vunpack.c.l.b16 %v38
  %v268 = vunpack.c.l.b16 %v39
  %v269 = vpack.c.b16 %v254, %v253
  %v270 = vpack.c.b16 %v256, %v255
  %v271 = vpack.c.b16 %v258, %v257
  %v272 = vpack.c.b16 %v260, %v259
  %v273 = vpack.c.b16 %v262, %v261
  %v274 = vpack.c.b16 %v264, %v263
  %v275 = vpack.c.b16 %v266, %v265
  %v276 = vpack.c.b16 %v268, %v267
  %285 = vmatprep.subr.bf16.mxu0 0
  %286 = vmatpush1.bf16.msra.mxu0 %v276
  %287 = vmatprep.subr.bf16.mxu0 0
  %288 = vmatpush1.bf16.msra.mxu0 %v275
  %289 = vmatprep.subr.bf16.mxu0 0
  %290 = vmatpush1.bf16.msra.mxu0 %v274
  %291 = vmatprep.subr.bf16.mxu0 0
  %292 = vmatpush1.bf16.msra.mxu0 %v273
  %293 = vmatprep.subr.bf16.mxu0 0
  %294 = vmatpush1.bf16.msra.mxu0 %v272
  %295 = vmatprep.subr.bf16.mxu0 0
  %296 = vmatpush1.bf16.msra.mxu0 %v271
  %297 = vmatprep.subr.bf16.mxu0 0
  %298 = vmatpush1.bf16.msra.mxu0 %v270
  %299 = vmatprep.subr.bf16.mxu0 0
  %300 = vmatpush1.bf16.msra.mxu0 %v269
  %301 = vmatprep.subr.bf16.mxu0 0
  %302 = vmatpush2.bf16.msra.mxu0 0
  %303 = vmatprep.subr.bf16.mxu0 0
  %304 = vmatpush2.bf16.msra.mxu0 0
  %305 = vmatprep.subr.bf16.mxu0 0
  %306 = vmatpush2.bf16.msra.mxu0 0
  %307 = vmatprep.subr.bf16.mxu0 0
  %308 = vmatpush2.bf16.msra.mxu0 0
  %309 = vmatprep.subr.bf16.mxu0 0
  %310 = vmatpush2.bf16.msra.mxu0 0
  %311 = vmatprep.subr.bf16.mxu0 0
  %312 = vmatpush2.bf16.msra.mxu0 0
  %313 = vmatprep.subr.bf16.mxu0 0
  %314 = vmatpush2.bf16.msra.mxu0 0
  %315 = vmatprep.subr.bf16.mxu0 0
  %316 = vmatpush2.bf16.msra.mxu0 0
  %317 = vmatprep.mubr.bf16.mxu0 0
  %318 = vmatmul.mubr.bf16.gmra.mxu0 %v187
  %v319 = vpop.f32.mrf.mxu0
  %v320 = vadd.f32 0.0, %v319
  %v321 = vpop.f32.mrf.mxu0
  %v322 = vpop.f32.mrf.mxu0
  %v323 = vadd.f32 0.0, %v322
  %v324 = vpop.f32.mrf.mxu0
  %325 = vmatprep.mubr.bf16.mxu0 0
  %326 = vmatmul.mubr.bf16.gmra.mxu0 %v188
  %v327 = vpop.f32.mrf.mxu0
  %v328 = vadd.f32 0.0, %v327
  %v329 = vpop.f32.mrf.mxu0
  %v330 = vpop.f32.mrf.mxu0
  %v331 = vadd.f32 0.0, %v330
  %v332 = vpop.f32.mrf.mxu0
  %333 = vmatprep.mubr.bf16.mxu0 0
  %334 = vmatmul.mubr.bf16.gmra.mxu0 %v189
  %v335 = vpop.f32.mrf.mxu0
  %v336 = vadd.f32 0.0, %v335
  %v337 = vpop.f32.mrf.mxu0
  %v338 = vpop.f32.mrf.mxu0
  %v339 = vadd.f32 0.0, %v338
  %v340 = vpop.f32.mrf.mxu0
  %341 = vmatprep.mubr.bf16.mxu0 0
  %342 = vmatmul.mubr.bf16.gmra.mxu0 %v190
  %v343 = vpop.f32.mrf.mxu0
  %v344 = vadd.f32 0.0, %v343
  %v345 = vpop.f32.mrf.mxu0
  %v346 = vpop.f32.mrf.mxu0
  %v347 = vadd.f32 0.0, %v346
  %v348 = vpop.f32.mrf.mxu0
  %349 = vmatprep.mubr.bf16.mxu0 0
  %350 = vmatmul.mubr.bf16.gmra.mxu0 %v191
  %v351 = vpop.f32.mrf.mxu0
  %v352 = vadd.f32 0.0, %v351
  %v353 = vpop.f32.mrf.mxu0
  %v354 = vpop.f32.mrf.mxu0
  %v355 = vadd.f32 0.0, %v354
  %v356 = vpop.f32.mrf.mxu0
  %357 = vmatprep.mubr.bf16.mxu0 0
  %358 = vmatmul.mubr.bf16.gmra.mxu0 %v192
  %v359 = vpop.f32.mrf.mxu0
  %v360 = vadd.f32 0.0, %v359
  %v361 = vpop.f32.mrf.mxu0
  %v362 = vpop.f32.mrf.mxu0
  %v363 = vadd.f32 0.0, %v362
  %v364 = vpop.f32.mrf.mxu0
  %365 = vmatprep.mubr.bf16.mxu0 0
  %366 = vmatmul.mubr.bf16.gmra.mxu0 %v193
  %v367 = vpop.f32.mrf.mxu0
  %v368 = vadd.f32 0.0, %v367
  %v369 = vpop.f32.mrf.mxu0
  %v370 = vpop.f32.mrf.mxu0
  %v371 = vadd.f32 0.0, %v370
  %v372 = vpop.f32.mrf.mxu0
  %373 = vmatprep.mubr.bf16.mxu0 0
  %374 = vmatmul.mubr.bf16.gmra.mxu0 %v194
  %v375 = vpop.f32.mrf.mxu0
  %v376 = vadd.f32 0.0, %v375
  %v377 = vpop.f32.mrf.mxu0
  %v378 = vpop.f32.mrf.mxu0
  %v379 = vadd.f32 0.0, %v378
  %v380 = vpop.f32.mrf.mxu0
  %381 = vmatprep.mubr.bf16.mxu0 0
  %382 = vmatmul.mubr.bf16.gmra.mxu0 %v195
  %v383 = vpop.f32.mrf.mxu0
  %v384 = vadd.f32 0.0, %v383
  %v385 = vpop.f32.mrf.mxu0
  %v386 = vpop.f32.mrf.mxu0
  %v387 = vadd.f32 0.0, %v386
  %v388 = vpop.f32.mrf.mxu0
  %389 = vmatprep.mubr.bf16.mxu0 0
  %390 = vmatmul.mubr.bf16.gmra.mxu0 %v196
  %v391 = vpop.f32.mrf.mxu0
  %v392 = vadd.f32 0.0, %v391
  %v393 = vpop.f32.mrf.mxu0
  %v394 = vpop.f32.mrf.mxu0
  %v395 = vadd.f32 0.0, %v394
  %v396 = vpop.f32.mrf.mxu0
  %397 = vmatprep.mubr.bf16.mxu0 0
  %398 = vmatmul.mubr.bf16.gmra.mxu0 %v197
  %v399 = vpop.f32.mrf.mxu0
  %v400 = vadd.f32 0.0, %v399
  %v401 = vpop.f32.mrf.mxu0
  %v402 = vpop.f32.mrf.mxu0
  %v403 = vadd.f32 0.0, %v402
  %v404 = vpop.f32.mrf.mxu0
  %405 = vmatprep.mubr.bf16.mxu0 0
  %406 = vmatmul.mubr.bf16.gmra.mxu0 %v198
  %v407 = vpop.f32.mrf.mxu0
  %v408 = vadd.f32 0.0, %v407
  %v409 = vpop.f32.mrf.mxu0
  %v410 = vpop.f32.mrf.mxu0
  %v411 = vadd.f32 0.0, %v410
  %v412 = vpop.f32.mrf.mxu0
  %413 = vmatprep.mubr.bf16.mxu0 0
  %414 = vmatmul.mubr.bf16.gmra.mxu0 %v199
  %v415 = vpop.f32.mrf.mxu0
  %v416 = vadd.f32 0.0, %v415
  %v417 = vpop.f32.mrf.mxu0
  %v418 = vpop.f32.mrf.mxu0
  %v419 = vadd.f32 0.0, %v418
  %v420 = vpop.f32.mrf.mxu0
  %421 = vmatprep.mubr.bf16.mxu0 0
  %422 = vmatmul.mubr.bf16.gmra.mxu0 %v200
  %v423 = vpop.f32.mrf.mxu0
  %v424 = vadd.f32 0.0, %v423
  %v425 = vpop.f32.mrf.mxu0
  %v426 = vpop.f32.mrf.mxu0
  %v427 = vadd.f32 0.0, %v426
  %v428 = vpop.f32.mrf.mxu0
  %429 = vmatprep.mubr.bf16.mxu0 0
  %430 = vmatmul.mubr.bf16.gmra.mxu0 %v201
  %v431 = vpop.f32.mrf.mxu0
  %v432 = vadd.f32 0.0, %v431
  %v433 = vpop.f32.mrf.mxu0
  %v434 = vpop.f32.mrf.mxu0
  %v435 = vadd.f32 0.0, %v434
  %v436 = vpop.f32.mrf.mxu0
  %437 = vmatprep.mubr.bf16.mxu0 0
  %438 = vmatmul.mubr.bf16.gmra.mxu0 %v202
  %v439 = vpop.f32.mrf.mxu0
  %v440 = vadd.f32 0.0, %v439
  %v441 = vpop.f32.mrf.mxu0
  %v442 = vpop.f32.mrf.mxu0
  %v443 = vadd.f32 0.0, %v442
  %v444 = vpop.f32.mrf.mxu0
  %445 = vmatprep.mubr.bf16.mxu0 0
  %446 = vmatmul.mubr.bf16.gmra.mxu0 %v203
  %v447 = vpop.f32.mrf.mxu0
  %v448 = vadd.f32 0.0, %v447
  %v449 = vpop.f32.mrf.mxu0
  %v450 = vpop.f32.mrf.mxu0
  %v451 = vadd.f32 0.0, %v450
  %v452 = vpop.f32.mrf.mxu0
  %453 = vmatprep.mubr.bf16.mxu0 0
  %454 = vmatmul.mubr.bf16.gmra.mxu0 %v204
  %v455 = vpop.f32.mrf.mxu0
  %v456 = vadd.f32 0.0, %v455
  %v457 = vpop.f32.mrf.mxu0
  %v458 = vpop.f32.mrf.mxu0
  %v459 = vadd.f32 0.0, %v458
  %v460 = vpop.f32.mrf.mxu0
  %461 = vmatprep.mubr.bf16.mxu0 0
  %462 = vmatmul.mubr.bf16.gmra.mxu0 %v205
  %v463 = vpop.f32.mrf.mxu0
  %v464 = vadd.f32 0.0, %v463
  %v465 = vpop.f32.mrf.mxu0
  %v466 = vpop.f32.mrf.mxu0
  %v467 = vadd.f32 0.0, %v466
  %v468 = vpop.f32.mrf.mxu0
  %469 = vmatprep.mubr.bf16.mxu0 0
  %470 = vmatmul.mubr.bf16.gmra.mxu0 %v206
  %v471 = vpop.f32.mrf.mxu0
  %v472 = vadd.f32 0.0, %v471
  %v473 = vpop.f32.mrf.mxu0
  %v474 = vpop.f32.mrf.mxu0
  %v475 = vadd.f32 0.0, %v474
  %v476 = vpop.f32.mrf.mxu0
  %477 = vmatprep.mubr.bf16.mxu0 0
  %478 = vmatmul.mubr.bf16.gmra.mxu0 %v207
  %v479 = vpop.f32.mrf.mxu0
  %v480 = vadd.f32 0.0, %v479
  %v481 = vpop.f32.mrf.mxu0
  %v482 = vpop.f32.mrf.mxu0
  %v483 = vadd.f32 0.0, %v482
  %v484 = vpop.f32.mrf.mxu0
  %485 = vmatprep.mubr.bf16.mxu0 0
  %486 = vmatmul.mubr.bf16.gmra.mxu0 %v208
  %v487 = vpop.f32.mrf.mxu0
  %v488 = vadd.f32 0.0, %v487
  %v489 = vpop.f32.mrf.mxu0
  %v490 = vpop.f32.mrf.mxu0
  %v491 = vadd.f32 0.0, %v490
  %v492 = vpop.f32.mrf.mxu0
  %493 = vmatprep.mubr.bf16.mxu0 0
  %494 = vmatmul.mubr.bf16.gmra.mxu0 %v209
  %v495 = vpop.f32.mrf.mxu0
  %v496 = vadd.f32 0.0, %v495
  %v497 = vpop.f32.mrf.mxu0
  %v498 = vpop.f32.mrf.mxu0
  %v499 = vadd.f32 0.0, %v498
  %v500 = vpop.f32.mrf.mxu0
  %501 = vmatprep.mubr.bf16.mxu0 0
  %502 = vmatmul.mubr.bf16.gmra.mxu0 %v210
  %v503 = vpop.f32.mrf.mxu0
  %v504 = vadd.f32 0.0, %v503
  %v505 = vpop.f32.mrf.mxu0
  %v506 = vpop.f32.mrf.mxu0
  %v507 = vadd.f32 0.0, %v506
  %v508 = vpop.f32.mrf.mxu0
  %509 = vmatprep.mubr.bf16.mxu0 0
  %510 = vmatmul.mubr.bf16.gmra.mxu0 %v211
  %v511 = vpop.f32.mrf.mxu0
  %v512 = vadd.f32 0.0, %v511
  %v513 = vpop.f32.mrf.mxu0
  %v514 = vpop.f32.mrf.mxu0
  %v515 = vpop.f32.mrf.mxu0
  %516 = vdwg.mxu0
  %v517 = vld [vmem:[%s1] sm:$0xf]
  %v518 = vld [vmem:[%s1 + $0x4] sm:$0xf]
  %v519 = vld [vmem:[%s1 + $0x8] sm:$0xf]
  %v520 = vld [vmem:[%s1 + $0xc] sm:$0xf]
  %v521 = vld [vmem:[%s1 + $0x10] sm:$0xf]
  %v522 = vld [vmem:[%s1 + $0x14] sm:$0xf]
  %v523 = vld [vmem:[%s1 + $0x18] sm:$0xf]
  %v524 = vld [vmem:[%s1 + $0x1c] sm:$0xf]
  %v525 = vld [vmem:[%s1 + $0x20] sm:$0xf]
  %v526 = vld [vmem:[%s1 + $0x24] sm:$0xf]
  %v527 = vld [vmem:[%s1 + $0x28] sm:$0xf]
  %v528 = vld [vmem:[%s1 + $0x2c] sm:$0xf]
  %v529 = vld [vmem:[%s1 + $0x30] sm:$0xf]
  %v530 = vld [vmem:[%s1 + $0x34] sm:$0xf]
  %v531 = vld [vmem:[%s1 + $0x38] sm:$0xf]
  %v532 = vld [vmem:[%s1 + $0x3c] sm:$0xf]
  %v533 = vld [vmem:[%s1 + $0x40] sm:$0xf]
  %v534 = vld [vmem:[%s1 + $0x44] sm:$0xf]
  %v535 = vld [vmem:[%s1 + $0x48] sm:$0xf]
  %v536 = vld [vmem:[%s1 + $0x4c] sm:$0xf]
  %v537 = vld [vmem:[%s1 + $0x50] sm:$0xf]
  %v538 = vld [vmem:[%s1 + $0x54] sm:$0xf]
  %v539 = vld [vmem:[%s1 + $0x58] sm:$0xf]
  %v540 = vld [vmem:[%s1 + $0x5c] sm:$0xf]
  %v541 = vld [vmem:[%s1 + $0x60] sm:$0xf]
  %v542 = vld [vmem:[%s1 + $0x64] sm:$0xf]
  %v543 = vld [vmem:[%s1 + $0x68] sm:$0xf]
  %v544 = vld [vmem:[%s1 + $0x6c] sm:$0xf]
  %v545 = vld [vmem:[%s1 + $0x70] sm:$0xf]
  %v546 = vld [vmem:[%s1 + $0x74] sm:$0xf]
  %v547 = vld [vmem:[%s1 + $0x78] sm:$0xf]
  %v548 = vld [vmem:[%s1 + $0x7c] sm:$0xf]
  %v549 = vld [vmem:[%s1 + $0x80] sm:$0xf]
  %v550 = vld [vmem:[%s1 + $0x84] sm:$0xf]
  %v551 = vld [vmem:[%s1 + $0x88] sm:$0xf]
  %v552 = vld [vmem:[%s1 + $0x8c] sm:$0xf]
  %v553 = vld [vmem:[%s1 + $0x90] sm:$0xf]
  %v554 = vld [vmem:[%s1 + $0x94] sm:$0xf]
  %v555 = vld [vmem:[%s1 + $0x98] sm:$0xf]
  %v556 = vld [vmem:[%s1 + $0x9c] sm:$0xf]
  %v557 = vld [vmem:[%s1 + $0xa0] sm:$0xf]
  %v558 = vld [vmem:[%s1 + $0xa4] sm:$0xf]
  %v559 = vld [vmem:[%s1 + $0xa8] sm:$0xf]
  %v560 = vld [vmem:[%s1 + $0xac] sm:$0xf]
  %v561 = vld [vmem:[%s1 + $0xb0] sm:$0xf]
  %v562 = vld [vmem:[%s1 + $0xb4] sm:$0xf]
  %v563 = vld [vmem:[%s1 + $0xb8] sm:$0xf]
  %v564 = vld [vmem:[%s1 + $0xbc] sm:$0xf]
  %v565 = vld [vmem:[%s1 + $0xc0] sm:$0xf]
  %v615 = vunpack.c.l.b16 %v517
  %v616 = vunpack.c.l.b16 %v518
  %v617 = vunpack.c.l.b16 %v519
  %v618 = vunpack.c.l.b16 %v520
  %v619 = vunpack.c.l.b16 %v521
  %v620 = vunpack.c.l.b16 %v522
  %v621 = vunpack.c.l.b16 %v523
  %v622 = vunpack.c.l.b16 %v524
  %v623 = vunpack.c.l.b16 %v525
  %v624 = vunpack.c.l.b16 %v526
  %v625 = vunpack.c.l.b16 %v527
  %v626 = vunpack.c.l.b16 %v528
  %v627 = vunpack.c.l.b16 %v529
  %v628 = vunpack.c.l.b16 %v530
  %v629 = vunpack.c.l.b16 %v531
  %v630 = vunpack.c.l.b16 %v532
  %v631 = vunpack.c.l.b16 %v533
  %v632 = vunpack.c.l.b16 %v534
  %v633 = vunpack.c.l.b16 %v535
  %v634 = vunpack.c.l.b16 %v536
  %v635 = vunpack.c.l.b16 %v537
  %v636 = vunpack.c.l.b16 %v538
  %v637 = vunpack.c.l.b16 %v539
  %v638 = vunpack.c.l.b16 %v540
  %v639 = vunpack.c.l.b16 %v541
  %v640 = vunpack.c.l.b16 %v542
  %v641 = vunpack.c.l.b16 %v543
  %v642 = vunpack.c.l.b16 %v544
  %v643 = vunpack.c.l.b16 %v545
  %v644 = vunpack.c.l.b16 %v546
  %v645 = vunpack.c.l.b16 %v547
  %v646 = vunpack.c.l.b16 %v548
  %v647 = vunpack.c.l.b16 %v549
  %v648 = vunpack.c.l.b16 %v550
  %v649 = vunpack.c.l.b16 %v551
  %v650 = vunpack.c.l.b16 %v552
  %v651 = vunpack.c.l.b16 %v553
  %v652 = vunpack.c.l.b16 %v554
  %v653 = vunpack.c.l.b16 %v555
  %v654 = vunpack.c.l.b16 %v556
  %v655 = vunpack.c.l.b16 %v557
  %v656 = vunpack.c.l.b16 %v558
  %v657 = vunpack.c.l.b16 %v559
  %v658 = vunpack.c.l.b16 %v560
  %v659 = vunpack.c.l.b16 %v561
  %v660 = vunpack.c.l.b16 %v562
  %v661 = vunpack.c.l.b16 %v563
  %v662 = vunpack.c.l.b16 %v564
  %v663 = vunpack.c.l.b16 %v565
  %v664 = vpack.c.b16 %v616, %v615
  %v665 = vpack.c.b16 %v618, %v617
  %v666 = vpack.c.b16 %v620, %v619
  %v667 = vpack.c.b16 %v622, %v621
  %v668 = vpack.c.b16 %v624, %v623
  %v669 = vpack.c.b16 %v626, %v625
  %v670 = vpack.c.b16 %v628, %v627
  %v671 = vpack.c.b16 %v630, %v629
  %v672 = vpack.c.b16 %v632, %v631
  %v673 = vpack.c.b16 %v634, %v633
  %v674 = vpack.c.b16 %v636, %v635
  %v675 = vpack.c.b16 %v638, %v637
  %v676 = vpack.c.b16 %v640, %v639
  %v677 = vpack.c.b16 %v642, %v641
  %v678 = vpack.c.b16 %v644, %v643
  %v679 = vpack.c.b16 %v646, %v645
  %v680 = vpack.c.b16 %v648, %v647
  %v681 = vpack.c.b16 %v650, %v649
  %v682 = vpack.c.b16 %v652, %v651
  %v683 = vpack.c.b16 %v654, %v653
  %v684 = vpack.c.b16 %v656, %v655
  %v685 = vpack.c.b16 %v658, %v657
  %v686 = vpack.c.b16 %v660, %v659
  %v687 = vpack.c.b16 %v662, %v661
  %v688 = vpack.c.b16 %v663, %v663
  %714 = vmatprep.subr.bf16.mxu0 0
  %715 = vmatpush1.bf16.msra.mxu0 %v276
  %716 = vmatprep.subr.bf16.mxu0 0
  %717 = vmatpush1.bf16.msra.mxu0 %v275
  %718 = vmatprep.subr.bf16.mxu0 0
  %719 = vmatpush1.bf16.msra.mxu0 %v274
  %720 = vmatprep.subr.bf16.mxu0 0
  %721 = vmatpush1.bf16.msra.mxu0 %v273
  %722 = vmatprep.subr.bf16.mxu0 0
  %723 = vmatpush1.bf16.msra.mxu0 %v272
  %724 = vmatprep.subr.bf16.mxu0 0
  %725 = vmatpush1.bf16.msra.mxu0 %v271
  %726 = vmatprep.subr.bf16.mxu0 0
  %727 = vmatpush1.bf16.msra.mxu0 %v270
  %728 = vmatprep.subr.bf16.mxu0 0
  %729 = vmatpush1.bf16.msra.mxu0 %v269
  %730 = vmatprep.subr.bf16.mxu0 0
  %731 = vmatpush2.bf16.msra.mxu0 0
  %732 = vmatprep.subr.bf16.mxu0 0
  %733 = vmatpush2.bf16.msra.mxu0 0
  %734 = vmatprep.subr.bf16.mxu0 0
  %735 = vmatpush2.bf16.msra.mxu0 0
  %736 = vmatprep.subr.bf16.mxu0 0
  %737 = vmatpush2.bf16.msra.mxu0 0
  %738 = vmatprep.subr.bf16.mxu0 0
  %739 = vmatpush2.bf16.msra.mxu0 0
  %740 = vmatprep.subr.bf16.mxu0 0
  %741 = vmatpush2.bf16.msra.mxu0 0
  %742 = vmatprep.subr.bf16.mxu0 0
  %743 = vmatpush2.bf16.msra.mxu0 0
  %744 = vmatprep.subr.bf16.mxu0 0
  %745 = vmatpush2.bf16.msra.mxu0 0
  %746 = vmatprep.mubr.bf16.mxu0 0
  %747 = vmatmul.mubr.bf16.gmra.mxu0 %v664
  %v748 = vpop.f32.mrf.mxu0
  %v749 = vadd.f32 0.0, %v748
  %v750 = vpop.f32.mrf.mxu0
  %v751 = vpop.f32.mrf.mxu0
  %v752 = vadd.f32 0.0, %v751
  %v753 = vpop.f32.mrf.mxu0
  %754 = vmatprep.mubr.bf16.mxu0 0
  %755 = vmatmul.mubr.bf16.gmra.mxu0 %v665
  %v756 = vpop.f32.mrf.mxu0
  %v757 = vadd.f32 0.0, %v756
  %v758 = vpop.f32.mrf.mxu0
  %v759 = vpop.f32.mrf.mxu0
  %v760 = vadd.f32 0.0, %v759
  %v761 = vpop.f32.mrf.mxu0
  %762 = vmatprep.mubr.bf16.mxu0 0
  %763 = vmatmul.mubr.bf16.gmra.mxu0 %v666
  %v764 = vpop.f32.mrf.mxu0
  %v765 = vadd.f32 0.0, %v764
  %v766 = vpop.f32.mrf.mxu0
  %v767 = vpop.f32.mrf.mxu0
  %v768 = vadd.f32 0.0, %v767
  %v769 = vpop.f32.mrf.mxu0
  %770 = vmatprep.mubr.bf16.mxu0 0
  %771 = vmatmul.mubr.bf16.gmra.mxu0 %v667
  %v772 = vpop.f32.mrf.mxu0
  %v773 = vadd.f32 0.0, %v772
  %v774 = vpop.f32.mrf.mxu0
  %v775 = vpop.f32.mrf.mxu0
  %v776 = vadd.f32 0.0, %v775
  %v777 = vpop.f32.mrf.mxu0
  %778 = vmatprep.mubr.bf16.mxu0 0
  %779 = vmatmul.mubr.bf16.gmra.mxu0 %v668
  %v780 = vpop.f32.mrf.mxu0
  %v781 = vadd.f32 0.0, %v780
  %v782 = vpop.f32.mrf.mxu0
  %v783 = vpop.f32.mrf.mxu0
  %v784 = vadd.f32 0.0, %v783
  %v785 = vpop.f32.mrf.mxu0
  %786 = vmatprep.mubr.bf16.mxu0 0
  %787 = vmatmul.mubr.bf16.gmra.mxu0 %v669
  %v788 = vpop.f32.mrf.mxu0
  %v789 = vadd.f32 0.0, %v788
  %v790 = vpop.f32.mrf.mxu0
  %v791 = vpop.f32.mrf.mxu0
  %v792 = vadd.f32 0.0, %v791
  %v793 = vpop.f32.mrf.mxu0
  %794 = vmatprep.mubr.bf16.mxu0 0
  %795 = vmatmul.mubr.bf16.gmra.mxu0 %v670
  %v796 = vpop.f32.mrf.mxu0
  %v797 = vadd.f32 0.0, %v796
  %v798 = vpop.f32.mrf.mxu0
  %v799 = vpop.f32.mrf.mxu0
  %v800 = vadd.f32 0.0, %v799
  %v801 = vpop.f32.mrf.mxu0
  %802 = vmatprep.mubr.bf16.mxu0 0
  %803 = vmatmul.mubr.bf16.gmra.mxu0 %v671
  %v804 = vpop.f32.mrf.mxu0
  %v805 = vadd.f32 0.0, %v804
  %v806 = vpop.f32.mrf.mxu0
  %v807 = vpop.f32.mrf.mxu0
  %v808 = vadd.f32 0.0, %v807
  %v809 = vpop.f32.mrf.mxu0
  %810 = vmatprep.mubr.bf16.mxu0 0
  %811 = vmatmul.mubr.bf16.gmra.mxu0 %v672
  %v812 = vpop.f32.mrf.mxu0
  %v813 = vadd.f32 0.0, %v812
  %v814 = vpop.f32.mrf.mxu0
  %v815 = vpop.f32.mrf.mxu0
  %v816 = vadd.f32 0.0, %v815
  %v817 = vpop.f32.mrf.mxu0
  %818 = vmatprep.mubr.bf16.mxu0 0
  %819 = vmatmul.mubr.bf16.gmra.mxu0 %v673
  %v820 = vpop.f32.mrf.mxu0
  %v821 = vadd.f32 0.0, %v820
  %v822 = vpop.f32.mrf.mxu0
  %v823 = vpop.f32.mrf.mxu0
  %v824 = vadd.f32 0.0, %v823
  %v825 = vpop.f32.mrf.mxu0
  %826 = vmatprep.mubr.bf16.mxu0 0
  %827 = vmatmul.mubr.bf16.gmra.mxu0 %v674
  %v828 = vpop.f32.mrf.mxu0
  %v829 = vadd.f32 0.0, %v828
  %v830 = vpop.f32.mrf.mxu0
  %v831 = vpop.f32.mrf.mxu0
  %v832 = vadd.f32 0.0, %v831
  %v833 = vpop.f32.mrf.mxu0
  %834 = vmatprep.mubr.bf16.mxu0 0
  %835 = vmatmul.mubr.bf16.gmra.mxu0 %v675
  %v836 = vpop.f32.mrf.mxu0
  %v837 = vadd.f32 0.0, %v836
  %v838 = vpop.f32.mrf.mxu0
  %v839 = vpop.f32.mrf.mxu0
  %v840 = vadd.f32 0.0, %v839
  %v841 = vpop.f32.mrf.mxu0
  %842 = vmatprep.mubr.bf16.mxu0 0
  %843 = vmatmul.mubr.bf16.gmra.mxu0 %v676
  %v844 = vpop.f32.mrf.mxu0
  %v845 = vadd.f32 0.0, %v844
  %v846 = vpop.f32.mrf.mxu0
  %v847 = vpop.f32.mrf.mxu0
  %v848 = vadd.f32 0.0, %v847
  %v849 = vpop.f32.mrf.mxu0
  %850 = vmatprep.mubr.bf16.mxu0 0
  %851 = vmatmul.mubr.bf16.gmra.mxu0 %v677
  %v852 = vpop.f32.mrf.mxu0
  %v853 = vadd.f32 0.0, %v852
  %v854 = vpop.f32.mrf.mxu0
  %v855 = vpop.f32.mrf.mxu0
  %v856 = vadd.f32 0.0, %v855
  %v857 = vpop.f32.mrf.mxu0
  %858 = vmatprep.mubr.bf16.mxu0 0
  %859 = vmatmul.mubr.bf16.gmra.mxu0 %v678
  %v860 = vpop.f32.mrf.mxu0
  %v861 = vadd.f32 0.0, %v860
  %v862 = vpop.f32.mrf.mxu0
  %v863 = vpop.f32.mrf.mxu0
  %v864 = vadd.f32 0.0, %v863
  %v865 = vpop.f32.mrf.mxu0
  %866 = vmatprep.mubr.bf16.mxu0 0
  %867 = vmatmul.mubr.bf16.gmra.mxu0 %v679
  %v868 = vpop.f32.mrf.mxu0
  %v869 = vadd.f32 0.0, %v868
  %v870 = vpop.f32.mrf.mxu0
  %v871 = vpop.f32.mrf.mxu0
  %v872 = vadd.f32 0.0, %v871
  %v873 = vpop.f32.mrf.mxu0
  %874 = vmatprep.mubr.bf16.mxu0 0
  %875 = vmatmul.mubr.bf16.gmra.mxu0 %v680
  %v876 = vpop.f32.mrf.mxu0
  %v877 = vadd.f32 0.0, %v876
  %v878 = vpop.f32.mrf.mxu0
  %v879 = vpop.f32.mrf.mxu0
  %v880 = vadd.f32 0.0, %v879
  %v881 = vpop.f32.mrf.mxu0
  %882 = vmatprep.mubr.bf16.mxu0 0
  %883 = vmatmul.mubr.bf16.gmra.mxu0 %v681
  %v884 = vpop.f32.mrf.mxu0
  %v885 = vadd.f32 0.0, %v884
  %v886 = vpop.f32.mrf.mxu0
  %v887 = vpop.f32.mrf.mxu0
  %v888 = vadd.f32 0.0, %v887
  %v889 = vpop.f32.mrf.mxu0
  %890 = vmatprep.mubr.bf16.mxu0 0
  %891 = vmatmul.mubr.bf16.gmra.mxu0 %v682
  %v892 = vpop.f32.mrf.mxu0
  %v893 = vadd.f32 0.0, %v892
  %v894 = vpop.f32.mrf.mxu0
  %v895 = vpop.f32.mrf.mxu0
  %v896 = vadd.f32 0.0, %v895
  %v897 = vpop.f32.mrf.mxu0
  %898 = vmatprep.mubr.bf16.mxu0 0
  %899 = vmatmul.mubr.bf16.gmra.mxu0 %v683
  %v900 = vpop.f32.mrf.mxu0
  %v901 = vadd.f32 0.0, %v900
  %v902 = vpop.f32.mrf.mxu0
  %v903 = vpop.f32.mrf.mxu0
  %v904 = vadd.f32 0.0, %v903
  %v905 = vpop.f32.mrf.mxu0
  %906 = vmatprep.mubr.bf16.mxu0 0
  %907 = vmatmul.mubr.bf16.gmra.mxu0 %v684
  %v908 = vpop.f32.mrf.mxu0
  %v909 = vadd.f32 0.0, %v908
  %v910 = vpop.f32.mrf.mxu0
  %v911 = vpop.f32.mrf.mxu0
  %v912 = vadd.f32 0.0, %v911
  %v913 = vpop.f32.mrf.mxu0
  %914 = vmatprep.mubr.bf16.mxu0 0
  %915 = vmatmul.mubr.bf16.gmra.mxu0 %v685
  %v916 = vpop.f32.mrf.mxu0
  %v917 = vadd.f32 0.0, %v916
  %v918 = vpop.f32.mrf.mxu0
  %v919 = vpop.f32.mrf.mxu0
  %v920 = vadd.f32 0.0, %v919
  %v921 = vpop.f32.mrf.mxu0
  %922 = vmatprep.mubr.bf16.mxu0 0
  %923 = vmatmul.mubr.bf16.gmra.mxu0 %v686
  %v924 = vpop.f32.mrf.mxu0
  %v925 = vadd.f32 0.0, %v924
  %v926 = vpop.f32.mrf.mxu0
  %v927 = vpop.f32.mrf.mxu0
  %v928 = vadd.f32 0.0, %v927
  %v929 = vpop.f32.mrf.mxu0
  %930 = vmatprep.mubr.bf16.mxu0 0
  %931 = vmatmul.mubr.bf16.gmra.mxu0 %v687
  %v932 = vpop.f32.mrf.mxu0
  %v933 = vadd.f32 0.0, %v932
  %v934 = vpop.f32.mrf.mxu0
  %v935 = vpop.f32.mrf.mxu0
  %v936 = vadd.f32 0.0, %v935
  %v937 = vpop.f32.mrf.mxu0
  %938 = vmatprep.mubr.bf16.mxu0 0
  %939 = vmatmul.mubr.bf16.gmra.mxu0 %v688
  %v940 = vpop.f32.mrf.mxu0
  %v941 = vadd.f32 0.0, %v940
  %v942 = vpop.f32.mrf.mxu0
  %v943 = vpop.f32.mrf.mxu0
  %v944 = vpop.f32.mrf.mxu0
  %945 = vdwg.mxu0
  %v946 = vld [vmem:[%s2] sm:$0xf]
  %v947 = vld [vmem:[%s2 + $0x4] sm:$0xf]
  %v948 = vld [vmem:[%s2 + $0x8] sm:$0xf]
  %v949 = vld [vmem:[%s2 + $0xc] sm:$0xf]
  %v950 = vld [vmem:[%s2 + $0x10] sm:$0xf]
  %v951 = vld [vmem:[%s2 + $0x14] sm:$0xf]
  %v952 = vld [vmem:[%s2 + $0x18] sm:$0xf]
  %v953 = vld [vmem:[%s2 + $0x1c] sm:$0xf]
  %v954 = vld [vmem:[%s2 + $0x20] sm:$0xf]
  %v955 = vld [vmem:[%s2 + $0x24] sm:$0xf]
  %v956 = vld [vmem:[%s2 + $0x28] sm:$0xf]
  %v957 = vld [vmem:[%s2 + $0x2c] sm:$0xf]
  %v958 = vld [vmem:[%s2 + $0x30] sm:$0xf]
  %v959 = vld [vmem:[%s2 + $0x34] sm:$0xf]
  %v960 = vld [vmem:[%s2 + $0x38] sm:$0xf]
  %v961 = vld [vmem:[%s2 + $0x3c] sm:$0xf]
  %v962 = vld [vmem:[%s2 + $0x40] sm:$0xf]
  %v963 = vld [vmem:[%s2 + $0x44] sm:$0xf]
  %v964 = vld [vmem:[%s2 + $0x48] sm:$0xf]
  %v965 = vld [vmem:[%s2 + $0x4c] sm:$0xf]
  %v966 = vld [vmem:[%s2 + $0x50] sm:$0xf]
  %v967 = vld [vmem:[%s2 + $0x54] sm:$0xf]
  %v968 = vld [vmem:[%s2 + $0x58] sm:$0xf]
  %v969 = vld [vmem:[%s2 + $0x5c] sm:$0xf]
  %v970 = vld [vmem:[%s2 + $0x60] sm:$0xf]
  %v971 = vld [vmem:[%s2 + $0x64] sm:$0xf]
  %v972 = vld [vmem:[%s2 + $0x68] sm:$0xf]
  %v973 = vld [vmem:[%s2 + $0x6c] sm:$0xf]
  %v974 = vld [vmem:[%s2 + $0x70] sm:$0xf]
  %v975 = vld [vmem:[%s2 + $0x74] sm:$0xf]
  %v976 = vld [vmem:[%s2 + $0x78] sm:$0xf]
  %v977 = vld [vmem:[%s2 + $0x7c] sm:$0xf]
  %v978 = vld [vmem:[%s2 + $0x80] sm:$0xf]
  %v979 = vld [vmem:[%s2 + $0x84] sm:$0xf]
  %v980 = vld [vmem:[%s2 + $0x88] sm:$0xf]
  %v981 = vld [vmem:[%s2 + $0x8c] sm:$0xf]
  %v982 = vld [vmem:[%s2 + $0x90] sm:$0xf]
  %v983 = vld [vmem:[%s2 + $0x94] sm:$0xf]
  %v984 = vld [vmem:[%s2 + $0x98] sm:$0xf]
  %v985 = vld [vmem:[%s2 + $0x9c] sm:$0xf]
  %v986 = vld [vmem:[%s2 + $0xa0] sm:$0xf]
  %v987 = vld [vmem:[%s2 + $0xa4] sm:$0xf]
  %v988 = vld [vmem:[%s2 + $0xa8] sm:$0xf]
  %v989 = vld [vmem:[%s2 + $0xac] sm:$0xf]
  %v990 = vld [vmem:[%s2 + $0xb0] sm:$0xf]
  %v991 = vld [vmem:[%s2 + $0xb4] sm:$0xf]
  %v992 = vld [vmem:[%s2 + $0xb8] sm:$0xf]
  %v993 = vld [vmem:[%s2 + $0xbc] sm:$0xf]
  %v994 = vld [vmem:[%s2 + $0xc0] sm:$0xf]
  %v1044 = vunpack.c.l.b16 %v946
  %v1045 = vunpack.c.l.b16 %v947
  %v1046 = vunpack.c.l.b16 %v948
  %v1047 = vunpack.c.l.b16 %v949
  %v1048 = vunpack.c.l.b16 %v950
  %v1049 = vunpack.c.l.b16 %v951
  %v1050 = vunpack.c.l.b16 %v952
  %v1051 = vunpack.c.l.b16 %v953
  %v1052 = vunpack.c.l.b16 %v954
  %v1053 = vunpack.c.l.b16 %v955
  %v1054 = vunpack.c.l.b16 %v956
  %v1055 = vunpack.c.l.b16 %v957
  %v1056 = vunpack.c.l.b16 %v958
  %v1057 = vunpack.c.l.b16 %v959
  %v1058 = vunpack.c.l.b16 %v960
  %v1059 = vunpack.c.l.b16 %v961
  %v1060 = vunpack.c.l.b16 %v962
  %v1061 = vunpack.c.l.b16 %v963
  %v1062 = vunpack.c.l.b16 %v964
  %v1063 = vunpack.c.l.b16 %v965
  %v1064 = vunpack.c.l.b16 %v966
  %v1065 = vunpack.c.l.b16 %v967
  %v1066 = vunpack.c.l.b16 %v968
  %v1067 = vunpack.c.l.b16 %v969
  %v1068 = vunpack.c.l.b16 %v970
  %v1069 = vunpack.c.l.b16 %v971
  %v1070 = vunpack.c.l.b16 %v972
  %v1071 = vunpack.c.l.b16 %v973
  %v1072 = vunpack.c.l.b16 %v974
  %v1073 = vunpack.c.l.b16 %v975
  %v1074 = vunpack.c.l.b16 %v976
  %v1075 = vunpack.c.l.b16 %v977
  %v1076 = vunpack.c.l.b16 %v978
  %v1077 = vunpack.c.l.b16 %v979
  %v1078 = vunpack.c.l.b16 %v980
  %v1079 = vunpack.c.l.b16 %v981
  %v1080 = vunpack.c.l.b16 %v982
  %v1081 = vunpack.c.l.b16 %v983
  %v1082 = vunpack.c.l.b16 %v984
  %v1083 = vunpack.c.l.b16 %v985
  %v1084 = vunpack.c.l.b16 %v986
  %v1085 = vunpack.c.l.b16 %v987
  %v1086 = vunpack.c.l.b16 %v988
  %v1087 = vunpack.c.l.b16 %v989
  %v1088 = vunpack.c.l.b16 %v990
  %v1089 = vunpack.c.l.b16 %v991
  %v1090 = vunpack.c.l.b16 %v992
  %v1091 = vunpack.c.l.b16 %v993
  %v1092 = vunpack.c.l.b16 %v994
  %v1093 = vpack.c.b16 %v1045, %v1044
  %v1094 = vpack.c.b16 %v1047, %v1046
  %v1095 = vpack.c.b16 %v1049, %v1048
  %v1096 = vpack.c.b16 %v1051, %v1050
  %v1097 = vpack.c.b16 %v1053, %v1052
  %v1098 = vpack.c.b16 %v1055, %v1054
  %v1099 = vpack.c.b16 %v1057, %v1056
  %v1100 = vpack.c.b16 %v1059, %v1058
  %v1101 = vpack.c.b16 %v1061, %v1060
  %v1102 = vpack.c.b16 %v1063, %v1062
  %v1103 = vpack.c.b16 %v1065, %v1064
  %v1104 = vpack.c.b16 %v1067, %v1066
  %v1105 = vpack.c.b16 %v1069, %v1068
  %v1106 = vpack.c.b16 %v1071, %v1070
  %v1107 = vpack.c.b16 %v1073, %v1072
  %v1108 = vpack.c.b16 %v1075, %v1074
  %v1109 = vpack.c.b16 %v1077, %v1076
  %v1110 = vpack.c.b16 %v1079, %v1078
  %v1111 = vpack.c.b16 %v1081, %v1080
  %v1112 = vpack.c.b16 %v1083, %v1082
  %v1113 = vpack.c.b16 %v1085, %v1084
  %v1114 = vpack.c.b16 %v1087, %v1086
  %v1115 = vpack.c.b16 %v1089, %v1088
  %v1116 = vpack.c.b16 %v1091, %v1090
  %v1117 = vpack.c.b16 %v1092, %v1092
  %1143 = vmatprep.subr.bf16.mxu0 0
  %1144 = vmatpush1.bf16.msra.mxu0 %v276
  %1145 = vmatprep.subr.bf16.mxu0 0
  %1146 = vmatpush1.bf16.msra.mxu0 %v275
  %1147 = vmatprep.subr.bf16.mxu0 0
  %1148 = vmatpush1.bf16.msra.mxu0 %v274
  %1149 = vmatprep.subr.bf16.mxu0 0
  %1150 = vmatpush1.bf16.msra.mxu0 %v273
  %1151 = vmatprep.subr.bf16.mxu0 0
  %1152 = vmatpush1.bf16.msra.mxu0 %v272
  %1153 = vmatprep.subr.bf16.mxu0 0
  %1154 = vmatpush1.bf16.msra.mxu0 %v271
  %1155 = vmatprep.subr.bf16.mxu0 0
  %1156 = vmatpush1.bf16.msra.mxu0 %v270
  %1157 = vmatprep.subr.bf16.mxu0 0
  %1158 = vmatpush1.bf16.msra.mxu0 %v269
  %1159 = vmatprep.subr.bf16.mxu0 0
  %1160 = vmatpush2.bf16.msra.mxu0 0
  %1161 = vmatprep.subr.bf16.mxu0 0
  %1162 = vmatpush2.bf16.msra.mxu0 0
  %1163 = vmatprep.subr.bf16.mxu0 0
  %1164 = vmatpush2.bf16.msra.mxu0 0
  %1165 = vmatprep.subr.bf16.mxu0 0
  %1166 = vmatpush2.bf16.msra.mxu0 0
  %1167 = vmatprep.subr.bf16.mxu0 0
  %1168 = vmatpush2.bf16.msra.mxu0 0
  %1169 = vmatprep.subr.bf16.mxu0 0
  %1170 = vmatpush2.bf16.msra.mxu0 0
  %1171 = vmatprep.subr.bf16.mxu0 0
  %1172 = vmatpush2.bf16.msra.mxu0 0
  %1173 = vmatprep.subr.bf16.mxu0 0
  %1174 = vmatpush2.bf16.msra.mxu0 0
  %1175 = vmatprep.mubr.bf16.mxu0 0
  %1176 = vmatmul.mubr.bf16.gmra.mxu0 %v1093
  %v1177 = vpop.f32.mrf.mxu0
  %v1178 = vadd.f32 0.0, %v1177
  %v1179 = vpop.f32.mrf.mxu0
  %v1180 = vpop.f32.mrf.mxu0
  %v1181 = vadd.f32 0.0, %v1180
  %v1182 = vpop.f32.mrf.mxu0
  %1183 = vmatprep.mubr.bf16.mxu0 0
  %1184 = vmatmul.mubr.bf16.gmra.mxu0 %v1094
  %v1185 = vpop.f32.mrf.mxu0
  %v1186 = vadd.f32 0.0, %v1185
  %v1187 = vpop.f32.mrf.mxu0
  %v1188 = vpop.f32.mrf.mxu0
  %v1189 = vadd.f32 0.0, %v1188
  %v1190 = vpop.f32.mrf.mxu0
  %1191 = vmatprep.mubr.bf16.mxu0 0
  %1192 = vmatmul.mubr.bf16.gmra.mxu0 %v1095
  %v1193 = vpop.f32.mrf.mxu0
  %v1194 = vadd.f32 0.0, %v1193
  %v1195 = vpop.f32.mrf.mxu0
  %v1196 = vpop.f32.mrf.mxu0
  %v1197 = vadd.f32 0.0, %v1196
  %v1198 = vpop.f32.mrf.mxu0
  %1199 = vmatprep.mubr.bf16.mxu0 0
  %1200 = vmatmul.mubr.bf16.gmra.mxu0 %v1096
  %v1201 = vpop.f32.mrf.mxu0
  %v1202 = vadd.f32 0.0, %v1201
  %v1203 = vpop.f32.mrf.mxu0
  %v1204 = vpop.f32.mrf.mxu0
  %v1205 = vadd.f32 0.0, %v1204
  %v1206 = vpop.f32.mrf.mxu0
  %1207 = vmatprep.mubr.bf16.mxu0 0
  %1208 = vmatmul.mubr.bf16.gmra.mxu0 %v1097
  %v1209 = vpop.f32.mrf.mxu0
  %v1210 = vadd.f32 0.0, %v1209
  %v1211 = vpop.f32.mrf.mxu0
  %v1212 = vpop.f32.mrf.mxu0
  %v1213 = vadd.f32 0.0, %v1212
  %v1214 = vpop.f32.mrf.mxu0
  %1215 = vmatprep.mubr.bf16.mxu0 0
  %1216 = vmatmul.mubr.bf16.gmra.mxu0 %v1098
  %v1217 = vpop.f32.mrf.mxu0
  %v1218 = vadd.f32 0.0, %v1217
  %v1219 = vpop.f32.mrf.mxu0
  %v1220 = vpop.f32.mrf.mxu0
  %v1221 = vadd.f32 0.0, %v1220
  %v1222 = vpop.f32.mrf.mxu0
  %1223 = vmatprep.mubr.bf16.mxu0 0
  %1224 = vmatmul.mubr.bf16.gmra.mxu0 %v1099
  %v1225 = vpop.f32.mrf.mxu0
  %v1226 = vadd.f32 0.0, %v1225
  %v1227 = vpop.f32.mrf.mxu0
  %v1228 = vpop.f32.mrf.mxu0
  %v1229 = vadd.f32 0.0, %v1228
  %v1230 = vpop.f32.mrf.mxu0
  %1231 = vmatprep.mubr.bf16.mxu0 0
  %1232 = vmatmul.mubr.bf16.gmra.mxu0 %v1100
  %v1233 = vpop.f32.mrf.mxu0
  %v1234 = vadd.f32 0.0, %v1233
  %v1235 = vpop.f32.mrf.mxu0
  %v1236 = vpop.f32.mrf.mxu0
  %v1237 = vadd.f32 0.0, %v1236
  %v1238 = vpop.f32.mrf.mxu0
  %1239 = vmatprep.mubr.bf16.mxu0 0
  %1240 = vmatmul.mubr.bf16.gmra.mxu0 %v1101
  %v1241 = vpop.f32.mrf.mxu0
  %v1242 = vadd.f32 0.0, %v1241
  %v1243 = vpop.f32.mrf.mxu0
  %v1244 = vpop.f32.mrf.mxu0
  %v1245 = vadd.f32 0.0, %v1244
  %v1246 = vpop.f32.mrf.mxu0
  %1247 = vmatprep.mubr.bf16.mxu0 0
  %1248 = vmatmul.mubr.bf16.gmra.mxu0 %v1102
  %v1249 = vpop.f32.mrf.mxu0
  %v1250 = vadd.f32 0.0, %v1249
  %v1251 = vpop.f32.mrf.mxu0
  %v1252 = vpop.f32.mrf.mxu0
  %v1253 = vadd.f32 0.0, %v1252
  %v1254 = vpop.f32.mrf.mxu0
  %1255 = vmatprep.mubr.bf16.mxu0 0
  %1256 = vmatmul.mubr.bf16.gmra.mxu0 %v1103
  %v1257 = vpop.f32.mrf.mxu0
  %v1258 = vadd.f32 0.0, %v1257
  %v1259 = vpop.f32.mrf.mxu0
  %v1260 = vpop.f32.mrf.mxu0
  %v1261 = vadd.f32 0.0, %v1260
  %v1262 = vpop.f32.mrf.mxu0
  %1263 = vmatprep.mubr.bf16.mxu0 0
  %1264 = vmatmul.mubr.bf16.gmra.mxu0 %v1104
  %v1265 = vpop.f32.mrf.mxu0
  %v1266 = vadd.f32 0.0, %v1265
  %v1267 = vpop.f32.mrf.mxu0
  %v1268 = vpop.f32.mrf.mxu0
  %v1269 = vadd.f32 0.0, %v1268
  %v1270 = vpop.f32.mrf.mxu0
  %1271 = vmatprep.mubr.bf16.mxu0 0
  %1272 = vmatmul.mubr.bf16.gmra.mxu0 %v1105
  %v1273 = vpop.f32.mrf.mxu0
  %v1274 = vadd.f32 0.0, %v1273
  %v1275 = vpop.f32.mrf.mxu0
  %v1276 = vpop.f32.mrf.mxu0
  %v1277 = vadd.f32 0.0, %v1276
  %v1278 = vpop.f32.mrf.mxu0
  %1279 = vmatprep.mubr.bf16.mxu0 0
  %1280 = vmatmul.mubr.bf16.gmra.mxu0 %v1106
  %v1281 = vpop.f32.mrf.mxu0
  %v1282 = vadd.f32 0.0, %v1281
  %v1283 = vpop.f32.mrf.mxu0
  %v1284 = vpop.f32.mrf.mxu0
  %v1285 = vadd.f32 0.0, %v1284
  %v1286 = vpop.f32.mrf.mxu0
  %1287 = vmatprep.mubr.bf16.mxu0 0
  %1288 = vmatmul.mubr.bf16.gmra.mxu0 %v1107
  %v1289 = vpop.f32.mrf.mxu0
  %v1290 = vadd.f32 0.0, %v1289
  %v1291 = vpop.f32.mrf.mxu0
  %v1292 = vpop.f32.mrf.mxu0
  %v1293 = vadd.f32 0.0, %v1292
  %v1294 = vpop.f32.mrf.mxu0
  %1295 = vmatprep.mubr.bf16.mxu0 0
  %1296 = vmatmul.mubr.bf16.gmra.mxu0 %v1108
  %v1297 = vpop.f32.mrf.mxu0
  %v1298 = vadd.f32 0.0, %v1297
  %v1299 = vpop.f32.mrf.mxu0
  %v1300 = vpop.f32.mrf.mxu0
  %v1301 = vadd.f32 0.0, %v1300
  %v1302 = vpop.f32.mrf.mxu0
  %1303 = vmatprep.mubr.bf16.mxu0 0
  %1304 = vmatmul.mubr.bf16.gmra.mxu0 %v1109
  %v1305 = vpop.f32.mrf.mxu0
  %v1306 = vadd.f32 0.0, %v1305
  %v1307 = vpop.f32.mrf.mxu0
  %v1308 = vpop.f32.mrf.mxu0
  %v1309 = vadd.f32 0.0, %v1308
  %v1310 = vpop.f32.mrf.mxu0
  %1311 = vmatprep.mubr.bf16.mxu0 0
  %1312 = vmatmul.mubr.bf16.gmra.mxu0 %v1110
  %v1313 = vpop.f32.mrf.mxu0
  %v1314 = vadd.f32 0.0, %v1313
  %v1315 = vpop.f32.mrf.mxu0
  %v1316 = vpop.f32.mrf.mxu0
  %v1317 = vadd.f32 0.0, %v1316
  %v1318 = vpop.f32.mrf.mxu0
  %1319 = vmatprep.mubr.bf16.mxu0 0
  %1320 = vmatmul.mubr.bf16.gmra.mxu0 %v1111
  %v1321 = vpop.f32.mrf.mxu0
  %v1322 = vadd.f32 0.0, %v1321
  %v1323 = vpop.f32.mrf.mxu0
  %v1324 = vpop.f32.mrf.mxu0
  %v1325 = vadd.f32 0.0, %v1324
  %v1326 = vpop.f32.mrf.mxu0
  %1327 = vmatprep.mubr.bf16.mxu0 0
  %1328 = vmatmul.mubr.bf16.gmra.mxu0 %v1112
  %v1329 = vpop.f32.mrf.mxu0
  %v1330 = vadd.f32 0.0, %v1329
  %v1331 = vpop.f32.mrf.mxu0
  %v1332 = vpop.f32.mrf.mxu0
  %v1333 = vadd.f32 0.0, %v1332
  %v1334 = vpop.f32.mrf.mxu0
  %1335 = vmatprep.mubr.bf16.mxu0 0
  %1336 = vmatmul.mubr.bf16.gmra.mxu0 %v1113
  %v1337 = vpop.f32.mrf.mxu0
  %v1338 = vadd.f32 0.0, %v1337
  %v1339 = vpop.f32.mrf.mxu0
  %v1340 = vpop.f32.mrf.mxu0
  %v1341 = vadd.f32 0.0, %v1340
  %v1342 = vpop.f32.mrf.mxu0
  %1343 = vmatprep.mubr.bf16.mxu0 0
  %1344 = vmatmul.mubr.bf16.gmra.mxu0 %v1114
  %v1345 = vpop.f32.mrf.mxu0
  %v1346 = vadd.f32 0.0, %v1345
  %v1347 = vpop.f32.mrf.mxu0
  %v1348 = vpop.f32.mrf.mxu0
  %v1349 = vadd.f32 0.0, %v1348
  %v1350 = vpop.f32.mrf.mxu0
  %1351 = vmatprep.mubr.bf16.mxu0 0
  %1352 = vmatmul.mubr.bf16.gmra.mxu0 %v1115
  %v1353 = vpop.f32.mrf.mxu0
  %v1354 = vadd.f32 0.0, %v1353
  %v1355 = vpop.f32.mrf.mxu0
  %v1356 = vpop.f32.mrf.mxu0
  %v1357 = vadd.f32 0.0, %v1356
  %v1358 = vpop.f32.mrf.mxu0
  %1359 = vmatprep.mubr.bf16.mxu0 0
  %1360 = vmatmul.mubr.bf16.gmra.mxu0 %v1116
  %v1361 = vpop.f32.mrf.mxu0
  %v1362 = vadd.f32 0.0, %v1361
  %v1363 = vpop.f32.mrf.mxu0
  %v1364 = vpop.f32.mrf.mxu0
  %v1365 = vadd.f32 0.0, %v1364
  %v1366 = vpop.f32.mrf.mxu0
  %1367 = vmatprep.mubr.bf16.mxu0 0
  %1368 = vmatmul.mubr.bf16.gmra.mxu0 %v1117
  %v1369 = vpop.f32.mrf.mxu0
  %v1370 = vadd.f32 0.0, %v1369
  %v1371 = vpop.f32.mrf.mxu0
  %v1372 = vpop.f32.mrf.mxu0
  %v1373 = vpop.f32.mrf.mxu0
  %1374 = vdwg.mxu0
  %v1375 = vld [vmem:[%s3] sm:$0xf]
  %v1376 = vld [vmem:[%s3 + $0x4] sm:$0xf]
  %v1377 = vld [vmem:[%s3 + $0x8] sm:$0xf]
  %v1378 = vld [vmem:[%s3 + $0xc] sm:$0xf]
  %v1379 = vld [vmem:[%s3 + $0x10] sm:$0xf]
  %v1380 = vld [vmem:[%s3 + $0x14] sm:$0xf]
  %v1381 = vld [vmem:[%s3 + $0x18] sm:$0xf]
  %v1382 = vld [vmem:[%s3 + $0x1c] sm:$0xf]
  %v1383 = vld [vmem:[%s3 + $0x20] sm:$0xf]
  %v1384 = vld [vmem:[%s3 + $0x24] sm:$0xf]
  %v1385 = vld [vmem:[%s3 + $0x28] sm:$0xf]
  %v1386 = vld [vmem:[%s3 + $0x2c] sm:$0xf]
  %v1387 = vld [vmem:[%s3 + $0x30] sm:$0xf]
  %v1388 = vld [vmem:[%s3 + $0x34] sm:$0xf]
  %v1389 = vld [vmem:[%s3 + $0x38] sm:$0xf]
  %v1390 = vld [vmem:[%s3 + $0x3c] sm:$0xf]
  %v1391 = vld [vmem:[%s3 + $0x40] sm:$0xf]
  %v1392 = vld [vmem:[%s3 + $0x44] sm:$0xf]
  %v1393 = vld [vmem:[%s3 + $0x48] sm:$0xf]
  %v1394 = vld [vmem:[%s3 + $0x4c] sm:$0xf]
  %v1395 = vld [vmem:[%s3 + $0x50] sm:$0xf]
  %v1396 = vld [vmem:[%s3 + $0x54] sm:$0xf]
  %v1397 = vld [vmem:[%s3 + $0x58] sm:$0xf]
  %v1398 = vld [vmem:[%s3 + $0x5c] sm:$0xf]
  %v1399 = vld [vmem:[%s3 + $0x60] sm:$0xf]
  %v1400 = vld [vmem:[%s3 + $0x64] sm:$0xf]
  %v1401 = vld [vmem:[%s3 + $0x68] sm:$0xf]
  %v1402 = vld [vmem:[%s3 + $0x6c] sm:$0xf]
  %v1403 = vld [vmem:[%s3 + $0x70] sm:$0xf]
  %v1404 = vld [vmem:[%s3 + $0x74] sm:$0xf]
  %v1405 = vld [vmem:[%s3 + $0x78] sm:$0xf]
  %v1406 = vld [vmem:[%s3 + $0x7c] sm:$0xf]
  %v1407 = vld [vmem:[%s3 + $0x80] sm:$0xf]
  %v1408 = vld [vmem:[%s3 + $0x84] sm:$0xf]
  %v1409 = vld [vmem:[%s3 + $0x88] sm:$0xf]
  %v1410 = vld [vmem:[%s3 + $0x8c] sm:$0xf]
  %v1411 = vld [vmem:[%s3 + $0x90] sm:$0xf]
  %v1412 = vld [vmem:[%s3 + $0x94] sm:$0xf]
  %v1413 = vld [vmem:[%s3 + $0x98] sm:$0xf]
  %v1414 = vld [vmem:[%s3 + $0x9c] sm:$0xf]
  %v1415 = vld [vmem:[%s3 + $0xa0] sm:$0xf]
  %v1416 = vld [vmem:[%s3 + $0xa4] sm:$0xf]
  %v1417 = vld [vmem:[%s3 + $0xa8] sm:$0xf]
  %v1418 = vld [vmem:[%s3 + $0xac] sm:$0xf]
  %v1419 = vld [vmem:[%s3 + $0xb0] sm:$0xf]
  %v1420 = vld [vmem:[%s3 + $0xb4] sm:$0xf]
  %v1421 = vld [vmem:[%s3 + $0xb8] sm:$0xf]
  %v1422 = vld [vmem:[%s3 + $0xbc] sm:$0xf]
  %v1423 = vld [vmem:[%s3 + $0xc0] sm:$0xf]
  %v1473 = vunpack.c.l.b16 %v1375
  %v1474 = vunpack.c.l.b16 %v1376
  %v1475 = vunpack.c.l.b16 %v1377
  %v1476 = vunpack.c.l.b16 %v1378
  %v1477 = vunpack.c.l.b16 %v1379
  %v1478 = vunpack.c.l.b16 %v1380
  %v1479 = vunpack.c.l.b16 %v1381
  %v1480 = vunpack.c.l.b16 %v1382
  %v1481 = vunpack.c.l.b16 %v1383
  %v1482 = vunpack.c.l.b16 %v1384
  %v1483 = vunpack.c.l.b16 %v1385
  %v1484 = vunpack.c.l.b16 %v1386
  %v1485 = vunpack.c.l.b16 %v1387
  %v1486 = vunpack.c.l.b16 %v1388
  %v1487 = vunpack.c.l.b16 %v1389
  %v1488 = vunpack.c.l.b16 %v1390
  %v1489 = vunpack.c.l.b16 %v1391
  %v1490 = vunpack.c.l.b16 %v1392
  %v1491 = vunpack.c.l.b16 %v1393
  %v1492 = vunpack.c.l.b16 %v1394
  %v1493 = vunpack.c.l.b16 %v1395
  %v1494 = vunpack.c.l.b16 %v1396
  %v1495 = vunpack.c.l.b16 %v1397
  %v1496 = vunpack.c.l.b16 %v1398
  %v1497 = vunpack.c.l.b16 %v1399
  %v1498 = vunpack.c.l.b16 %v1400
  %v1499 = vunpack.c.l.b16 %v1401
  %v1500 = vunpack.c.l.b16 %v1402
  %v1501 = vunpack.c.l.b16 %v1403
  %v1502 = vunpack.c.l.b16 %v1404
  %v1503 = vunpack.c.l.b16 %v1405
  %v1504 = vunpack.c.l.b16 %v1406
  %v1505 = vunpack.c.l.b16 %v1407
  %v1506 = vunpack.c.l.b16 %v1408
  %v1507 = vunpack.c.l.b16 %v1409
  %v1508 = vunpack.c.l.b16 %v1410
  %v1509 = vunpack.c.l.b16 %v1411
  %v1510 = vunpack.c.l.b16 %v1412
  %v1511 = vunpack.c.l.b16 %v1413
  %v1512 = vunpack.c.l.b16 %v1414
  %v1513 = vunpack.c.l.b16 %v1415
  %v1514 = vunpack.c.l.b16 %v1416
  %v1515 = vunpack.c.l.b16 %v1417
  %v1516 = vunpack.c.l.b16 %v1418
  %v1517 = vunpack.c.l.b16 %v1419
  %v1518 = vunpack.c.l.b16 %v1420
  %v1519 = vunpack.c.l.b16 %v1421
  %v1520 = vunpack.c.l.b16 %v1422
  %v1521 = vunpack.c.l.b16 %v1423
  %v1522 = vpack.c.b16 %v1474, %v1473
  %v1523 = vpack.c.b16 %v1476, %v1475
  %v1524 = vpack.c.b16 %v1478, %v1477
  %v1525 = vpack.c.b16 %v1480, %v1479
  %v1526 = vpack.c.b16 %v1482, %v1481
  %v1527 = vpack.c.b16 %v1484, %v1483
  %v1528 = vpack.c.b16 %v1486, %v1485
  %v1529 = vpack.c.b16 %v1488, %v1487
  %v1530 = vpack.c.b16 %v1490, %v1489
  %v1531 = vpack.c.b16 %v1492, %v1491
  %v1532 = vpack.c.b16 %v1494, %v1493
  %v1533 = vpack.c.b16 %v1496, %v1495
  %v1534 = vpack.c.b16 %v1498, %v1497
  %v1535 = vpack.c.b16 %v1500, %v1499
  %v1536 = vpack.c.b16 %v1502, %v1501
  %v1537 = vpack.c.b16 %v1504, %v1503
  %v1538 = vpack.c.b16 %v1506, %v1505
  %v1539 = vpack.c.b16 %v1508, %v1507
  %v1540 = vpack.c.b16 %v1510, %v1509
  %v1541 = vpack.c.b16 %v1512, %v1511
  %v1542 = vpack.c.b16 %v1514, %v1513
  %v1543 = vpack.c.b16 %v1516, %v1515
  %v1544 = vpack.c.b16 %v1518, %v1517
  %v1545 = vpack.c.b16 %v1520, %v1519
  %v1546 = vpack.c.b16 %v1521, %v1521
  %1572 = vmatprep.subr.bf16.mxu0 0
  %1573 = vmatpush1.bf16.msra.mxu0 %v276
  %1574 = vmatprep.subr.bf16.mxu0 0
  %1575 = vmatpush1.bf16.msra.mxu0 %v275
  %1576 = vmatprep.subr.bf16.mxu0 0
  %1577 = vmatpush1.bf16.msra.mxu0 %v274
  %1578 = vmatprep.subr.bf16.mxu0 0
  %1579 = vmatpush1.bf16.msra.mxu0 %v273
  %1580 = vmatprep.subr.bf16.mxu0 0
  %1581 = vmatpush1.bf16.msra.mxu0 %v272
  %1582 = vmatprep.subr.bf16.mxu0 0
  %1583 = vmatpush1.bf16.msra.mxu0 %v271
  %1584 = vmatprep.subr.bf16.mxu0 0
  %1585 = vmatpush1.bf16.msra.mxu0 %v270
  %1586 = vmatprep.subr.bf16.mxu0 0
  %1587 = vmatpush1.bf16.msra.mxu0 %v269
  %1588 = vmatprep.subr.bf16.mxu0 0
  %1589 = vmatpush2.bf16.msra.mxu0 0
  %1590 = vmatprep.subr.bf16.mxu0 0
  %1591 = vmatpush2.bf16.msra.mxu0 0
  %1592 = vmatprep.subr.bf16.mxu0 0
  %1593 = vmatpush2.bf16.msra.mxu0 0
  %1594 = vmatprep.subr.bf16.mxu0 0
  %1595 = vmatpush2.bf16.msra.mxu0 0
  %1596 = vmatprep.subr.bf16.mxu0 0
  %1597 = vmatpush2.bf16.msra.mxu0 0
  %1598 = vmatprep.subr.bf16.mxu0 0
  %1599 = vmatpush2.bf16.msra.mxu0 0
  %1600 = vmatprep.subr.bf16.mxu0 0
  %1601 = vmatpush2.bf16.msra.mxu0 0
  %1602 = vmatprep.subr.bf16.mxu0 0
  %1603 = vmatpush2.bf16.msra.mxu0 0
  %1604 = vmatprep.mubr.bf16.mxu0 0
  %1605 = vmatmul.mubr.bf16.gmra.mxu0 %v1522
  %v1606 = vpop.f32.mrf.mxu0
  %v1607 = vadd.f32 0.0, %v1606
  %v1608 = vpop.f32.mrf.mxu0
  %v1609 = vpop.f32.mrf.mxu0
  %v1610 = vadd.f32 0.0, %v1609
  %v1611 = vpop.f32.mrf.mxu0
  %1612 = vmatprep.mubr.bf16.mxu0 0
  %1613 = vmatmul.mubr.bf16.gmra.mxu0 %v1523
  %v1614 = vpop.f32.mrf.mxu0
  %v1615 = vadd.f32 0.0, %v1614
  %v1616 = vpop.f32.mrf.mxu0
  %v1617 = vpop.f32.mrf.mxu0
  %v1618 = vadd.f32 0.0, %v1617
  %v1619 = vpop.f32.mrf.mxu0
  %1620 = vmatprep.mubr.bf16.mxu0 0
  %1621 = vmatmul.mubr.bf16.gmra.mxu0 %v1524
  %v1622 = vpop.f32.mrf.mxu0
  %v1623 = vadd.f32 0.0, %v1622
  %v1624 = vpop.f32.mrf.mxu0
  %v1625 = vpop.f32.mrf.mxu0
  %v1626 = vadd.f32 0.0, %v1625
  %v1627 = vpop.f32.mrf.mxu0
  %1628 = vmatprep.mubr.bf16.mxu0 0
  %1629 = vmatmul.mubr.bf16.gmra.mxu0 %v1525
  %v1630 = vpop.f32.mrf.mxu0
  %v1631 = vadd.f32 0.0, %v1630
  %v1632 = vpop.f32.mrf.mxu0
  %v1633 = vpop.f32.mrf.mxu0
  %v1634 = vadd.f32 0.0, %v1633
  %v1635 = vpop.f32.mrf.mxu0
  %1636 = vmatprep.mubr.bf16.mxu0 0
  %1637 = vmatmul.mubr.bf16.gmra.mxu0 %v1526
  %v1638 = vpop.f32.mrf.mxu0
  %v1639 = vadd.f32 0.0, %v1638
  %v1640 = vpop.f32.mrf.mxu0
  %v1641 = vpop.f32.mrf.mxu0
  %v1642 = vadd.f32 0.0, %v1641
  %v1643 = vpop.f32.mrf.mxu0
  %1644 = vmatprep.mubr.bf16.mxu0 0
  %1645 = vmatmul.mubr.bf16.gmra.mxu0 %v1527
  %v1646 = vpop.f32.mrf.mxu0
  %v1647 = vadd.f32 0.0, %v1646
  %v1648 = vpop.f32.mrf.mxu0
  %v1649 = vpop.f32.mrf.mxu0
  %v1650 = vadd.f32 0.0, %v1649
  %v1651 = vpop.f32.mrf.mxu0
  %1652 = vmatprep.mubr.bf16.mxu0 0
  %1653 = vmatmul.mubr.bf16.gmra.mxu0 %v1528
  %v1654 = vpop.f32.mrf.mxu0
  %v1655 = vadd.f32 0.0, %v1654
  %v1656 = vpop.f32.mrf.mxu0
  %v1657 = vpop.f32.mrf.mxu0
  %v1658 = vadd.f32 0.0, %v1657
  %v1659 = vpop.f32.mrf.mxu0
  %1660 = vmatprep.mubr.bf16.mxu0 0
  %1661 = vmatmul.mubr.bf16.gmra.mxu0 %v1529
  %v1662 = vpop.f32.mrf.mxu0
  %v1663 = vadd.f32 0.0, %v1662
  %v1664 = vpop.f32.mrf.mxu0
  %v1665 = vpop.f32.mrf.mxu0
  %v1666 = vadd.f32 0.0, %v1665
  %v1667 = vpop.f32.mrf.mxu0
  %1668 = vmatprep.mubr.bf16.mxu0 0
  %1669 = vmatmul.mubr.bf16.gmra.mxu0 %v1530
  %v1670 = vpop.f32.mrf.mxu0
  %v1671 = vadd.f32 0.0, %v1670
  %v1672 = vpop.f32.mrf.mxu0
  %v1673 = vpop.f32.mrf.mxu0
  %v1674 = vadd.f32 0.0, %v1673
  %v1675 = vpop.f32.mrf.mxu0
  %1676 = vmatprep.mubr.bf16.mxu0 0
  %1677 = vmatmul.mubr.bf16.gmra.mxu0 %v1531
  %v1678 = vpop.f32.mrf.mxu0
  %v1679 = vadd.f32 0.0, %v1678
  %v1680 = vpop.f32.mrf.mxu0
  %v1681 = vpop.f32.mrf.mxu0
  %v1682 = vadd.f32 0.0, %v1681
  %v1683 = vpop.f32.mrf.mxu0
  %1684 = vmatprep.mubr.bf16.mxu0 0
  %1685 = vmatmul.mubr.bf16.gmra.mxu0 %v1532
  %v1686 = vpop.f32.mrf.mxu0
  %v1687 = vadd.f32 0.0, %v1686
  %v1688 = vpop.f32.mrf.mxu0
  %v1689 = vpop.f32.mrf.mxu0
  %v1690 = vadd.f32 0.0, %v1689
  %v1691 = vpop.f32.mrf.mxu0
  %1692 = vmatprep.mubr.bf16.mxu0 0
  %1693 = vmatmul.mubr.bf16.gmra.mxu0 %v1533
  %v1694 = vpop.f32.mrf.mxu0
  %v1695 = vadd.f32 0.0, %v1694
  %v1696 = vpop.f32.mrf.mxu0
  %v1697 = vpop.f32.mrf.mxu0
  %v1698 = vadd.f32 0.0, %v1697
  %v1699 = vpop.f32.mrf.mxu0
  %1700 = vmatprep.mubr.bf16.mxu0 0
  %1701 = vmatmul.mubr.bf16.gmra.mxu0 %v1534
  %v1702 = vpop.f32.mrf.mxu0
  %v1703 = vadd.f32 0.0, %v1702
  %v1704 = vpop.f32.mrf.mxu0
  %v1705 = vpop.f32.mrf.mxu0
  %v1706 = vadd.f32 0.0, %v1705
  %v1707 = vpop.f32.mrf.mxu0
  %1708 = vmatprep.mubr.bf16.mxu0 0
  %1709 = vmatmul.mubr.bf16.gmra.mxu0 %v1535
  %v1710 = vpop.f32.mrf.mxu0
  %v1711 = vadd.f32 0.0, %v1710
  %v1712 = vpop.f32.mrf.mxu0
  %v1713 = vpop.f32.mrf.mxu0
  %v1714 = vadd.f32 0.0, %v1713
  %v1715 = vpop.f32.mrf.mxu0
  %1716 = vmatprep.mubr.bf16.mxu0 0
  %1717 = vmatmul.mubr.bf16.gmra.mxu0 %v1536
  %v1718 = vpop.f32.mrf.mxu0
  %v1719 = vadd.f32 0.0, %v1718
  %v1720 = vpop.f32.mrf.mxu0
  %v1721 = vpop.f32.mrf.mxu0
  %v1722 = vadd.f32 0.0, %v1721
  %v1723 = vpop.f32.mrf.mxu0
  %1724 = vmatprep.mubr.bf16.mxu0 0
  %1725 = vmatmul.mubr.bf16.gmra.mxu0 %v1537
  %v1726 = vpop.f32.mrf.mxu0
  %v1727 = vadd.f32 0.0, %v1726
  %v1728 = vpop.f32.mrf.mxu0
  %v1729 = vpop.f32.mrf.mxu0
  %v1730 = vadd.f32 0.0, %v1729
  %v1731 = vpop.f32.mrf.mxu0
  %1732 = vmatprep.mubr.bf16.mxu0 0
  %1733 = vmatmul.mubr.bf16.gmra.mxu0 %v1538
  %v1734 = vpop.f32.mrf.mxu0
  %v1735 = vadd.f32 0.0, %v1734
  %v1736 = vpop.f32.mrf.mxu0
  %v1737 = vpop.f32.mrf.mxu0
  %v1738 = vadd.f32 0.0, %v1737
  %v1739 = vpop.f32.mrf.mxu0
  %1740 = vmatprep.mubr.bf16.mxu0 0
  %1741 = vmatmul.mubr.bf16.gmra.mxu0 %v1539
  %v1742 = vpop.f32.mrf.mxu0
  %v1743 = vadd.f32 0.0, %v1742
  %v1744 = vpop.f32.mrf.mxu0
  %v1745 = vpop.f32.mrf.mxu0
  %v1746 = vadd.f32 0.0, %v1745
  %v1747 = vpop.f32.mrf.mxu0
  %1748 = vmatprep.mubr.bf16.mxu0 0
  %1749 = vmatmul.mubr.bf16.gmra.mxu0 %v1540
  %v1750 = vpop.f32.mrf.mxu0
  %v1751 = vadd.f32 0.0, %v1750
  %v1752 = vpop.f32.mrf.mxu0
  %v1753 = vpop.f32.mrf.mxu0
  %v1754 = vadd.f32 0.0, %v1753
  %v1755 = vpop.f32.mrf.mxu0
  %1756 = vmatprep.mubr.bf16.mxu0 0
  %1757 = vmatmul.mubr.bf16.gmra.mxu0 %v1541
  %v1758 = vpop.f32.mrf.mxu0
  %v1759 = vadd.f32 0.0, %v1758
  %v1760 = vpop.f32.mrf.mxu0
  %v1761 = vpop.f32.mrf.mxu0
  %v1762 = vadd.f32 0.0, %v1761
  %v1763 = vpop.f32.mrf.mxu0
  %1764 = vmatprep.mubr.bf16.mxu0 0
  %1765 = vmatmul.mubr.bf16.gmra.mxu0 %v1542
  %v1766 = vpop.f32.mrf.mxu0
  %v1767 = vadd.f32 0.0, %v1766
  %v1768 = vpop.f32.mrf.mxu0
  %v1769 = vpop.f32.mrf.mxu0
  %v1770 = vadd.f32 0.0, %v1769
  %v1771 = vpop.f32.mrf.mxu0
  %1772 = vmatprep.mubr.bf16.mxu0 0
  %1773 = vmatmul.mubr.bf16.gmra.mxu0 %v1543
  %v1774 = vpop.f32.mrf.mxu0
  %v1775 = vadd.f32 0.0, %v1774
  %v1776 = vpop.f32.mrf.mxu0
  %v1777 = vpop.f32.mrf.mxu0
  %v1778 = vadd.f32 0.0, %v1777
  %v1779 = vpop.f32.mrf.mxu0
  %1780 = vmatprep.mubr.bf16.mxu0 0
  %1781 = vmatmul.mubr.bf16.gmra.mxu0 %v1544
  %v1782 = vpop.f32.mrf.mxu0
  %v1783 = vadd.f32 0.0, %v1782
  %v1784 = vpop.f32.mrf.mxu0
  %v1785 = vpop.f32.mrf.mxu0
  %v1786 = vadd.f32 0.0, %v1785
  %v1787 = vpop.f32.mrf.mxu0
  %1788 = vmatprep.mubr.bf16.mxu0 0
  %1789 = vmatmul.mubr.bf16.gmra.mxu0 %v1545
  %v1790 = vpop.f32.mrf.mxu0
  %v1791 = vadd.f32 0.0, %v1790
  %v1792 = vpop.f32.mrf.mxu0
  %v1793 = vpop.f32.mrf.mxu0
  %v1794 = vadd.f32 0.0, %v1793
  %v1795 = vpop.f32.mrf.mxu0
  %1796 = vmatprep.mubr.bf16.mxu0 0
  %1797 = vmatmul.mubr.bf16.gmra.mxu0 %v1546
  %v1798 = vpop.f32.mrf.mxu0
  %v1799 = vadd.f32 0.0, %v1798
  %v1800 = vpop.f32.mrf.mxu0
  %v1801 = vpop.f32.mrf.mxu0
  %v1802 = vpop.f32.mrf.mxu0
  %1803 = vdwg.mxu0
  %v1804 = vmax.f32 %v320, %v749
  %v1805 = vmax.f32 %v323, %v752
  %v1806 = vmax.f32 %v328, %v757
  %v1807 = vmax.f32 %v331, %v760
  %v1808 = vmax.f32 %v336, %v765
  %v1809 = vmax.f32 %v339, %v768
  %v1810 = vmax.f32 %v344, %v773
  %v1811 = vmax.f32 %v347, %v776
  %v1812 = vmax.f32 %v352, %v781
  %v1813 = vmax.f32 %v355, %v784
  %v1814 = vmax.f32 %v360, %v789
  %v1815 = vmax.f32 %v363, %v792
  %v1816 = vmax.f32 %v368, %v797
  %v1817 = vmax.f32 %v371, %v800
  %v1818 = vmax.f32 %v376, %v805
  %v1819 = vmax.f32 %v379, %v808
  %v1820 = vmax.f32 %v384, %v813
  %v1821 = vmax.f32 %v387, %v816
  %v1822 = vmax.f32 %v392, %v821
  %v1823 = vmax.f32 %v395, %v824
  %v1824 = vmax.f32 %v400, %v829
  %v1825 = vmax.f32 %v403, %v832
  %v1826 = vmax.f32 %v408, %v837
  %v1827 = vmax.f32 %v411, %v840
  %v1828 = vmax.f32 %v416, %v845
  %v1829 = vmax.f32 %v419, %v848
  %v1830 = vmax.f32 %v424, %v853
  %v1831 = vmax.f32 %v427, %v856
  %v1832 = vmax.f32 %v432, %v861
  %v1833 = vmax.f32 %v435, %v864
  %v1834 = vmax.f32 %v440, %v869
  %v1835 = vmax.f32 %v443, %v872
  %v1836 = vmax.f32 %v448, %v877
  %v1837 = vmax.f32 %v451, %v880
  %v1838 = vmax.f32 %v456, %v885
  %v1839 = vmax.f32 %v459, %v888
  %v1840 = vmax.f32 %v464, %v893
  %v1841 = vmax.f32 %v467, %v896
  %v1842 = vmax.f32 %v472, %v901
  %v1843 = vmax.f32 %v475, %v904
  %v1844 = vmax.f32 %v480, %v909
  %v1845 = vmax.f32 %v483, %v912
  %v1846 = vmax.f32 %v488, %v917
  %v1847 = vmax.f32 %v491, %v920
  %v1848 = vmax.f32 %v496, %v925
  %v1849 = vmax.f32 %v499, %v928
  %v1850 = vmax.f32 %v504, %v933
  %v1851 = vmax.f32 %v507, %v936
  %v1852 = vmax.f32 %v512, %v941
  %v1853 = vmax.f32 %v1178, %v1607
  %v1854 = vmax.f32 %v1181, %v1610
  %v1855 = vmax.f32 %v1186, %v1615
  %v1856 = vmax.f32 %v1189, %v1618
  %v1857 = vmax.f32 %v1194, %v1623
  %v1858 = vmax.f32 %v1197, %v1626
  %v1859 = vmax.f32 %v1202, %v1631
  %v1860 = vmax.f32 %v1205, %v1634
  %v1861 = vmax.f32 %v1210, %v1639
  %v1862 = vmax.f32 %v1213, %v1642
  %v1863 = vmax.f32 %v1218, %v1647
  %v1864 = vmax.f32 %v1221, %v1650
  %v1865 = vmax.f32 %v1226, %v1655
  %v1866 = vmax.f32 %v1229, %v1658
  %v1867 = vmax.f32 %v1234, %v1663
  %v1868 = vmax.f32 %v1237, %v1666
  %v1869 = vmax.f32 %v1242, %v1671
  %v1870 = vmax.f32 %v1245, %v1674
  %v1871 = vmax.f32 %v1250, %v1679
  %v1872 = vmax.f32 %v1253, %v1682
  %v1873 = vmax.f32 %v1258, %v1687
  %v1874 = vmax.f32 %v1261, %v1690
  %v1875 = vmax.f32 %v1266, %v1695
  %v1876 = vmax.f32 %v1269, %v1698
  %v1877 = vmax.f32 %v1274, %v1703
  %v1878 = vmax.f32 %v1277, %v1706
  %v1879 = vmax.f32 %v1282, %v1711
  %v1880 = vmax.f32 %v1285, %v1714
  %v1881 = vmax.f32 %v1290, %v1719
  %v1882 = vmax.f32 %v1293, %v1722
  %v1883 = vmax.f32 %v1298, %v1727
  %v1884 = vmax.f32 %v1301, %v1730
  %v1885 = vmax.f32 %v1306, %v1735
  %v1886 = vmax.f32 %v1309, %v1738
  %v1887 = vmax.f32 %v1314, %v1743
  %v1888 = vmax.f32 %v1317, %v1746
  %v1889 = vmax.f32 %v1322, %v1751
  %v1890 = vmax.f32 %v1325, %v1754
  %v1891 = vmax.f32 %v1330, %v1759
  %v1892 = vmax.f32 %v1333, %v1762
  %v1893 = vmax.f32 %v1338, %v1767
  %v1894 = vmax.f32 %v1341, %v1770
  %v1895 = vmax.f32 %v1346, %v1775
  %v1896 = vmax.f32 %v1349, %v1778
  %v1897 = vmax.f32 %v1354, %v1783
  %v1898 = vmax.f32 %v1357, %v1786
  %v1899 = vmax.f32 %v1362, %v1791
  %v1900 = vmax.f32 %v1365, %v1794
  %v1901 = vmax.f32 %v1370, %v1799
  %v1902 = vmax.f32 %v1804, %v1853
  %v1903 = vmax.f32 %v1805, %v1854
  %v1904 = vmax.f32 %v1806, %v1855
  %v1905 = vmax.f32 %v1807, %v1856
  %v1906 = vmax.f32 %v1808, %v1857
  %v1907 = vmax.f32 %v1809, %v1858
  %v1908 = vmax.f32 %v1810, %v1859
  %v1909 = vmax.f32 %v1811, %v1860
  %v1910 = vmax.f32 %v1812, %v1861
  %v1911 = vmax.f32 %v1813, %v1862
  %v1912 = vmax.f32 %v1814, %v1863
  %v1913 = vmax.f32 %v1815, %v1864
  %v1914 = vmax.f32 %v1816, %v1865
  %v1915 = vmax.f32 %v1817, %v1866
  %v1916 = vmax.f32 %v1818, %v1867
  %v1917 = vmax.f32 %v1819, %v1868
  %v1918 = vmax.f32 %v1820, %v1869
  %v1919 = vmax.f32 %v1821, %v1870
  %v1920 = vmax.f32 %v1822, %v1871
  %v1921 = vmax.f32 %v1823, %v1872
  %v1922 = vmax.f32 %v1824, %v1873
  %v1923 = vmax.f32 %v1825, %v1874
  %v1924 = vmax.f32 %v1826, %v1875
  %v1925 = vmax.f32 %v1827, %v1876
  %v1926 = vmax.f32 %v1828, %v1877
  %v1927 = vmax.f32 %v1829, %v1878
  %v1928 = vmax.f32 %v1830, %v1879
  %v1929 = vmax.f32 %v1831, %v1880
  %v1930 = vmax.f32 %v1832, %v1881
  %v1931 = vmax.f32 %v1833, %v1882
  %v1932 = vmax.f32 %v1834, %v1883
  %v1933 = vmax.f32 %v1835, %v1884
  %v1934 = vmax.f32 %v1836, %v1885
  %v1935 = vmax.f32 %v1837, %v1886
  %v1936 = vmax.f32 %v1838, %v1887
  %v1937 = vmax.f32 %v1839, %v1888
  %v1938 = vmax.f32 %v1840, %v1889
  %v1939 = vmax.f32 %v1841, %v1890
  %v1940 = vmax.f32 %v1842, %v1891
  %v1941 = vmax.f32 %v1843, %v1892
  %v1942 = vmax.f32 %v1844, %v1893
  %v1943 = vmax.f32 %v1845, %v1894
  %v1944 = vmax.f32 %v1846, %v1895
  %v1945 = vmax.f32 %v1847, %v1896
  %v1946 = vmax.f32 %v1848, %v1897
  %v1947 = vmax.f32 %v1849, %v1898
  %v1948 = vmax.f32 %v1850, %v1899
  %v1949 = vmax.f32 %v1851, %v1900
  %v1950 = vmax.f32 %v1852, %v1901
  %v1951 = vld [vmem:[%s5] sm:$0x1]
  %v1953 = vlaneseq
  %v1954 = vshrl.u32 %v1953, 7
  %v1955 = vsub.s32 0, %v1954
  %v1956 = vrot.slane %v1951, %v1955
  %v1958 = vadd.f32 %v1902, %v1956
  %v1959 = vadd.f32 %v1903, %v1956
  %v1960 = vadd.f32 %v1904, %v1956
  %v1961 = vadd.f32 %v1905, %v1956
  %v1962 = vadd.f32 %v1906, %v1956
  %v1963 = vadd.f32 %v1907, %v1956
  %v1964 = vadd.f32 %v1908, %v1956
  %v1965 = vadd.f32 %v1909, %v1956
  %v1966 = vadd.f32 %v1910, %v1956
  %v1967 = vadd.f32 %v1911, %v1956
  %v1968 = vadd.f32 %v1912, %v1956
  %v1969 = vadd.f32 %v1913, %v1956
  %v1970 = vadd.f32 %v1914, %v1956
  %v1971 = vadd.f32 %v1915, %v1956
  %v1972 = vadd.f32 %v1916, %v1956
  %v1973 = vadd.f32 %v1917, %v1956
  %v1974 = vadd.f32 %v1918, %v1956
  %v1975 = vadd.f32 %v1919, %v1956
  %v1976 = vadd.f32 %v1920, %v1956
  %v1977 = vadd.f32 %v1921, %v1956
  %v1978 = vadd.f32 %v1922, %v1956
  %v1979 = vadd.f32 %v1923, %v1956
  %v1980 = vadd.f32 %v1924, %v1956
  %v1981 = vadd.f32 %v1925, %v1956
  %v1982 = vadd.f32 %v1926, %v1956
  %v1983 = vadd.f32 %v1927, %v1956
  %v1984 = vadd.f32 %v1928, %v1956
  %v1985 = vadd.f32 %v1929, %v1956
  %v1986 = vadd.f32 %v1930, %v1956
  %v1987 = vadd.f32 %v1931, %v1956
  %v1988 = vadd.f32 %v1932, %v1956
  %v1989 = vadd.f32 %v1933, %v1956
  %v1990 = vadd.f32 %v1934, %v1956
  %v1991 = vadd.f32 %v1935, %v1956
  %v1992 = vadd.f32 %v1936, %v1956
  %v1993 = vadd.f32 %v1937, %v1956
  %v1994 = vadd.f32 %v1938, %v1956
  %v1995 = vadd.f32 %v1939, %v1956
  %v1996 = vadd.f32 %v1940, %v1956
  %v1997 = vadd.f32 %v1941, %v1956
  %v1998 = vadd.f32 %v1942, %v1956
  %v1999 = vadd.f32 %v1943, %v1956
  %v2000 = vadd.f32 %v1944, %v1956
  %v2001 = vadd.f32 %v1945, %v1956
  %v2002 = vadd.f32 %v1946, %v1956
  %v2003 = vadd.f32 %v1947, %v1956
  %v2004 = vadd.f32 %v1948, %v1956
  %v2005 = vadd.f32 %v1949, %v1956
  %v2006 = vadd.f32 %v1950, %v1956
  %v2007 = vmax.f32 %v1958, 0.0
  %v2008 = vmax.f32 %v1959, 0.0
  %v2009 = vmax.f32 %v1960, 0.0
  %v2010 = vmax.f32 %v1961, 0.0
  %v2011 = vmax.f32 %v1962, 0.0
  %v2012 = vmax.f32 %v1963, 0.0
  %v2013 = vmax.f32 %v1964, 0.0
  %v2014 = vmax.f32 %v1965, 0.0
  %v2015 = vmax.f32 %v1966, 0.0
  %v2016 = vmax.f32 %v1967, 0.0
  %v2017 = vmax.f32 %v1968, 0.0
  %v2018 = vmax.f32 %v1969, 0.0
  %v2019 = vmax.f32 %v1970, 0.0
  %v2020 = vmax.f32 %v1971, 0.0
  %v2021 = vmax.f32 %v1972, 0.0
  %v2022 = vmax.f32 %v1973, 0.0
  %v2023 = vmax.f32 %v1974, 0.0
  %v2024 = vmax.f32 %v1975, 0.0
  %v2025 = vmax.f32 %v1976, 0.0
  %v2026 = vmax.f32 %v1977, 0.0
  %v2027 = vmax.f32 %v1978, 0.0
  %v2028 = vmax.f32 %v1979, 0.0
  %v2029 = vmax.f32 %v1980, 0.0
  %v2030 = vmax.f32 %v1981, 0.0
  %v2031 = vmax.f32 %v1982, 0.0
  %v2032 = vmax.f32 %v1983, 0.0
  %v2033 = vmax.f32 %v1984, 0.0
  %v2034 = vmax.f32 %v1985, 0.0
  %v2035 = vmax.f32 %v1986, 0.0
  %v2036 = vmax.f32 %v1987, 0.0
  %v2037 = vmax.f32 %v1988, 0.0
  %v2038 = vmax.f32 %v1989, 0.0
  %v2039 = vmax.f32 %v1990, 0.0
  %v2040 = vmax.f32 %v1991, 0.0
  %v2041 = vmax.f32 %v1992, 0.0
  %v2042 = vmax.f32 %v1993, 0.0
  %v2043 = vmax.f32 %v1994, 0.0
  %v2044 = vmax.f32 %v1995, 0.0
  %v2045 = vmax.f32 %v1996, 0.0
  %v2046 = vmax.f32 %v1997, 0.0
  %v2047 = vmax.f32 %v1998, 0.0
  %v2048 = vmax.f32 %v1999, 0.0
  %v2049 = vmax.f32 %v2000, 0.0
  %v2050 = vmax.f32 %v2001, 0.0
  %v2051 = vmax.f32 %v2002, 0.0
  %v2052 = vmax.f32 %v2003, 0.0
  %v2053 = vmax.f32 %v2004, 0.0
  %v2054 = vmax.f32 %v2005, 0.0
  %v2055 = vmax.f32 %v2006, 0.0
  %v2056 = vpack.c.bf16 %v2008, %v2007
  %v2057 = vpack.c.bf16 %v2010, %v2009
  %v2058 = vpack.c.bf16 %v2012, %v2011
  %v2059 = vpack.c.bf16 %v2014, %v2013
  %v2060 = vpack.c.bf16 %v2016, %v2015
  %v2061 = vpack.c.bf16 %v2018, %v2017
  %v2062 = vpack.c.bf16 %v2020, %v2019
  %v2063 = vpack.c.bf16 %v2022, %v2021
  %v2064 = vpack.c.bf16 %v2024, %v2023
  %v2065 = vpack.c.bf16 %v2026, %v2025
  %v2066 = vpack.c.bf16 %v2028, %v2027
  %v2067 = vpack.c.bf16 %v2030, %v2029
  %v2068 = vpack.c.bf16 %v2032, %v2031
  %v2069 = vpack.c.bf16 %v2034, %v2033
  %v2070 = vpack.c.bf16 %v2036, %v2035
  %v2071 = vpack.c.bf16 %v2038, %v2037
  %v2072 = vpack.c.bf16 %v2040, %v2039
  %v2073 = vpack.c.bf16 %v2042, %v2041
  %v2074 = vpack.c.bf16 %v2044, %v2043
  %v2075 = vpack.c.bf16 %v2046, %v2045
  %v2076 = vpack.c.bf16 %v2048, %v2047
  %v2077 = vpack.c.bf16 %v2050, %v2049
  %v2078 = vpack.c.bf16 %v2052, %v2051
  %v2079 = vpack.c.bf16 %v2054, %v2053
  %v2080 = vpack.c.bf16 %v2055, %v2055
  %v2106 = vunpack.c.l.b16 %v2056
  %v2107 = vunpack.c.h.b16 %v2056
  %v2108 = vunpack.c.l.b16 %v2057
  %v2109 = vunpack.c.h.b16 %v2057
  %v2110 = vunpack.c.l.b16 %v2058
  %v2111 = vunpack.c.h.b16 %v2058
  %v2112 = vunpack.c.l.b16 %v2059
  %v2113 = vunpack.c.h.b16 %v2059
  %v2114 = vunpack.c.l.b16 %v2060
  %v2115 = vunpack.c.h.b16 %v2060
  %v2116 = vunpack.c.l.b16 %v2061
  %v2117 = vunpack.c.h.b16 %v2061
  %v2118 = vunpack.c.l.b16 %v2062
  %v2119 = vunpack.c.h.b16 %v2062
  %v2120 = vunpack.c.l.b16 %v2063
  %v2121 = vunpack.c.h.b16 %v2063
  %v2122 = vunpack.c.l.b16 %v2064
  %v2123 = vunpack.c.h.b16 %v2064
  %v2124 = vunpack.c.l.b16 %v2065
  %v2125 = vunpack.c.h.b16 %v2065
  %v2126 = vunpack.c.l.b16 %v2066
  %v2127 = vunpack.c.h.b16 %v2066
  %v2128 = vunpack.c.l.b16 %v2067
  %v2129 = vunpack.c.h.b16 %v2067
  %v2130 = vunpack.c.l.b16 %v2068
  %v2131 = vunpack.c.h.b16 %v2068
  %v2132 = vunpack.c.l.b16 %v2069
  %v2133 = vunpack.c.h.b16 %v2069
  %v2134 = vunpack.c.l.b16 %v2070
  %v2135 = vunpack.c.h.b16 %v2070
  %v2136 = vunpack.c.l.b16 %v2071
  %v2137 = vunpack.c.h.b16 %v2071
  %v2138 = vunpack.c.l.b16 %v2072
  %v2139 = vunpack.c.h.b16 %v2072
  %v2140 = vunpack.c.l.b16 %v2073
  %v2141 = vunpack.c.h.b16 %v2073
  %v2142 = vunpack.c.l.b16 %v2074
  %v2143 = vunpack.c.h.b16 %v2074
  %v2144 = vunpack.c.l.b16 %v2075
  %v2145 = vunpack.c.h.b16 %v2075
  %v2146 = vunpack.c.l.b16 %v2076
  %v2147 = vunpack.c.h.b16 %v2076
  %v2148 = vunpack.c.l.b16 %v2077
  %v2149 = vunpack.c.h.b16 %v2077
  %v2150 = vunpack.c.l.b16 %v2078
  %v2151 = vunpack.c.h.b16 %v2078
  %v2152 = vunpack.c.l.b16 %v2079
  %v2153 = vunpack.c.h.b16 %v2079
  %v2154 = vunpack.c.l.b16 %v2080
  %v2155 = vpack.c.b16 %v2106, %v2106
  %v2156 = vpack.c.b16 %v2107, %v2107
  %v2157 = vpack.c.b16 %v2108, %v2108
  %v2158 = vpack.c.b16 %v2109, %v2109
  %v2159 = vpack.c.b16 %v2110, %v2110
  %v2160 = vpack.c.b16 %v2111, %v2111
  %v2161 = vpack.c.b16 %v2112, %v2112
  %v2162 = vpack.c.b16 %v2113, %v2113
  %v2163 = vpack.c.b16 %v2114, %v2114
  %v2164 = vpack.c.b16 %v2115, %v2115
  %v2165 = vpack.c.b16 %v2116, %v2116
  %v2166 = vpack.c.b16 %v2117, %v2117
  %v2167 = vpack.c.b16 %v2118, %v2118
  %v2168 = vpack.c.b16 %v2119, %v2119
  %v2169 = vpack.c.b16 %v2120, %v2120
  %v2170 = vpack.c.b16 %v2121, %v2121
  %v2171 = vpack.c.b16 %v2122, %v2122
  %v2172 = vpack.c.b16 %v2123, %v2123
  %v2173 = vpack.c.b16 %v2124, %v2124
  %v2174 = vpack.c.b16 %v2125, %v2125
  %v2175 = vpack.c.b16 %v2126, %v2126
  %v2176 = vpack.c.b16 %v2127, %v2127
  %v2177 = vpack.c.b16 %v2128, %v2128
  %v2178 = vpack.c.b16 %v2129, %v2129
  %v2179 = vpack.c.b16 %v2130, %v2130
  %v2180 = vpack.c.b16 %v2131, %v2131
  %v2181 = vpack.c.b16 %v2132, %v2132
  %v2182 = vpack.c.b16 %v2133, %v2133
  %v2183 = vpack.c.b16 %v2134, %v2134
  %v2184 = vpack.c.b16 %v2135, %v2135
  %v2185 = vpack.c.b16 %v2136, %v2136
  %v2186 = vpack.c.b16 %v2137, %v2137
  %v2187 = vpack.c.b16 %v2138, %v2138
  %v2188 = vpack.c.b16 %v2139, %v2139
  %v2189 = vpack.c.b16 %v2140, %v2140
  %v2190 = vpack.c.b16 %v2141, %v2141
  %v2191 = vpack.c.b16 %v2142, %v2142
  %v2192 = vpack.c.b16 %v2143, %v2143
  %v2193 = vpack.c.b16 %v2144, %v2144
  %v2194 = vpack.c.b16 %v2145, %v2145
  %v2195 = vpack.c.b16 %v2146, %v2146
  %v2196 = vpack.c.b16 %v2147, %v2147
  %v2197 = vpack.c.b16 %v2148, %v2148
  %v2198 = vpack.c.b16 %v2149, %v2149
  %v2199 = vpack.c.b16 %v2150, %v2150
  %v2200 = vpack.c.b16 %v2151, %v2151
  %v2201 = vpack.c.b16 %v2152, %v2152
  %v2202 = vpack.c.b16 %v2153, %v2153
  %v2203 = vpack.c.b16 %v2154, %v2154
  %2253 = vst [vmem:[%s6] sm:$0xf] %v2155
  %2254 = vst [vmem:[%s6 + $0x4] sm:$0xf] %v2156
  %2255 = vst [vmem:[%s6 + $0x8] sm:$0xf] %v2157
  %2256 = vst [vmem:[%s6 + $0xc] sm:$0xf] %v2158
  %2257 = vst [vmem:[%s6 + $0x10] sm:$0xf] %v2159
  %2258 = vst [vmem:[%s6 + $0x14] sm:$0xf] %v2160
  %2259 = vst [vmem:[%s6 + $0x18] sm:$0xf] %v2161
  %2260 = vst [vmem:[%s6 + $0x1c] sm:$0xf] %v2162
  %2261 = vst [vmem:[%s6 + $0x20] sm:$0xf] %v2163
  %2262 = vst [vmem:[%s6 + $0x24] sm:$0xf] %v2164
  %2263 = vst [vmem:[%s6 + $0x28] sm:$0xf] %v2165
  %2264 = vst [vmem:[%s6 + $0x2c] sm:$0xf] %v2166
  %2265 = vst [vmem:[%s6 + $0x30] sm:$0xf] %v2167
  %2266 = vst [vmem:[%s6 + $0x34] sm:$0xf] %v2168
  %2267 = vst [vmem:[%s6 + $0x38] sm:$0xf] %v2169
  %2268 = vst [vmem:[%s6 + $0x3c] sm:$0xf] %v2170
  %2269 = vst [vmem:[%s6 + $0x40] sm:$0xf] %v2171
  %2270 = vst [vmem:[%s6 + $0x44] sm:$0xf] %v2172
  %2271 = vst [vmem:[%s6 + $0x48] sm:$0xf] %v2173
  %2272 = vst [vmem:[%s6 + $0x4c] sm:$0xf] %v2174
  %2273 = vst [vmem:[%s6 + $0x50] sm:$0xf] %v2175
  %2274 = vst [vmem:[%s6 + $0x54] sm:$0xf] %v2176
  %2275 = vst [vmem:[%s6 + $0x58] sm:$0xf] %v2177
  %2276 = vst [vmem:[%s6 + $0x5c] sm:$0xf] %v2178
  %2277 = vst [vmem:[%s6 + $0x60] sm:$0xf] %v2179
  %2278 = vst [vmem:[%s6 + $0x64] sm:$0xf] %v2180
  %2279 = vst [vmem:[%s6 + $0x68] sm:$0xf] %v2181
  %2280 = vst [vmem:[%s6 + $0x6c] sm:$0xf] %v2182
  %2281 = vst [vmem:[%s6 + $0x70] sm:$0xf] %v2183
  %2282 = vst [vmem:[%s6 + $0x74] sm:$0xf] %v2184
  %2283 = vst [vmem:[%s6 + $0x78] sm:$0xf] %v2185
  %2284 = vst [vmem:[%s6 + $0x7c] sm:$0xf] %v2186
  %2285 = vst [vmem:[%s6 + $0x80] sm:$0xf] %v2187
  %2286 = vst [vmem:[%s6 + $0x84] sm:$0xf] %v2188
  %2287 = vst [vmem:[%s6 + $0x88] sm:$0xf] %v2189
  %2288 = vst [vmem:[%s6 + $0x8c] sm:$0xf] %v2190
  %2289 = vst [vmem:[%s6 + $0x90] sm:$0xf] %v2191
  %2290 = vst [vmem:[%s6 + $0x94] sm:$0xf] %v2192
  %2291 = vst [vmem:[%s6 + $0x98] sm:$0xf] %v2193
  %2292 = vst [vmem:[%s6 + $0x9c] sm:$0xf] %v2194
  %2293 = vst [vmem:[%s6 + $0xa0] sm:$0xf] %v2195
  %2294 = vst [vmem:[%s6 + $0xa4] sm:$0xf] %v2196
  %2295 = vst [vmem:[%s6 + $0xa8] sm:$0xf] %v2197
  %2296 = vst [vmem:[%s6 + $0xac] sm:$0xf] %v2198
  %2297 = vst [vmem:[%s6 + $0xb0] sm:$0xf] %v2199
  %2298 = vst [vmem:[%s6 + $0xb4] sm:$0xf] %v2200
  %2299 = vst [vmem:[%s6 + $0xb8] sm:$0xf] %v2201
  %2300 = vst [vmem:[%s6 + $0xbc] sm:$0xf] %v2202
  %2301 = vst [vmem:[%s6 + $0xc0] sm:$0xf] %v2203
  // Predicated region
  $region26: #{net_forward.3} parent=0 // pred_check
    _
  $region27: #{net_forward.3} parent=0 // pred_check_branch
    %2303 = sbr.rel (0) target = $region29
  $region28: #{net_forward.3} parent=0 // pred_region
    _
  $region29: #{net_forward.3} parent=0 // pred_fallthru
    _
  // Predicated region
  $region30: #{net_forward.3} parent=0 // pred_check
    _
  $region31: #{net_forward.3} parent=0 // pred_check_branch
    %2305 = sbr.rel (0) target = $region33
  $region32: #{net_forward.3} parent=0 // pred_region
    _
  $region33: #{net_forward.3} parent=0 // pred_fallthru
    _

// kernel: net_forward.4
$region0: #{net_forward.4}
  #allocation0 [shape = 'u32[]', space=smem, size = 0x4, offset = 0x4, fixed_abs, tag = 'smem constant byte address 0x4 - core index']
  #allocation1 [shape = 'u32[144,128]{1,0:T(1,128)}', space=vmem, size = 0x12000, scoped, tag = 'internal scratch']
  %s0 = inlined_call_operand.vmem [shape: bf16[50,256], index: 0, kind: input, shape index: {}]
  %s1 = inlined_call_operand.vmem [shape: bf16[50,256], index: 1, kind: input, shape index: {}]
  %s2 = inlined_call_operand.vmem [shape: bf16[50,256], index: 2, kind: input, shape index: {}]
  %s3 = inlined_call_operand.vmem [shape: bf16[50,256], index: 3, kind: input, shape index: {}]
  %s4 = inlined_call_operand.vmem [shape: bf16[256,128], index: 4, kind: input, shape index: {}]
  %s5 = inlined_call_operand.vmem [shape: f32[1,128], index: 5, kind: input, shape index: {}]
  %s6 = inlined_call_operand.vmem [shape: bf16[50,128], index: 6, kind: output, shape index: {}]
  %s7 = sld [smem:[#allocation0]]
  $region34: #{net_forward.4} parent=0
    _
  %s9 = ssub.s32 1, %s7
  %s10 = scalar_select 0, %s9, %s7
  // Predicated region
  $region2: #{net_forward.4} parent=0 // pred_check
    _
  $region3: #{net_forward.4} parent=0 // pred_check_branch
    %12 = sbr.rel (0) target = $region5
  $region4: #{net_forward.4} parent=0 // pred_region
    _
  $region5: #{net_forward.4} parent=0 // pred_fallthru
    _
  // Predicated region
  $region6: #{net_forward.4} parent=0 // pred_check
    _
  $region7: #{net_forward.4} parent=0 // pred_check_branch
    %14 = sbr.rel (0) target = $region9
  $region8: #{net_forward.4} parent=0 // pred_region
    _
  $region9: #{net_forward.4} parent=0 // pred_fallthru
    _
  // Predicated region
  $region10: #{net_forward.4} parent=0 // pred_check
    _
  $region11: #{net_forward.4} parent=0 // pred_check_branch
    %16 = sbr.rel (0) target = $region13
  $region12: #{net_forward.4} parent=0 // pred_region
    _
  $region13: #{net_forward.4} parent=0 // pred_fallthru
    _
  // Predicated region
  $region14: #{net_forward.4} parent=0 // pred_check
    _
  $region15: #{net_forward.4} parent=0 // pred_check_branch
    %18 = sbr.rel (0) target = $region17
  $region16: #{net_forward.4} parent=0 // pred_region
    _
  $region17: #{net_forward.4} parent=0 // pred_fallthru
    _
  // Predicated region
  $region18: #{net_forward.4} parent=0 // pred_check
    _
  $region19: #{net_forward.4} parent=0 // pred_check_branch
    %20 = sbr.rel (0) target = $region21
  $region20: #{net_forward.4} parent=0 // pred_region
    _
  $region21: #{net_forward.4} parent=0 // pred_fallthru
    _
  // Predicated region
  $region22: #{net_forward.4} parent=0 // pred_check
    _
  $region23: #{net_forward.4} parent=0 // pred_check_branch
    %22 = sbr.rel (0) target = $region25
  $region24: #{net_forward.4} parent=0 // pred_region
    _
  $region25: #{net_forward.4} parent=0 // pred_fallthru
    _
  %v24 = vld [vmem:[%s4] sm:$0xf]
  %v25 = vld [vmem:[%s4 + $0x4] sm:$0xf]
  %v26 = vld [vmem:[%s4 + $0x8] sm:$0xf]
  %v27 = vld [vmem:[%s4 + $0xc] sm:$0xf]
  %v28 = vld [vmem:[%s4 + $0x10] sm:$0xf]
  %v29 = vld [vmem:[%s4 + $0x14] sm:$0xf]
  %v30 = vld [vmem:[%s4 + $0x18] sm:$0xf]
  %v31 = vld [vmem:[%s4 + $0x1c] sm:$0xf]
  %v32 = vld [vmem:[%s4 + $0x20] sm:$0xf]
  %v33 = vld [vmem:[%s4 + $0x24] sm:$0xf]
  %v34 = vld [vmem:[%s4 + $0x28] sm:$0xf]
  %v35 = vld [vmem:[%s4 + $0x2c] sm:$0xf]
  %v36 = vld [vmem:[%s4 + $0x30] sm:$0xf]
  %v37 = vld [vmem:[%s4 + $0x34] sm:$0xf]
  %v38 = vld [vmem:[%s4 + $0x38] sm:$0xf]
  %v39 = vld [vmem:[%s4 + $0x3c] sm:$0xf]
  %v40 = vld [vmem:[%s4 + $0x40] sm:$0xf]
  %v41 = vld [vmem:[%s4 + $0x44] sm:$0xf]
  %v42 = vld [vmem:[%s4 + $0x48] sm:$0xf]
  %v43 = vld [vmem:[%s4 + $0x4c] sm:$0xf]
  %v44 = vld [vmem:[%s4 + $0x50] sm:$0xf]
  %v45 = vld [vmem:[%s4 + $0x54] sm:$0xf]
  %v46 = vld [vmem:[%s4 + $0x58] sm:$0xf]
  %v47 = vld [vmem:[%s4 + $0x5c] sm:$0xf]
  %v48 = vld [vmem:[%s4 + $0x60] sm:$0xf]
  %v49 = vld [vmem:[%s4 + $0x64] sm:$0xf]
  %v50 = vld [vmem:[%s4 + $0x68] sm:$0xf]
  %v51 = vld [vmem:[%s4 + $0x6c] sm:$0xf]
  %v52 = vld [vmem:[%s4 + $0x70] sm:$0xf]
  %v53 = vld [vmem:[%s4 + $0x74] sm:$0xf]
  %v54 = vld [vmem:[%s4 + $0x78] sm:$0xf]
  %v55 = vld [vmem:[%s4 + $0x7c] sm:$0xf]
  %v56 = vld [vmem:[%s0] sm:$0xff]
  %v57 = vld [vmem:[%s0 + $0x8] sm:$0xff]
  %v58 = vld [vmem:[%s0 + $0x10] sm:$0xff]
  %v59 = vld [vmem:[%s0 + $0x18] sm:$0xff]
  %v60 = vld [vmem:[%s0 + $0x20] sm:$0xff]
  %v61 = vld [vmem:[%s0 + $0x28] sm:$0xff]
  %v62 = vld [vmem:[%s0 + $0x30] sm:$0x11]
  %v70 = vunpack.c.l.b16 %v56
  %v71 = vunpack.c.h.b16 %v56
  %v72 = vunpack.c.l.b16 %v57
  %v73 = vunpack.c.h.b16 %v57
  %v74 = vunpack.c.l.b16 %v58
  %v75 = vunpack.c.h.b16 %v58
  %v76 = vunpack.c.l.b16 %v59
  %v77 = vunpack.c.h.b16 %v59
  %v78 = vunpack.c.l.b16 %v60
  %v79 = vunpack.c.h.b16 %v60
  %v80 = vunpack.c.l.b16 %v61
  %v81 = vunpack.c.h.b16 %v61
  %v82 = vunpack.c.l.b16 %v62
  %v83 = vunpack.c.h.b16 %v62
  %v84 = vpack.c.b16 %v72, %v70
  %v85 = vpack.c.b16 %v73, %v71
  %v86 = vpack.c.b16 %v76, %v74
  %v87 = vpack.c.b16 %v77, %v75
  %v88 = vpack.c.b16 %v80, %v78
  %v89 = vpack.c.b16 %v81, %v79
  %v90 = vpack.c.b16 %v82, %v82
  %v91 = vpack.c.b16 %v83, %v83
  %v132 = vunpack.c.l.b16 %v24
  %v133 = vunpack.c.l.b16 %v25
  %v134 = vunpack.c.l.b16 %v26
  %v135 = vunpack.c.l.b16 %v27
  %v136 = vunpack.c.l.b16 %v28
  %v137 = vunpack.c.l.b16 %v29
  %v138 = vunpack.c.l.b16 %v30
  %v139 = vunpack.c.l.b16 %v31
  %v140 = vunpack.c.l.b16 %v32
  %v141 = vunpack.c.l.b16 %v33
  %v142 = vunpack.c.l.b16 %v34
  %v143 = vunpack.c.l.b16 %v35
  %v144 = vunpack.c.l.b16 %v36
  %v145 = vunpack.c.l.b16 %v37
  %v146 = vunpack.c.l.b16 %v38
  %v147 = vunpack.c.l.b16 %v39
  %v148 = vunpack.c.l.b16 %v40
  %v149 = vunpack.c.l.b16 %v41
  %v150 = vunpack.c.l.b16 %v42
  %v151 = vunpack.c.l.b16 %v43
  %v152 = vunpack.c.l.b16 %v44
  %v153 = vunpack.c.l.b16 %v45
  %v154 = vunpack.c.l.b16 %v46
  %v155 = vunpack.c.l.b16 %v47
  %v156 = vunpack.c.l.b16 %v48
  %v157 = vunpack.c.l.b16 %v49
  %v158 = vunpack.c.l.b16 %v50
  %v159 = vunpack.c.l.b16 %v51
  %v160 = vunpack.c.l.b16 %v52
  %v161 = vunpack.c.l.b16 %v53
  %v162 = vunpack.c.l.b16 %v54
  %v163 = vunpack.c.l.b16 %v55
  %v164 = vpack.c.b16 %v133, %v132
  %v165 = vpack.c.b16 %v135, %v134
  %v166 = vpack.c.b16 %v137, %v136
  %v167 = vpack.c.b16 %v139, %v138
  %v168 = vpack.c.b16 %v141, %v140
  %v169 = vpack.c.b16 %v143, %v142
  %v170 = vpack.c.b16 %v145, %v144
  %v171 = vpack.c.b16 %v147, %v146
  %v172 = vpack.c.b16 %v149, %v148
  %v173 = vpack.c.b16 %v151, %v150
  %v174 = vpack.c.b16 %v153, %v152
  %v175 = vpack.c.b16 %v155, %v154
  %v176 = vpack.c.b16 %v157, %v156
  %v177 = vpack.c.b16 %v159, %v158
  %v178 = vpack.c.b16 %v161, %v160
  %v179 = vpack.c.b16 %v163, %v162
  %196 = vmatprep.subr.bf16.mxu0 0
  %197 = vmatpush1.bf16.msra.mxu0 %v171
  %198 = vmatprep.subr.bf16.mxu0 0
  %199 = vmatpush1.bf16.msra.mxu0 %v170
  %200 = vmatprep.subr.bf16.mxu0 0
  %201 = vmatpush1.bf16.msra.mxu0 %v169
  %202 = vmatprep.subr.bf16.mxu0 0
  %203 = vmatpush1.bf16.msra.mxu0 %v168
  %204 = vmatprep.subr.bf16.mxu0 0
  %205 = vmatpush1.bf16.msra.mxu0 %v167
  %206 = vmatprep.subr.bf16.mxu0 0
  %207 = vmatpush1.bf16.msra.mxu0 %v166
  %208 = vmatprep.subr.bf16.mxu0 0
  %209 = vmatpush1.bf16.msra.mxu0 %v165
  %210 = vmatprep.subr.bf16.mxu0 0
  %211 = vmatpush1.bf16.msra.mxu0 %v164
  %212 = vmatprep.subr.bf16.mxu0 0
  %213 = vmatpush2.bf16.msra.mxu0 %v179
  %214 = vmatprep.subr.bf16.mxu0 0
  %215 = vmatpush2.bf16.msra.mxu0 %v178
  %216 = vmatprep.subr.bf16.mxu0 0
  %217 = vmatpush2.bf16.msra.mxu0 %v177
  %218 = vmatprep.subr.bf16.mxu0 0
  %219 = vmatpush2.bf16.msra.mxu0 %v176
  %220 = vmatprep.subr.bf16.mxu0 0
  %221 = vmatpush2.bf16.msra.mxu0 %v175
  %222 = vmatprep.subr.bf16.mxu0 0
  %223 = vmatpush2.bf16.msra.mxu0 %v174
  %224 = vmatprep.subr.bf16.mxu0 0
  %225 = vmatpush2.bf16.msra.mxu0 %v173
  %226 = vmatprep.subr.bf16.mxu0 0
  %227 = vmatpush2.bf16.msra.mxu0 %v172
  %228 = vmatprep.mubr.bf16.mxu0 %v85
  %229 = vmatmul.mubr.bf16.gmra.mxu0 %v84
  %v230 = vpop.f32.mrf.mxu0
  %v231 = vadd.f32 0.0, %v230
  %v232 = vpop.f32.mrf.mxu0
  %v233 = vpop.f32.mrf.mxu0
  %v234 = vadd.f32 0.0, %v233
  %v235 = vpop.f32.mrf.mxu0
  %236 = vmatprep.mubr.bf16.mxu0 %v87
  %237 = vmatmul.mubr.bf16.gmra.mxu0 %v86
  %v238 = vpop.f32.mrf.mxu0
  %v239 = vadd.f32 0.0, %v238
  %v240 = vpop.f32.mrf.mxu0
  %v241 = vpop.f32.mrf.mxu0
  %v242 = vadd.f32 0.0, %v241
  %v243 = vpop.f32.mrf.mxu0
  %244 = vmatprep.mubr.bf16.mxu0 %v89
  %245 = vmatmul.mubr.bf16.gmra.mxu0 %v88
  %v246 = vpop.f32.mrf.mxu0
  %v247 = vadd.f32 0.0, %v246
  %v248 = vpop.f32.mrf.mxu0
  %v249 = vpop.f32.mrf.mxu0
  %v250 = vadd.f32 0.0, %v249
  %v251 = vpop.f32.mrf.mxu0
  %252 = vmatprep.mubr.bf16.mxu0 %v91
  %253 = vmatmul.mubr.bf16.gmra.mxu0 %v90
  %v254 = vpop.f32.mrf.mxu0
  %v255 = vadd.f32 0.0, %v254
  %v256 = vpop.f32.mrf.mxu0
  %v257 = vpop.f32.mrf.mxu0
  %v258 = vpop.f32.mrf.mxu0
  %259 = vdwg.mxu0
  %v260 = vld [vmem:[%s1] sm:$0xff]
  %v261 = vld [vmem:[%s1 + $0x8] sm:$0xff]
  %v262 = vld [vmem:[%s1 + $0x10] sm:$0xff]
  %v263 = vld [vmem:[%s1 + $0x18] sm:$0xff]
  %v264 = vld [vmem:[%s1 + $0x20] sm:$0xff]
  %v265 = vld [vmem:[%s1 + $0x28] sm:$0xff]
  %v266 = vld [vmem:[%s1 + $0x30] sm:$0x11]
  %v274 = vunpack.c.l.b16 %v260
  %v275 = vunpack.c.h.b16 %v260
  %v276 = vunpack.c.l.b16 %v261
  %v277 = vunpack.c.h.b16 %v261
  %v278 = vunpack.c.l.b16 %v262
  %v279 = vunpack.c.h.b16 %v262
  %v280 = vunpack.c.l.b16 %v263
  %v281 = vunpack.c.h.b16 %v263
  %v282 = vunpack.c.l.b16 %v264
  %v283 = vunpack.c.h.b16 %v264
  %v284 = vunpack.c.l.b16 %v265
  %v285 = vunpack.c.h.b16 %v265
  %v286 = vunpack.c.l.b16 %v266
  %v287 = vunpack.c.h.b16 %v266
  %v288 = vpack.c.b16 %v276, %v274
  %v289 = vpack.c.b16 %v277, %v275
  %v290 = vpack.c.b16 %v280, %v278
  %v291 = vpack.c.b16 %v281, %v279
  %v292 = vpack.c.b16 %v284, %v282
  %v293 = vpack.c.b16 %v285, %v283
  %v294 = vpack.c.b16 %v286, %v286
  %v295 = vpack.c.b16 %v287, %v287
  %304 = vmatprep.subr.bf16.mxu0 0
  %305 = vmatpush1.bf16.msra.mxu0 %v171
  %306 = vmatprep.subr.bf16.mxu0 0
  %307 = vmatpush1.bf16.msra.mxu0 %v170
  %308 = vmatprep.subr.bf16.mxu0 0
  %309 = vmatpush1.bf16.msra.mxu0 %v169
  %310 = vmatprep.subr.bf16.mxu0 0
  %311 = vmatpush1.bf16.msra.mxu0 %v168
  %312 = vmatprep.subr.bf16.mxu0 0
  %313 = vmatpush1.bf16.msra.mxu0 %v167
  %314 = vmatprep.subr.bf16.mxu0 0
  %315 = vmatpush1.bf16.msra.mxu0 %v166
  %316 = vmatprep.subr.bf16.mxu0 0
  %317 = vmatpush1.bf16.msra.mxu0 %v165
  %318 = vmatprep.subr.bf16.mxu0 0
  %319 = vmatpush1.bf16.msra.mxu0 %v164
  %320 = vmatprep.subr.bf16.mxu0 0
  %321 = vmatpush2.bf16.msra.mxu0 %v179
  %322 = vmatprep.subr.bf16.mxu0 0
  %323 = vmatpush2.bf16.msra.mxu0 %v178
  %324 = vmatprep.subr.bf16.mxu0 0
  %325 = vmatpush2.bf16.msra.mxu0 %v177
  %326 = vmatprep.subr.bf16.mxu0 0
  %327 = vmatpush2.bf16.msra.mxu0 %v176
  %328 = vmatprep.subr.bf16.mxu0 0
  %329 = vmatpush2.bf16.msra.mxu0 %v175
  %330 = vmatprep.subr.bf16.mxu0 0
  %331 = vmatpush2.bf16.msra.mxu0 %v174
  %332 = vmatprep.subr.bf16.mxu0 0
  %333 = vmatpush2.bf16.msra.mxu0 %v173
  %334 = vmatprep.subr.bf16.mxu0 0
  %335 = vmatpush2.bf16.msra.mxu0 %v172
  %336 = vmatprep.mubr.bf16.mxu0 %v289
  %337 = vmatmul.mubr.bf16.gmra.mxu0 %v288
  %v338 = vpop.f32.mrf.mxu0
  %v339 = vadd.f32 0.0, %v338
  %v340 = vpop.f32.mrf.mxu0
  %v341 = vpop.f32.mrf.mxu0
  %v342 = vadd.f32 0.0, %v341
  %v343 = vpop.f32.mrf.mxu0
  %344 = vmatprep.mubr.bf16.mxu0 %v291
  %345 = vmatmul.mubr.bf16.gmra.mxu0 %v290
  %v346 = vpop.f32.mrf.mxu0
  %v347 = vadd.f32 0.0, %v346
  %v348 = vpop.f32.mrf.mxu0
  %v349 = vpop.f32.mrf.mxu0
  %v350 = vadd.f32 0.0, %v349
  %v351 = vpop.f32.mrf.mxu0
  %352 = vmatprep.mubr.bf16.mxu0 %v293
  %353 = vmatmul.mubr.bf16.gmra.mxu0 %v292
  %v354 = vpop.f32.mrf.mxu0
  %v355 = vadd.f32 0.0, %v354
  %v356 = vpop.f32.mrf.mxu0
  %v357 = vpop.f32.mrf.mxu0
  %v358 = vadd.f32 0.0, %v357
  %v359 = vpop.f32.mrf.mxu0
  %360 = vmatprep.mubr.bf16.mxu0 %v295
  %361 = vmatmul.mubr.bf16.gmra.mxu0 %v294
  %v362 = vpop.f32.mrf.mxu0
  %v363 = vadd.f32 0.0, %v362
  %v364 = vpop.f32.mrf.mxu0
  %v365 = vpop.f32.mrf.mxu0
  %v366 = vpop.f32.mrf.mxu0
  %367 = vdwg.mxu0
  %v368 = vld [vmem:[%s2] sm:$0xff]
  %v369 = vld [vmem:[%s2 + $0x8] sm:$0xff]
  %v370 = vld [vmem:[%s2 + $0x10] sm:$0xff]
  %v371 = vld [vmem:[%s2 + $0x18] sm:$0xff]
  %v372 = vld [vmem:[%s2 + $0x20] sm:$0xff]
  %v373 = vld [vmem:[%s2 + $0x28] sm:$0xff]
  %v374 = vld [vmem:[%s2 + $0x30] sm:$0x11]
  %v382 = vunpack.c.l.b16 %v368
  %v383 = vunpack.c.h.b16 %v368
  %v384 = vunpack.c.l.b16 %v369
  %v385 = vunpack.c.h.b16 %v369
  %v386 = vunpack.c.l.b16 %v370
  %v387 = vunpack.c.h.b16 %v370
  %v388 = vunpack.c.l.b16 %v371
  %v389 = vunpack.c.h.b16 %v371
  %v390 = vunpack.c.l.b16 %v372
  %v391 = vunpack.c.h.b16 %v372
  %v392 = vunpack.c.l.b16 %v373
  %v393 = vunpack.c.h.b16 %v373
  %v394 = vunpack.c.l.b16 %v374
  %v395 = vunpack.c.h.b16 %v374
  %v396 = vpack.c.b16 %v384, %v382
  %v397 = vpack.c.b16 %v385, %v383
  %v398 = vpack.c.b16 %v388, %v386
  %v399 = vpack.c.b16 %v389, %v387
  %v400 = vpack.c.b16 %v392, %v390
  %v401 = vpack.c.b16 %v393, %v391
  %v402 = vpack.c.b16 %v394, %v394
  %v403 = vpack.c.b16 %v395, %v395
  %412 = vmatprep.subr.bf16.mxu0 0
  %413 = vmatpush1.bf16.msra.mxu0 %v171
  %414 = vmatprep.subr.bf16.mxu0 0
  %415 = vmatpush1.bf16.msra.mxu0 %v170
  %416 = vmatprep.subr.bf16.mxu0 0
  %417 = vmatpush1.bf16.msra.mxu0 %v169
  %418 = vmatprep.subr.bf16.mxu0 0
  %419 = vmatpush1.bf16.msra.mxu0 %v168
  %420 = vmatprep.subr.bf16.mxu0 0
  %421 = vmatpush1.bf16.msra.mxu0 %v167
  %422 = vmatprep.subr.bf16.mxu0 0
  %423 = vmatpush1.bf16.msra.mxu0 %v166
  %424 = vmatprep.subr.bf16.mxu0 0
  %425 = vmatpush1.bf16.msra.mxu0 %v165
  %426 = vmatprep.subr.bf16.mxu0 0
  %427 = vmatpush1.bf16.msra.mxu0 %v164
  %428 = vmatprep.subr.bf16.mxu0 0
  %429 = vmatpush2.bf16.msra.mxu0 %v179
  %430 = vmatprep.subr.bf16.mxu0 0
  %431 = vmatpush2.bf16.msra.mxu0 %v178
  %432 = vmatprep.subr.bf16.mxu0 0
  %433 = vmatpush2.bf16.msra.mxu0 %v177
  %434 = vmatprep.subr.bf16.mxu0 0
  %435 = vmatpush2.bf16.msra.mxu0 %v176
  %436 = vmatprep.subr.bf16.mxu0 0
  %437 = vmatpush2.bf16.msra.mxu0 %v175
  %438 = vmatprep.subr.bf16.mxu0 0
  %439 = vmatpush2.bf16.msra.mxu0 %v174
  %440 = vmatprep.subr.bf16.mxu0 0
  %441 = vmatpush2.bf16.msra.mxu0 %v173
  %442 = vmatprep.subr.bf16.mxu0 0
  %443 = vmatpush2.bf16.msra.mxu0 %v172
  %444 = vmatprep.mubr.bf16.mxu0 %v397
  %445 = vmatmul.mubr.bf16.gmra.mxu0 %v396
  %v446 = vpop.f32.mrf.mxu0
  %v447 = vadd.f32 0.0, %v446
  %v448 = vpop.f32.mrf.mxu0
  %v449 = vpop.f32.mrf.mxu0
  %v450 = vadd.f32 0.0, %v449
  %v451 = vpop.f32.mrf.mxu0
  %452 = vmatprep.mubr.bf16.mxu0 %v399
  %453 = vmatmul.mubr.bf16.gmra.mxu0 %v398
  %v454 = vpop.f32.mrf.mxu0
  %v455 = vadd.f32 0.0, %v454
  %v456 = vpop.f32.mrf.mxu0
  %v457 = vpop.f32.mrf.mxu0
  %v458 = vadd.f32 0.0, %v457
  %v459 = vpop.f32.mrf.mxu0
  %460 = vmatprep.mubr.bf16.mxu0 %v401
  %461 = vmatmul.mubr.bf16.gmra.mxu0 %v400
  %v462 = vpop.f32.mrf.mxu0
  %v463 = vadd.f32 0.0, %v462
  %v464 = vpop.f32.mrf.mxu0
  %v465 = vpop.f32.mrf.mxu0
  %v466 = vadd.f32 0.0, %v465
  %v467 = vpop.f32.mrf.mxu0
  %468 = vmatprep.mubr.bf16.mxu0 %v403
  %469 = vmatmul.mubr.bf16.gmra.mxu0 %v402
  %v470 = vpop.f32.mrf.mxu0
  %v471 = vadd.f32 0.0, %v470
  %v472 = vpop.f32.mrf.mxu0
  %v473 = vpop.f32.mrf.mxu0
  %v474 = vpop.f32.mrf.mxu0
  %475 = vdwg.mxu0
  %v476 = vld [vmem:[%s3] sm:$0xff]
  %v477 = vld [vmem:[%s3 + $0x8] sm:$0xff]
  %v478 = vld [vmem:[%s3 + $0x10] sm:$0xff]
  %v479 = vld [vmem:[%s3 + $0x18] sm:$0xff]
  %v480 = vld [vmem:[%s3 + $0x20] sm:$0xff]
  %v481 = vld [vmem:[%s3 + $0x28] sm:$0xff]
  %v482 = vld [vmem:[%s3 + $0x30] sm:$0x11]
  %v490 = vunpack.c.l.b16 %v476
  %v491 = vunpack.c.h.b16 %v476
  %v492 = vunpack.c.l.b16 %v477
  %v493 = vunpack.c.h.b16 %v477
  %v494 = vunpack.c.l.b16 %v478
  %v495 = vunpack.c.h.b16 %v478
  %v496 = vunpack.c.l.b16 %v479
  %v497 = vunpack.c.h.b16 %v479
  %v498 = vunpack.c.l.b16 %v480
  %v499 = vunpack.c.h.b16 %v480
  %v500 = vunpack.c.l.b16 %v481
  %v501 = vunpack.c.h.b16 %v481
  %v502 = vunpack.c.l.b16 %v482
  %v503 = vunpack.c.h.b16 %v482
  %v504 = vpack.c.b16 %v492, %v490
  %v505 = vpack.c.b16 %v493, %v491
  %v506 = vpack.c.b16 %v496, %v494
  %v507 = vpack.c.b16 %v497, %v495
  %v508 = vpack.c.b16 %v500, %v498
  %v509 = vpack.c.b16 %v501, %v499
  %v510 = vpack.c.b16 %v502, %v502
  %v511 = vpack.c.b16 %v503, %v503
  %520 = vmatprep.subr.bf16.mxu0 0
  %521 = vmatpush1.bf16.msra.mxu0 %v171
  %522 = vmatprep.subr.bf16.mxu0 0
  %523 = vmatpush1.bf16.msra.mxu0 %v170
  %524 = vmatprep.subr.bf16.mxu0 0
  %525 = vmatpush1.bf16.msra.mxu0 %v169
  %526 = vmatprep.subr.bf16.mxu0 0
  %527 = vmatpush1.bf16.msra.mxu0 %v168
  %528 = vmatprep.subr.bf16.mxu0 0
  %529 = vmatpush1.bf16.msra.mxu0 %v167
  %530 = vmatprep.subr.bf16.mxu0 0
  %531 = vmatpush1.bf16.msra.mxu0 %v166
  %532 = vmatprep.subr.bf16.mxu0 0
  %533 = vmatpush1.bf16.msra.mxu0 %v165
  %534 = vmatprep.subr.bf16.mxu0 0
  %535 = vmatpush1.bf16.msra.mxu0 %v164
  %536 = vmatprep.subr.bf16.mxu0 0
  %537 = vmatpush2.bf16.msra.mxu0 %v179
  %538 = vmatprep.subr.bf16.mxu0 0
  %539 = vmatpush2.bf16.msra.mxu0 %v178
  %540 = vmatprep.subr.bf16.mxu0 0
  %541 = vmatpush2.bf16.msra.mxu0 %v177
  %542 = vmatprep.subr.bf16.mxu0 0
  %543 = vmatpush2.bf16.msra.mxu0 %v176
  %544 = vmatprep.subr.bf16.mxu0 0
  %545 = vmatpush2.bf16.msra.mxu0 %v175
  %546 = vmatprep.subr.bf16.mxu0 0
  %547 = vmatpush2.bf16.msra.mxu0 %v174
  %548 = vmatprep.subr.bf16.mxu0 0
  %549 = vmatpush2.bf16.msra.mxu0 %v173
  %550 = vmatprep.subr.bf16.mxu0 0
  %551 = vmatpush2.bf16.msra.mxu0 %v172
  %552 = vmatprep.mubr.bf16.mxu0 %v505
  %553 = vmatmul.mubr.bf16.gmra.mxu0 %v504
  %v554 = vpop.f32.mrf.mxu0
  %v555 = vadd.f32 0.0, %v554
  %v556 = vpop.f32.mrf.mxu0
  %v557 = vpop.f32.mrf.mxu0
  %v558 = vadd.f32 0.0, %v557
  %v559 = vpop.f32.mrf.mxu0
  %560 = vmatprep.mubr.bf16.mxu0 %v507
  %561 = vmatmul.mubr.bf16.gmra.mxu0 %v506
  %v562 = vpop.f32.mrf.mxu0
  %v563 = vadd.f32 0.0, %v562
  %v564 = vpop.f32.mrf.mxu0
  %v565 = vpop.f32.mrf.mxu0
  %v566 = vadd.f32 0.0, %v565
  %v567 = vpop.f32.mrf.mxu0
  %568 = vmatprep.mubr.bf16.mxu0 %v509
  %569 = vmatmul.mubr.bf16.gmra.mxu0 %v508
  %v570 = vpop.f32.mrf.mxu0
  %v571 = vadd.f32 0.0, %v570
  %v572 = vpop.f32.mrf.mxu0
  %v573 = vpop.f32.mrf.mxu0
  %v574 = vadd.f32 0.0, %v573
  %v575 = vpop.f32.mrf.mxu0
  %576 = vmatprep.mubr.bf16.mxu0 %v511
  %577 = vmatmul.mubr.bf16.gmra.mxu0 %v510
  %v578 = vpop.f32.mrf.mxu0
  %v579 = vadd.f32 0.0, %v578
  %v580 = vpop.f32.mrf.mxu0
  %v581 = vpop.f32.mrf.mxu0
  %v582 = vpop.f32.mrf.mxu0
  %583 = vdwg.mxu0
  %v584 = vmax.f32 %v231, %v339
  %v585 = vmax.f32 %v234, %v342
  %v586 = vmax.f32 %v239, %v347
  %v587 = vmax.f32 %v242, %v350
  %v588 = vmax.f32 %v247, %v355
  %v589 = vmax.f32 %v250, %v358
  %v590 = vmax.f32 %v255, %v363
  %v591 = vmax.f32 %v447, %v555
  %v592 = vmax.f32 %v450, %v558
  %v593 = vmax.f32 %v455, %v563
  %v594 = vmax.f32 %v458, %v566
  %v595 = vmax.f32 %v463, %v571
  %v596 = vmax.f32 %v466, %v574
  %v597 = vmax.f32 %v471, %v579
  %v598 = vmax.f32 %v584, %v591
  %v599 = vmax.f32 %v585, %v592
  %v600 = vmax.f32 %v586, %v593
  %v601 = vmax.f32 %v587, %v594
  %v602 = vmax.f32 %v588, %v595
  %v603 = vmax.f32 %v589, %v596
  %v604 = vmax.f32 %v590, %v597
  %v605 = vld [vmem:[%s5] sm:$0x1]
  %v607 = vlaneseq
  %v608 = vshrl.u32 %v607, 7
  %v609 = vsub.s32 0, %v608
  %v610 = vrot.slane %v605, %v609
  %v612 = vadd.f32 %v598, %v610
  %v613 = vadd.f32 %v599, %v610
  %v614 = vadd.f32 %v600, %v610
  %v615 = vadd.f32 %v601, %v610
  %v616 = vadd.f32 %v602, %v610
  %v617 = vadd.f32 %v603, %v610
  %v618 = vadd.f32 %v604, %v610
  %v619 = vmax.f32 %v612, 0.0
  %v620 = vmax.f32 %v613, 0.0
  %v621 = vmax.f32 %v614, 0.0
  %v622 = vmax.f32 %v615, 0.0
  %v623 = vmax.f32 %v616, 0.0
  %v624 = vmax.f32 %v617, 0.0
  %v625 = vmax.f32 %v618, 0.0
  %v626 = vpack.c.bf16 %v620, %v619
  %v627 = vpack.c.bf16 %v622, %v621
  %v628 = vpack.c.bf16 %v624, %v623
  %v629 = vpack.c.bf16 %v625, %v625
  %v634 = vunpack.c.l.b16 %v626
  %v635 = vunpack.c.h.b16 %v626
  %v636 = vunpack.c.l.b16 %v627
  %v637 = vunpack.c.h.b16 %v627
  %v638 = vunpack.c.l.b16 %v628
  %v639 = vunpack.c.h.b16 %v628
  %v640 = vunpack.c.l.b16 %v629
  %v641 = vpack.c.b16 %v634, %v634
  %v642 = vpack.c.b16 %v635, %v635
  %v643 = vpack.c.b16 %v636, %v636
  %v644 = vpack.c.b16 %v637, %v637
  %v645 = vpack.c.b16 %v638, %v638
  %v646 = vpack.c.b16 %v639, %v639
  %v647 = vpack.c.b16 %v640, %v640
  %655 = vst [vmem:[%s6] sm:$0xf] %v641
  %656 = vst [vmem:[%s6 + $0x4] sm:$0xf] %v642
  %657 = vst [vmem:[%s6 + $0x8] sm:$0xf] %v643
  %658 = vst [vmem:[%s6 + $0xc] sm:$0xf] %v644
  %659 = vst [vmem:[%s6 + $0x10] sm:$0xf] %v645
  %660 = vst [vmem:[%s6 + $0x14] sm:$0xf] %v646
  %661 = vst [vmem:[%s6 + $0x18] sm:$0x1] %v647
  // Predicated region
  $region26: #{net_forward.4} parent=0 // pred_check
    _
  $region27: #{net_forward.4} parent=0 // pred_check_branch
    %663 = sbr.rel (0) target = $region29
  $region28: #{net_forward.4} parent=0 // pred_region
    _
  $region29: #{net_forward.4} parent=0 // pred_fallthru
    _
  // Predicated region
  $region30: #{net_forward.4} parent=0 // pred_check
    _
  $region31: #{net_forward.4} parent=0 // pred_check_branch
    %665 = sbr.rel (0) target = $region33
  $region32: #{net_forward.4} parent=0 // pred_region
    _
  $region33: #{net_forward.4} parent=0 // pred_fallthru
    _

// kernel: net_forward.5
$region0: #{net_forward.5}
  #allocation0 [shape = 'u32[]', space=smem, size = 0x4, offset = 0x4, fixed_abs, tag = 'smem constant byte address 0x4 - core index']
  #allocation1 [shape = 'u32[144,128]{1,0:T(1,128)}', space=vmem, size = 0x12000, scoped, tag = 'internal scratch']
  %s0 = inlined_call_operand.vmem [shape: bf16[2,3200], index: 0, kind: input, shape index: {}]
  %s1 = inlined_call_operand.vmem [shape: bf16[3200,128], index: 1, kind: input, shape index: {}]
  %s2 = inlined_call_operand.vmem [shape: f32[1,128], index: 2, kind: input, shape index: {}]
  %s3 = inlined_call_operand.vmem [shape: bf16[128,128], index: 3, kind: input, shape index: {}]
  %s4 = inlined_call_operand.vmem [shape: f32[1,128], index: 4, kind: input, shape index: {}]
  %s5 = inlined_call_operand.vmem [shape: bf16[128,128], index: 5, kind: input, shape index: {}]
  %s6 = inlined_call_operand.vmem [shape: f32[1,128], index: 6, kind: input, shape index: {}]
  %s7 = inlined_call_operand.hbm [shape: f32[2,128], index: 7, kind: output, shape index: {}]
  %s8 = sld [smem:[#allocation0]]
  $region38: #{net_forward.5} parent=0
    _
  %s10 = ssub.s32 1, %s8
  %s11 = scalar_select 0, %s10, %s8
  $region1: #{net_forward.5} parent=0
    #allocation2 [shape = 'u8[1024]{0}', space=vmem, size = 0x400, scoped, tag = 'output window, operand 0, single buffered']
    #allocation3 [shape = 's32[1]{0}', space=sflag, size = 0x4, scoped, tag = 'scoped memory for net_forward.5']
    %12 = vsyncpa [#allocation3], 0
    // Predicated region
    $region2: #{net_forward.5} parent=1 // pred_check
      _
    $region3: #{net_forward.5} parent=1 // pred_check_branch
      %14 = sbr.rel (0) target = $region5
    $region4: #{net_forward.5} parent=1 // pred_region
      _
    $region5: #{net_forward.5} parent=1 // pred_fallthru
      _
    // Predicated region
    $region6: #{net_forward.5} parent=1 // pred_check
      _
    $region7: #{net_forward.5} parent=1 // pred_check_branch
      %16 = sbr.rel (0) target = $region9
    $region8: #{net_forward.5} parent=1 // pred_region
      _
    $region9: #{net_forward.5} parent=1 // pred_fallthru
      _
    // Predicated region
    $region10: #{net_forward.5} parent=1 // pred_check
      _
    $region11: #{net_forward.5} parent=1 // pred_check_branch
      %18 = sbr.rel (0) target = $region13
    $region12: #{net_forward.5} parent=1 // pred_region
      _
    $region13: #{net_forward.5} parent=1 // pred_fallthru
      _
    // Predicated region
    $region14: #{net_forward.5} parent=1 // pred_check
      _
    $region15: #{net_forward.5} parent=1 // pred_check_branch
      %20 = sbr.rel (0) target = $region17
    $region16: #{net_forward.5} parent=1 // pred_region
      _
    $region17: #{net_forward.5} parent=1 // pred_fallthru
      _
    // Predicated region
    $region18: #{net_forward.5} parent=1 // pred_check
      _
    $region19: #{net_forward.5} parent=1 // pred_check_branch
      %22 = sbr.rel (0) target = $region21
    $region20: #{net_forward.5} parent=1 // pred_region
      _
    $region21: #{net_forward.5} parent=1 // pred_fallthru
      _
    // Predicated region
    $region22: #{net_forward.5} parent=1 // pred_check
      _
    $region23: #{net_forward.5} parent=1 // pred_check_branch
      %24 = sbr.rel (0) target = $region25
    $region24: #{net_forward.5} parent=1 // pred_region
      _
    $region25: #{net_forward.5} parent=1 // pred_fallthru
      _
    // Predicated region
    $region26: #{net_forward.5} parent=1 // pred_check
      _
    $region27: #{net_forward.5} parent=1 // pred_check_branch
      %26 = sbr.rel (0) target = $region29
    $region28: #{net_forward.5} parent=1 // pred_region
      _
    $region29: #{net_forward.5} parent=1 // pred_fallthru
      _
    %v28 = vld [vmem:[%s0] sm:$0xff]
    %v29 = vld [vmem:[%s0 + $0x8] sm:$0xff]
    %v30 = vld [vmem:[%s0 + $0x10] sm:$0xff]
    %v31 = vld [vmem:[%s0 + $0x18] sm:$0x1]
    %v32 = vld [vmem:[%s1] sm:$0xf]
    %v33 = vld [vmem:[%s1 + $0x4] sm:$0xf]
    %v34 = vld [vmem:[%s1 + $0x8] sm:$0xf]
    %v35 = vld [vmem:[%s1 + $0xc] sm:$0xf]
    %v36 = vld [vmem:[%s1 + $0x10] sm:$0xf]
    %v37 = vld [vmem:[%s1 + $0x14] sm:$0xf]
    %v38 = vld [vmem:[%s1 + $0x18] sm:$0xf]
    %v39 = vld [vmem:[%s1 + $0x1c] sm:$0xf]
    %v40 = vld [vmem:[%s1 + $0x20] sm:$0xf]
    %v41 = vld [vmem:[%s1 + $0x24] sm:$0xf]
    %v42 = vld [vmem:[%s1 + $0x28] sm:$0xf]
    %v43 = vld [vmem:[%s1 + $0x2c] sm:$0xf]
    %v44 = vld [vmem:[%s1 + $0x30] sm:$0xf]
    %v45 = vld [vmem:[%s1 + $0x34] sm:$0xf]
    %v46 = vld [vmem:[%s1 + $0x38] sm:$0xf]
    %v47 = vld [vmem:[%s1 + $0x3c] sm:$0xf]
    %v48 = vld [vmem:[%s1 + $0x40] sm:$0xf]
    %v49 = vld [vmem:[%s1 + $0x44] sm:$0xf]
    %v50 = vld [vmem:[%s1 + $0x48] sm:$0xf]
    %v51 = vld [vmem:[%s1 + $0x4c] sm:$0xf]
    %v52 = vld [vmem:[%s1 + $0x50] sm:$0xf]
    %v53 = vld [vmem:[%s1 + $0x54] sm:$0xf]
    %v54 = vld [vmem:[%s1 + $0x58] sm:$0xf]
    %v55 = vld [vmem:[%s1 + $0x5c] sm:$0xf]
    %v56 = vld [vmem:[%s1 + $0x60] sm:$0xf]
    %v57 = vld [vmem:[%s1 + $0x64] sm:$0xf]
    %v58 = vld [vmem:[%s1 + $0x68] sm:$0xf]
    %v59 = vld [vmem:[%s1 + $0x6c] sm:$0xf]
    %v60 = vld [vmem:[%s1 + $0x70] sm:$0xf]
    %v61 = vld [vmem:[%s1 + $0x74] sm:$0xf]
    %v62 = vld [vmem:[%s1 + $0x78] sm:$0xf]
    %v63 = vld [vmem:[%s1 + $0x7c] sm:$0xf]
    %v64 = vld [vmem:[%s1 + $0x80] sm:$0xf]
    %v65 = vld [vmem:[%s1 + $0x84] sm:$0xf]
    %v66 = vld [vmem:[%s1 + $0x88] sm:$0xf]
    %v67 = vld [vmem:[%s1 + $0x8c] sm:$0xf]
    %v68 = vld [vmem:[%s1 + $0x90] sm:$0xf]
    %v69 = vld [vmem:[%s1 + $0x94] sm:$0xf]
    %v70 = vld [vmem:[%s1 + $0x98] sm:$0xf]
    %v71 = vld [vmem:[%s1 + $0x9c] sm:$0xf]
    %v72 = vld [vmem:[%s1 + $0xa0] sm:$0xf]
    %v73 = vld [vmem:[%s1 + $0xa4] sm:$0xf]
    %v74 = vld [vmem:[%s1 + $0xa8] sm:$0xf]
    %v75 = vld [vmem:[%s1 + $0xac] sm:$0xf]
    %v76 = vld [vmem:[%s1 + $0xb0] sm:$0xf]
    %v77 = vld [vmem:[%s1 + $0xb4] sm:$0xf]
    %v78 = vld [vmem:[%s1 + $0xb8] sm:$0xf]
    %v79 = vld [vmem:[%s1 + $0xbc] sm:$0xf]
    %v80 = vld [vmem:[%s1 + $0xc0] sm:$0xf]
    %v81 = vld [vmem:[%s1 + $0xc4] sm:$0xf]
    %v82 = vld [vmem:[%s1 + $0xc8] sm:$0xf]
    %v83 = vld [vmem:[%s1 + $0xcc] sm:$0xf]
    %v84 = vld [vmem:[%s1 + $0xd0] sm:$0xf]
    %v85 = vld [vmem:[%s1 + $0xd4] sm:$0xf]
    %v86 = vld [vmem:[%s1 + $0xd8] sm:$0xf]
    %v87 = vld [vmem:[%s1 + $0xdc] sm:$0xf]
    %v88 = vld [vmem:[%s1 + $0xe0] sm:$0xf]
    %v89 = vld [vmem:[%s1 + $0xe4] sm:$0xf]
    %v90 = vld [vmem:[%s1 + $0xe8] sm:$0xf]
    %v91 = vld [vmem:[%s1 + $0xec] sm:$0xf]
    %v92 = vld [vmem:[%s1 + $0xf0] sm:$0xf]
    %v93 = vld [vmem:[%s1 + $0xf4] sm:$0xf]
    %v94 = vld [vmem:[%s1 + $0xf8] sm:$0xf]
    %v95 = vld [vmem:[%s1 + $0xfc] sm:$0xf]
    %v96 = vld [vmem:[%s1 + $0x100] sm:$0xf]
    %v97 = vld [vmem:[%s1 + $0x104] sm:$0xf]
    %v98 = vld [vmem:[%s1 + $0x108] sm:$0xf]
    %v99 = vld [vmem:[%s1 + $0x10c] sm:$0xf]
    %v100 = vld [vmem:[%s1 + $0x110] sm:$0xf]
    %v101 = vld [vmem:[%s1 + $0x114] sm:$0xf]
    %v102 = vld [vmem:[%s1 + $0x118] sm:$0xf]
    %v103 = vld [vmem:[%s1 + $0x11c] sm:$0xf]
    %v104 = vld [vmem:[%s1 + $0x120] sm:$0xf]
    %v105 = vld [vmem:[%s1 + $0x124] sm:$0xf]
    %v106 = vld [vmem:[%s1 + $0x128] sm:$0xf]
    %v107 = vld [vmem:[%s1 + $0x12c] sm:$0xf]
    %v108 = vld [vmem:[%s1 + $0x130] sm:$0xf]
    %v109 = vld [vmem:[%s1 + $0x134] sm:$0xf]
    %v110 = vld [vmem:[%s1 + $0x138] sm:$0xf]
    %v111 = vld [vmem:[%s1 + $0x13c] sm:$0xf]
    %v112 = vld [vmem:[%s1 + $0x140] sm:$0xf]
    %v113 = vld [vmem:[%s1 + $0x144] sm:$0xf]
    %v114 = vld [vmem:[%s1 + $0x148] sm:$0xf]
    %v115 = vld [vmem:[%s1 + $0x14c] sm:$0xf]
    %v116 = vld [vmem:[%s1 + $0x150] sm:$0xf]
    %v117 = vld [vmem:[%s1 + $0x154] sm:$0xf]
    %v118 = vld [vmem:[%s1 + $0x158] sm:$0xf]
    %v119 = vld [vmem:[%s1 + $0x15c] sm:$0xf]
    %v120 = vld [vmem:[%s1 + $0x160] sm:$0xf]
    %v121 = vld [vmem:[%s1 + $0x164] sm:$0xf]
    %v122 = vld [vmem:[%s1 + $0x168] sm:$0xf]
    %v123 = vld [vmem:[%s1 + $0x16c] sm:$0xf]
    %v124 = vld [vmem:[%s1 + $0x170] sm:$0xf]
    %v125 = vld [vmem:[%s1 + $0x174] sm:$0xf]
    %v126 = vld [vmem:[%s1 + $0x178] sm:$0xf]
    %v127 = vld [vmem:[%s1 + $0x17c] sm:$0xf]
    %v128 = vld [vmem:[%s1 + $0x180] sm:$0xf]
    %v129 = vld [vmem:[%s1 + $0x184] sm:$0xf]
    %v130 = vld [vmem:[%s1 + $0x188] sm:$0xf]
    %v131 = vld [vmem:[%s1 + $0x18c] sm:$0xf]
    %v132 = vld [vmem:[%s1 + $0x190] sm:$0xf]
    %v133 = vld [vmem:[%s1 + $0x194] sm:$0xf]
    %v134 = vld [vmem:[%s1 + $0x198] sm:$0xf]
    %v135 = vld [vmem:[%s1 + $0x19c] sm:$0xf]
    %v136 = vld [vmem:[%s1 + $0x1a0] sm:$0xf]
    %v137 = vld [vmem:[%s1 + $0x1a4] sm:$0xf]
    %v138 = vld [vmem:[%s1 + $0x1a8] sm:$0xf]
    %v139 = vld [vmem:[%s1 + $0x1ac] sm:$0xf]
    %v140 = vld [vmem:[%s1 + $0x1b0] sm:$0xf]
    %v141 = vld [vmem:[%s1 + $0x1b4] sm:$0xf]
    %v142 = vld [vmem:[%s1 + $0x1b8] sm:$0xf]
    %v143 = vld [vmem:[%s1 + $0x1bc] sm:$0xf]
    %v144 = vld [vmem:[%s1 + $0x1c0] sm:$0xf]
    %v145 = vld [vmem:[%s1 + $0x1c4] sm:$0xf]
    %v146 = vld [vmem:[%s1 + $0x1c8] sm:$0xf]
    %v147 = vld [vmem:[%s1 + $0x1cc] sm:$0xf]
    %v148 = vld [vmem:[%s1 + $0x1d0] sm:$0xf]
    %v149 = vld [vmem:[%s1 + $0x1d4] sm:$0xf]
    %v150 = vld [vmem:[%s1 + $0x1d8] sm:$0xf]
    %v151 = vld [vmem:[%s1 + $0x1dc] sm:$0xf]
    %v152 = vld [vmem:[%s1 + $0x1e0] sm:$0xf]
    %v153 = vld [vmem:[%s1 + $0x1e4] sm:$0xf]
    %v154 = vld [vmem:[%s1 + $0x1e8] sm:$0xf]
    %v155 = vld [vmem:[%s1 + $0x1ec] sm:$0xf]
    %v156 = vld [vmem:[%s1 + $0x1f0] sm:$0xf]
    %v157 = vld [vmem:[%s1 + $0x1f4] sm:$0xf]
    %v158 = vld [vmem:[%s1 + $0x1f8] sm:$0xf]
    %v159 = vld [vmem:[%s1 + $0x1fc] sm:$0xf]
    %v160 = vld [vmem:[%s1 + $0x200] sm:$0xf]
    %v161 = vld [vmem:[%s1 + $0x204] sm:$0xf]
    %v162 = vld [vmem:[%s1 + $0x208] sm:$0xf]
    %v163 = vld [vmem:[%s1 + $0x20c] sm:$0xf]
    %v164 = vld [vmem:[%s1 + $0x210] sm:$0xf]
    %v165 = vld [vmem:[%s1 + $0x214] sm:$0xf]
    %v166 = vld [vmem:[%s1 + $0x218] sm:$0xf]
    %v167 = vld [vmem:[%s1 + $0x21c] sm:$0xf]
    %v168 = vld [vmem:[%s1 + $0x220] sm:$0xf]
    %v169 = vld [vmem:[%s1 + $0x224] sm:$0xf]
    %v170 = vld [vmem:[%s1 + $0x228] sm:$0xf]
    %v171 = vld [vmem:[%s1 + $0x22c] sm:$0xf]
    %v172 = vld [vmem:[%s1 + $0x230] sm:$0xf]
    %v173 = vld [vmem:[%s1 + $0x234] sm:$0xf]
    %v174 = vld [vmem:[%s1 + $0x238] sm:$0xf]
    %v175 = vld [vmem:[%s1 + $0x23c] sm:$0xf]
    %v176 = vld [vmem:[%s1 + $0x240] sm:$0xf]
    %v177 = vld [vmem:[%s1 + $0x244] sm:$0xf]
    %v178 = vld [vmem:[%s1 + $0x248] sm:$0xf]
    %v179 = vld [vmem:[%s1 + $0x24c] sm:$0xf]
    %v180 = vld [vmem:[%s1 + $0x250] sm:$0xf]
    %v181 = vld [vmem:[%s1 + $0x254] sm:$0xf]
    %v182 = vld [vmem:[%s1 + $0x258] sm:$0xf]
    %v183 = vld [vmem:[%s1 + $0x25c] sm:$0xf]
    %v184 = vld [vmem:[%s1 + $0x260] sm:$0xf]
    %v185 = vld [vmem:[%s1 + $0x264] sm:$0xf]
    %v186 = vld [vmem:[%s1 + $0x268] sm:$0xf]
    %v187 = vld [vmem:[%s1 + $0x26c] sm:$0xf]
    %v188 = vld [vmem:[%s1 + $0x270] sm:$0xf]
    %v189 = vld [vmem:[%s1 + $0x274] sm:$0xf]
    %v190 = vld [vmem:[%s1 + $0x278] sm:$0xf]
    %v191 = vld [vmem:[%s1 + $0x27c] sm:$0xf]
    %v192 = vld [vmem:[%s1 + $0x280] sm:$0xf]
    %v193 = vld [vmem:[%s1 + $0x284] sm:$0xf]
    %v194 = vld [vmem:[%s1 + $0x288] sm:$0xf]
    %v195 = vld [vmem:[%s1 + $0x28c] sm:$0xf]
    %v196 = vld [vmem:[%s1 + $0x290] sm:$0xf]
    %v197 = vld [vmem:[%s1 + $0x294] sm:$0xf]
    %v198 = vld [vmem:[%s1 + $0x298] sm:$0xf]
    %v199 = vld [vmem:[%s1 + $0x29c] sm:$0xf]
    %v200 = vld [vmem:[%s1 + $0x2a0] sm:$0xf]
    %v201 = vld [vmem:[%s1 + $0x2a4] sm:$0xf]
    %v202 = vld [vmem:[%s1 + $0x2a8] sm:$0xf]
    %v203 = vld [vmem:[%s1 + $0x2ac] sm:$0xf]
    %v204 = vld [vmem:[%s1 + $0x2b0] sm:$0xf]
    %v205 = vld [vmem:[%s1 + $0x2b4] sm:$0xf]
    %v206 = vld [vmem:[%s1 + $0x2b8] sm:$0xf]
    %v207 = vld [vmem:[%s1 + $0x2bc] sm:$0xf]
    %v208 = vld [vmem:[%s1 + $0x2c0] sm:$0xf]
    %v209 = vld [vmem:[%s1 + $0x2c4] sm:$0xf]
    %v210 = vld [vmem:[%s1 + $0x2c8] sm:$0xf]
    %v211 = vld [vmem:[%s1 + $0x2cc] sm:$0xf]
    %v212 = vld [vmem:[%s1 + $0x2d0] sm:$0xf]
    %v213 = vld [vmem:[%s1 + $0x2d4] sm:$0xf]
    %v214 = vld [vmem:[%s1 + $0x2d8] sm:$0xf]
    %v215 = vld [vmem:[%s1 + $0x2dc] sm:$0xf]
    %v216 = vld [vmem:[%s1 + $0x2e0] sm:$0xf]
    %v217 = vld [vmem:[%s1 + $0x2e4] sm:$0xf]
    %v218 = vld [vmem:[%s1 + $0x2e8] sm:$0xf]
    %v219 = vld [vmem:[%s1 + $0x2ec] sm:$0xf]
    %v220 = vld [vmem:[%s1 + $0x2f0] sm:$0xf]
    %v221 = vld [vmem:[%s1 + $0x2f4] sm:$0xf]
    %v222 = vld [vmem:[%s1 + $0x2f8] sm:$0xf]
    %v223 = vld [vmem:[%s1 + $0x2fc] sm:$0xf]
    %v224 = vld [vmem:[%s1 + $0x300] sm:$0xf]
    %v225 = vld [vmem:[%s1 + $0x304] sm:$0xf]
    %v226 = vld [vmem:[%s1 + $0x308] sm:$0xf]
    %v227 = vld [vmem:[%s1 + $0x30c] sm:$0xf]
    %v228 = vld [vmem:[%s1 + $0x310] sm:$0xf]
    %v229 = vld [vmem:[%s1 + $0x314] sm:$0xf]
    %v230 = vld [vmem:[%s1 + $0x318] sm:$0xf]
    %v231 = vld [vmem:[%s1 + $0x31c] sm:$0xf]
    %v232 = vld [vmem:[%s1 + $0x320] sm:$0xf]
    %v233 = vld [vmem:[%s1 + $0x324] sm:$0xf]
    %v234 = vld [vmem:[%s1 + $0x328] sm:$0xf]
    %v235 = vld [vmem:[%s1 + $0x32c] sm:$0xf]
    %v236 = vld [vmem:[%s1 + $0x330] sm:$0xf]
    %v237 = vld [vmem:[%s1 + $0x334] sm:$0xf]
    %v238 = vld [vmem:[%s1 + $0x338] sm:$0xf]
    %v239 = vld [vmem:[%s1 + $0x33c] sm:$0xf]
    %v240 = vld [vmem:[%s1 + $0x340] sm:$0xf]
    %v241 = vld [vmem:[%s1 + $0x344] sm:$0xf]
    %v242 = vld [vmem:[%s1 + $0x348] sm:$0xf]
    %v243 = vld [vmem:[%s1 + $0x34c] sm:$0xf]
    %v244 = vld [vmem:[%s1 + $0x350] sm:$0xf]
    %v245 = vld [vmem:[%s1 + $0x354] sm:$0xf]
    %v246 = vld [vmem:[%s1 + $0x358] sm:$0xf]
    %v247 = vld [vmem:[%s1 + $0x35c] sm:$0xf]
    %v248 = vld [vmem:[%s1 + $0x360] sm:$0xf]
    %v249 = vld [vmem:[%s1 + $0x364] sm:$0xf]
    %v250 = vld [vmem:[%s1 + $0x368] sm:$0xf]
    %v251 = vld [vmem:[%s1 + $0x36c] sm:$0xf]
    %v252 = vld [vmem:[%s1 + $0x370] sm:$0xf]
    %v253 = vld [vmem:[%s1 + $0x374] sm:$0xf]
    %v254 = vld [vmem:[%s1 + $0x378] sm:$0xf]
    %v255 = vld [vmem:[%s1 + $0x37c] sm:$0xf]
    %v256 = vld [vmem:[%s1 + $0x380] sm:$0xf]
    %v257 = vld [vmem:[%s1 + $0x384] sm:$0xf]
    %v258 = vld [vmem:[%s1 + $0x388] sm:$0xf]
    %v259 = vld [vmem:[%s1 + $0x38c] sm:$0xf]
    %v260 = vld [vmem:[%s1 + $0x390] sm:$0xf]
    %v261 = vld [vmem:[%s1 + $0x394] sm:$0xf]
    %v262 = vld [vmem:[%s1 + $0x398] sm:$0xf]
    %v263 = vld [vmem:[%s1 + $0x39c] sm:$0xf]
    %v264 = vld [vmem:[%s1 + $0x3a0] sm:$0xf]
    %v265 = vld [vmem:[%s1 + $0x3a4] sm:$0xf]
    %v266 = vld [vmem:[%s1 + $0x3a8] sm:$0xf]
    %v267 = vld [vmem:[%s1 + $0x3ac] sm:$0xf]
    %v268 = vld [vmem:[%s1 + $0x3b0] sm:$0xf]
    %v269 = vld [vmem:[%s1 + $0x3b4] sm:$0xf]
    %v270 = vld [vmem:[%s1 + $0x3b8] sm:$0xf]
    %v271 = vld [vmem:[%s1 + $0x3bc] sm:$0xf]
    %v272 = vld [vmem:[%s1 + $0x3c0] sm:$0xf]
    %v273 = vld [vmem:[%s1 + $0x3c4] sm:$0xf]
    %v274 = vld [vmem:[%s1 + $0x3c8] sm:$0xf]
    %v275 = vld [vmem:[%s1 + $0x3cc] sm:$0xf]
    %v276 = vld [vmem:[%s1 + $0x3d0] sm:$0xf]
    %v277 = vld [vmem:[%s1 + $0x3d4] sm:$0xf]
    %v278 = vld [vmem:[%s1 + $0x3d8] sm:$0xf]
    %v279 = vld [vmem:[%s1 + $0x3dc] sm:$0xf]
    %v280 = vld [vmem:[%s1 + $0x3e0] sm:$0xf]
    %v281 = vld [vmem:[%s1 + $0x3e4] sm:$0xf]
    %v282 = vld [vmem:[%s1 + $0x3e8] sm:$0xf]
    %v283 = vld [vmem:[%s1 + $0x3ec] sm:$0xf]
    %v284 = vld [vmem:[%s1 + $0x3f0] sm:$0xf]
    %v285 = vld [vmem:[%s1 + $0x3f4] sm:$0xf]
    %v286 = vld [vmem:[%s1 + $0x3f8] sm:$0xf]
    %v287 = vld [vmem:[%s1 + $0x3fc] sm:$0xf]
    %v288 = vld [vmem:[%s1 + $0x400] sm:$0xf]
    %v289 = vld [vmem:[%s1 + $0x404] sm:$0xf]
    %v290 = vld [vmem:[%s1 + $0x408] sm:$0xf]
    %v291 = vld [vmem:[%s1 + $0x40c] sm:$0xf]
    %v292 = vld [vmem:[%s1 + $0x410] sm:$0xf]
    %v293 = vld [vmem:[%s1 + $0x414] sm:$0xf]
    %v294 = vld [vmem:[%s1 + $0x418] sm:$0xf]
    %v295 = vld [vmem:[%s1 + $0x41c] sm:$0xf]
    %v296 = vld [vmem:[%s1 + $0x420] sm:$0xf]
    %v297 = vld [vmem:[%s1 + $0x424] sm:$0xf]
    %v298 = vld [vmem:[%s1 + $0x428] sm:$0xf]
    %v299 = vld [vmem:[%s1 + $0x42c] sm:$0xf]
    %v300 = vld [vmem:[%s1 + $0x430] sm:$0xf]
    %v301 = vld [vmem:[%s1 + $0x434] sm:$0xf]
    %v302 = vld [vmem:[%s1 + $0x438] sm:$0xf]
    %v303 = vld [vmem:[%s1 + $0x43c] sm:$0xf]
    %v304 = vld [vmem:[%s1 + $0x440] sm:$0xf]
    %v305 = vld [vmem:[%s1 + $0x444] sm:$0xf]
    %v306 = vld [vmem:[%s1 + $0x448] sm:$0xf]
    %v307 = vld [vmem:[%s1 + $0x44c] sm:$0xf]
    %v308 = vld [vmem:[%s1 + $0x450] sm:$0xf]
    %v309 = vld [vmem:[%s1 + $0x454] sm:$0xf]
    %v310 = vld [vmem:[%s1 + $0x458] sm:$0xf]
    %v311 = vld [vmem:[%s1 + $0x45c] sm:$0xf]
    %v312 = vld [vmem:[%s1 + $0x460] sm:$0xf]
    %v313 = vld [vmem:[%s1 + $0x464] sm:$0xf]
    %v314 = vld [vmem:[%s1 + $0x468] sm:$0xf]
    %v315 = vld [vmem:[%s1 + $0x46c] sm:$0xf]
    %v316 = vld [vmem:[%s1 + $0x470] sm:$0xf]
    %v317 = vld [vmem:[%s1 + $0x474] sm:$0xf]
    %v318 = vld [vmem:[%s1 + $0x478] sm:$0xf]
    %v319 = vld [vmem:[%s1 + $0x47c] sm:$0xf]
    %v320 = vld [vmem:[%s1 + $0x480] sm:$0xf]
    %v321 = vld [vmem:[%s1 + $0x484] sm:$0xf]
    %v322 = vld [vmem:[%s1 + $0x488] sm:$0xf]
    %v323 = vld [vmem:[%s1 + $0x48c] sm:$0xf]
    %v324 = vld [vmem:[%s1 + $0x490] sm:$0xf]
    %v325 = vld [vmem:[%s1 + $0x494] sm:$0xf]
    %v326 = vld [vmem:[%s1 + $0x498] sm:$0xf]
    %v327 = vld [vmem:[%s1 + $0x49c] sm:$0xf]
    %v328 = vld [vmem:[%s1 + $0x4a0] sm:$0xf]
    %v329 = vld [vmem:[%s1 + $0x4a4] sm:$0xf]
    %v330 = vld [vmem:[%s1 + $0x4a8] sm:$0xf]
    %v331 = vld [vmem:[%s1 + $0x4ac] sm:$0xf]
    %v332 = vld [vmem:[%s1 + $0x4b0] sm:$0xf]
    %v333 = vld [vmem:[%s1 + $0x4b4] sm:$0xf]
    %v334 = vld [vmem:[%s1 + $0x4b8] sm:$0xf]
    %v335 = vld [vmem:[%s1 + $0x4bc] sm:$0xf]
    %v336 = vld [vmem:[%s1 + $0x4c0] sm:$0xf]
    %v337 = vld [vmem:[%s1 + $0x4c4] sm:$0xf]
    %v338 = vld [vmem:[%s1 + $0x4c8] sm:$0xf]
    %v339 = vld [vmem:[%s1 + $0x4cc] sm:$0xf]
    %v340 = vld [vmem:[%s1 + $0x4d0] sm:$0xf]
    %v341 = vld [vmem:[%s1 + $0x4d4] sm:$0xf]
    %v342 = vld [vmem:[%s1 + $0x4d8] sm:$0xf]
    %v343 = vld [vmem:[%s1 + $0x4dc] sm:$0xf]
    %v344 = vld [vmem:[%s1 + $0x4e0] sm:$0xf]
    %v345 = vld [vmem:[%s1 + $0x4e4] sm:$0xf]
    %v346 = vld [vmem:[%s1 + $0x4e8] sm:$0xf]
    %v347 = vld [vmem:[%s1 + $0x4ec] sm:$0xf]
    %v348 = vld [vmem:[%s1 + $0x4f0] sm:$0xf]
    %v349 = vld [vmem:[%s1 + $0x4f4] sm:$0xf]
    %v350 = vld [vmem:[%s1 + $0x4f8] sm:$0xf]
    %v351 = vld [vmem:[%s1 + $0x4fc] sm:$0xf]
    %v352 = vld [vmem:[%s1 + $0x500] sm:$0xf]
    %v353 = vld [vmem:[%s1 + $0x504] sm:$0xf]
    %v354 = vld [vmem:[%s1 + $0x508] sm:$0xf]
    %v355 = vld [vmem:[%s1 + $0x50c] sm:$0xf]
    %v356 = vld [vmem:[%s1 + $0x510] sm:$0xf]
    %v357 = vld [vmem:[%s1 + $0x514] sm:$0xf]
    %v358 = vld [vmem:[%s1 + $0x518] sm:$0xf]
    %v359 = vld [vmem:[%s1 + $0x51c] sm:$0xf]
    %v360 = vld [vmem:[%s1 + $0x520] sm:$0xf]
    %v361 = vld [vmem:[%s1 + $0x524] sm:$0xf]
    %v362 = vld [vmem:[%s1 + $0x528] sm:$0xf]
    %v363 = vld [vmem:[%s1 + $0x52c] sm:$0xf]
    %v364 = vld [vmem:[%s1 + $0x530] sm:$0xf]
    %v365 = vld [vmem:[%s1 + $0x534] sm:$0xf]
    %v366 = vld [vmem:[%s1 + $0x538] sm:$0xf]
    %v367 = vld [vmem:[%s1 + $0x53c] sm:$0xf]
    %v368 = vld [vmem:[%s1 + $0x540] sm:$0xf]
    %v369 = vld [vmem:[%s1 + $0x544] sm:$0xf]
    %v370 = vld [vmem:[%s1 + $0x548] sm:$0xf]
    %v371 = vld [vmem:[%s1 + $0x54c] sm:$0xf]
    %v372 = vld [vmem:[%s1 + $0x550] sm:$0xf]
    %v373 = vld [vmem:[%s1 + $0x554] sm:$0xf]
    %v374 = vld [vmem:[%s1 + $0x558] sm:$0xf]
    %v375 = vld [vmem:[%s1 + $0x55c] sm:$0xf]
    %v376 = vld [vmem:[%s1 + $0x560] sm:$0xf]
    %v377 = vld [vmem:[%s1 + $0x564] sm:$0xf]
    %v378 = vld [vmem:[%s1 + $0x568] sm:$0xf]
    %v379 = vld [vmem:[%s1 + $0x56c] sm:$0xf]
    %v380 = vld [vmem:[%s1 + $0x570] sm:$0xf]
    %v381 = vld [vmem:[%s1 + $0x574] sm:$0xf]
    %v382 = vld [vmem:[%s1 + $0x578] sm:$0xf]
    %v383 = vld [vmem:[%s1 + $0x57c] sm:$0xf]
    %v384 = vld [vmem:[%s1 + $0x580] sm:$0xf]
    %v385 = vld [vmem:[%s1 + $0x584] sm:$0xf]
    %v386 = vld [vmem:[%s1 + $0x588] sm:$0xf]
    %v387 = vld [vmem:[%s1 + $0x58c] sm:$0xf]
    %v388 = vld [vmem:[%s1 + $0x590] sm:$0xf]
    %v389 = vld [vmem:[%s1 + $0x594] sm:$0xf]
    %v390 = vld [vmem:[%s1 + $0x598] sm:$0xf]
    %v391 = vld [vmem:[%s1 + $0x59c] sm:$0xf]
    %v392 = vld [vmem:[%s1 + $0x5a0] sm:$0xf]
    %v393 = vld [vmem:[%s1 + $0x5a4] sm:$0xf]
    %v394 = vld [vmem:[%s1 + $0x5a8] sm:$0xf]
    %v395 = vld [vmem:[%s1 + $0x5ac] sm:$0xf]
    %v396 = vld [vmem:[%s1 + $0x5b0] sm:$0xf]
    %v397 = vld [vmem:[%s1 + $0x5b4] sm:$0xf]
    %v398 = vld [vmem:[%s1 + $0x5b8] sm:$0xf]
    %v399 = vld [vmem:[%s1 + $0x5bc] sm:$0xf]
    %v400 = vld [vmem:[%s1 + $0x5c0] sm:$0xf]
    %v401 = vld [vmem:[%s1 + $0x5c4] sm:$0xf]
    %v402 = vld [vmem:[%s1 + $0x5c8] sm:$0xf]
    %v403 = vld [vmem:[%s1 + $0x5cc] sm:$0xf]
    %v404 = vld [vmem:[%s1 + $0x5d0] sm:$0xf]
    %v405 = vld [vmem:[%s1 + $0x5d4] sm:$0xf]
    %v406 = vld [vmem:[%s1 + $0x5d8] sm:$0xf]
    %v407 = vld [vmem:[%s1 + $0x5dc] sm:$0xf]
    %v408 = vld [vmem:[%s1 + $0x5e0] sm:$0xf]
    %v409 = vld [vmem:[%s1 + $0x5e4] sm:$0xf]
    %v410 = vld [vmem:[%s1 + $0x5e8] sm:$0xf]
    %v411 = vld [vmem:[%s1 + $0x5ec] sm:$0xf]
    %v412 = vld [vmem:[%s1 + $0x5f0] sm:$0xf]
    %v413 = vld [vmem:[%s1 + $0x5f4] sm:$0xf]
    %v414 = vld [vmem:[%s1 + $0x5f8] sm:$0xf]
    %v415 = vld [vmem:[%s1 + $0x5fc] sm:$0xf]
    %v416 = vld [vmem:[%s1 + $0x600] sm:$0xf]
    %v417 = vld [vmem:[%s1 + $0x604] sm:$0xf]
    %v418 = vld [vmem:[%s1 + $0x608] sm:$0xf]
    %v419 = vld [vmem:[%s1 + $0x60c] sm:$0xf]
    %v420 = vld [vmem:[%s1 + $0x610] sm:$0xf]
    %v421 = vld [vmem:[%s1 + $0x614] sm:$0xf]
    %v422 = vld [vmem:[%s1 + $0x618] sm:$0xf]
    %v423 = vld [vmem:[%s1 + $0x61c] sm:$0xf]
    %v424 = vld [vmem:[%s1 + $0x620] sm:$0xf]
    %v425 = vld [vmem:[%s1 + $0x624] sm:$0xf]
    %v426 = vld [vmem:[%s1 + $0x628] sm:$0xf]
    %v427 = vld [vmem:[%s1 + $0x62c] sm:$0xf]
    %v428 = vld [vmem:[%s1 + $0x630] sm:$0xf]
    %v429 = vld [vmem:[%s1 + $0x634] sm:$0xf]
    %v430 = vld [vmem:[%s1 + $0x638] sm:$0xf]
    %v431 = vld [vmem:[%s1 + $0x63c] sm:$0xf]
    %v432 = vld [vmem:[%s2] sm:$0x1]
    %v434 = vlaneseq
    %v435 = vshrl.u32 %v434, 7
    %v436 = vsub.s32 0, %v435
    %v437 = vrot.slane %v432, %v436
    %v443 = vcombine.high %v28, %v28
    %v445 = vunpack.c.l.s4 1966171168
    %v446 = vunpack.c.0.s8 %v445
    %v447 = vlaneseq
    %v448 = vshrl.u32 %v447, 7
    %v449 = vsub.s32 %v446, %v448
    %v450 = vrot.slane %v28, %v449
    %v452 = vunpack.c.l.s4 1966171168
    %v453 = vunpack.c.0.s8 %v452
    %v454 = vlaneseq
    %v455 = vshrl.u32 %v454, 7
    %v456 = vsub.s32 %v453, %v455
    %v457 = vrot.slane %v443, %v456
    %v458 = vcombine.high %v450, %v450
    %v459 = vcombine.high %v457, %v457
    %v461 = vunpack.c.l.s4 1966171168
    %v462 = vunpack.c.0.s8 %v461
    %v463 = vlaneseq
    %v464 = vshrl.u32 %v463, 7
    %v465 = vsub.s32 %v462, %v464
    %v466 = vrot.slane %v450, %v465
    %v468 = vunpack.c.l.s4 1966171168
    %v469 = vunpack.c.0.s8 %v468
    %v470 = vlaneseq
    %v471 = vshrl.u32 %v470, 7
    %v472 = vsub.s32 %v469, %v471
    %v473 = vrot.slane %v457, %v472
    %v475 = vunpack.c.l.s4 1966171168
    %v476 = vunpack.c.0.s8 %v475
    %v477 = vlaneseq
    %v478 = vshrl.u32 %v477, 7
    %v479 = vsub.s32 %v476, %v478
    %v480 = vrot.slane %v458, %v479
    %v482 = vunpack.c.l.s4 1966171168
    %v483 = vunpack.c.0.s8 %v482
    %v484 = vlaneseq
    %v485 = vshrl.u32 %v484, 7
    %v486 = vsub.s32 %v483, %v485
    %v487 = vrot.slane %v459, %v486
    %v488 = vcombine.high %v466, %v466
    %v489 = vcombine.high %v473, %v473
    %v490 = vcombine.high %v480, %v480
    %v491 = vcombine.high %v487, %v487
    %v492 = vcombine.high %v29, %v29
    %v494 = vunpack.c.l.s4 1966171168
    %v495 = vunpack.c.0.s8 %v494
    %v496 = vlaneseq
    %v497 = vshrl.u32 %v496, 7
    %v498 = vsub.s32 %v495, %v497
    %v499 = vrot.slane %v29, %v498
    %v501 = vunpack.c.l.s4 1966171168
    %v502 = vunpack.c.0.s8 %v501
    %v503 = vlaneseq
    %v504 = vshrl.u32 %v503, 7
    %v505 = vsub.s32 %v502, %v504
    %v506 = vrot.slane %v492, %v505
    %v507 = vcombine.high %v499, %v499
    %v508 = vcombine.high %v506, %v506
    %v510 = vunpack.c.l.s4 1966171168
    %v511 = vunpack.c.0.s8 %v510
    %v512 = vlaneseq
    %v513 = vshrl.u32 %v512, 7
    %v514 = vsub.s32 %v511, %v513
    %v515 = vrot.slane %v499, %v514
    %v517 = vunpack.c.l.s4 1966171168
    %v518 = vunpack.c.0.s8 %v517
    %v519 = vlaneseq
    %v520 = vshrl.u32 %v519, 7
    %v521 = vsub.s32 %v518, %v520
    %v522 = vrot.slane %v506, %v521
    %v524 = vunpack.c.l.s4 1966171168
    %v525 = vunpack.c.0.s8 %v524
    %v526 = vlaneseq
    %v527 = vshrl.u32 %v526, 7
    %v528 = vsub.s32 %v525, %v527
    %v529 = vrot.slane %v507, %v528
    %v531 = vunpack.c.l.s4 1966171168
    %v532 = vunpack.c.0.s8 %v531
    %v533 = vlaneseq
    %v534 = vshrl.u32 %v533, 7
    %v535 = vsub.s32 %v532, %v534
    %v536 = vrot.slane %v508, %v535
    %v537 = vcombine.high %v515, %v515
    %v538 = vcombine.high %v522, %v522
    %v539 = vcombine.high %v529, %v529
    %v540 = vcombine.high %v536, %v536
    %v541 = vcombine.high %v30, %v30
    %v543 = vunpack.c.l.s4 1966171168
    %v544 = vunpack.c.0.s8 %v543
    %v545 = vlaneseq
    %v546 = vshrl.u32 %v545, 7
    %v547 = vsub.s32 %v544, %v546
    %v548 = vrot.slane %v30, %v547
    %v550 = vunpack.c.l.s4 1966171168
    %v551 = vunpack.c.0.s8 %v550
    %v552 = vlaneseq
    %v553 = vshrl.u32 %v552, 7
    %v554 = vsub.s32 %v551, %v553
    %v555 = vrot.slane %v541, %v554
    %v556 = vcombine.high %v548, %v548
    %v557 = vcombine.high %v555, %v555
    %v559 = vunpack.c.l.s4 1966171168
    %v560 = vunpack.c.0.s8 %v559
    %v561 = vlaneseq
    %v562 = vshrl.u32 %v561, 7
    %v563 = vsub.s32 %v560, %v562
    %v564 = vrot.slane %v548, %v563
    %v566 = vunpack.c.l.s4 1966171168
    %v567 = vunpack.c.0.s8 %v566
    %v568 = vlaneseq
    %v569 = vshrl.u32 %v568, 7
    %v570 = vsub.s32 %v567, %v569
    %v571 = vrot.slane %v555, %v570
    %v573 = vunpack.c.l.s4 1966171168
    %v574 = vunpack.c.0.s8 %v573
    %v575 = vlaneseq
    %v576 = vshrl.u32 %v575, 7
    %v577 = vsub.s32 %v574, %v576
    %v578 = vrot.slane %v556, %v577
    %v580 = vunpack.c.l.s4 1966171168
    %v581 = vunpack.c.0.s8 %v580
    %v582 = vlaneseq
    %v583 = vshrl.u32 %v582, 7
    %v584 = vsub.s32 %v581, %v583
    %v585 = vrot.slane %v557, %v584
    %v586 = vcombine.high %v564, %v564
    %v587 = vcombine.high %v571, %v571
    %v588 = vcombine.high %v578, %v578
    %v589 = vcombine.high %v585, %v585
    %v591 = vunpack.c.l.s4 1966171168
    %v592 = vunpack.c.0.s8 %v591
    %v593 = vlaneseq
    %v594 = vshrl.u32 %v593, 7
    %v595 = vsub.s32 %v592, %v594
    %v596 = vrot.slane %v31, %v595
    %v598 = vunpack.c.l.s4 1966171168
    %v599 = vunpack.c.0.s8 %v598
    %v600 = vlaneseq
    %v601 = vshrl.u32 %v600, 7
    %v602 = vsub.s32 %v599, %v601
    %v603 = vrot.slane %v596, %v602
    %v1029 = vunpack.c.l.b16 %v32
    %v1030 = vunpack.c.l.b16 %v33
    %v1031 = vunpack.c.l.b16 %v34
    %v1032 = vunpack.c.l.b16 %v35
    %v1033 = vunpack.c.l.b16 %v36
    %v1034 = vunpack.c.l.b16 %v37
    %v1035 = vunpack.c.l.b16 %v38
    %v1036 = vunpack.c.l.b16 %v39
    %v1037 = vunpack.c.l.b16 %v40
    %v1038 = vunpack.c.l.b16 %v41
    %v1039 = vunpack.c.l.b16 %v42
    %v1040 = vunpack.c.l.b16 %v43
    %v1041 = vunpack.c.l.b16 %v44
    %v1042 = vunpack.c.l.b16 %v45
    %v1043 = vunpack.c.l.b16 %v46
    %v1044 = vunpack.c.l.b16 %v47
    %v1045 = vunpack.c.l.b16 %v48
    %v1046 = vunpack.c.l.b16 %v49
    %v1047 = vunpack.c.l.b16 %v50
    %v1048 = vunpack.c.l.b16 %v51
    %v1049 = vunpack.c.l.b16 %v52
    %v1050 = vunpack.c.l.b16 %v53
    %v1051 = vunpack.c.l.b16 %v54
    %v1052 = vunpack.c.l.b16 %v55
    %v1053 = vunpack.c.l.b16 %v56
    %v1054 = vunpack.c.l.b16 %v57
    %v1055 = vunpack.c.l.b16 %v58
    %v1056 = vunpack.c.l.b16 %v59
    %v1057 = vunpack.c.l.b16 %v60
    %v1058 = vunpack.c.l.b16 %v61
    %v1059 = vunpack.c.l.b16 %v62
    %v1060 = vunpack.c.l.b16 %v63
    %v1061 = vunpack.c.l.b16 %v64
    %v1062 = vunpack.c.l.b16 %v65
    %v1063 = vunpack.c.l.b16 %v66
    %v1064 = vunpack.c.l.b16 %v67
    %v1065 = vunpack.c.l.b16 %v68
    %v1066 = vunpack.c.l.b16 %v69
    %v1067 = vunpack.c.l.b16 %v70
    %v1068 = vunpack.c.l.b16 %v71
    %v1069 = vunpack.c.l.b16 %v72
    %v1070 = vunpack.c.l.b16 %v73
    %v1071 = vunpack.c.l.b16 %v74
    %v1072 = vunpack.c.l.b16 %v75
    %v1073 = vunpack.c.l.b16 %v76
    %v1074 = vunpack.c.l.b16 %v77
    %v1075 = vunpack.c.l.b16 %v78
    %v1076 = vunpack.c.l.b16 %v79
    %v1077 = vunpack.c.l.b16 %v80
    %v1078 = vunpack.c.l.b16 %v81
    %v1079 = vunpack.c.l.b16 %v82
    %v1080 = vunpack.c.l.b16 %v83
    %v1081 = vunpack.c.l.b16 %v84
    %v1082 = vunpack.c.l.b16 %v85
    %v1083 = vunpack.c.l.b16 %v86
    %v1084 = vunpack.c.l.b16 %v87
    %v1085 = vunpack.c.l.b16 %v88
    %v1086 = vunpack.c.l.b16 %v89
    %v1087 = vunpack.c.l.b16 %v90
    %v1088 = vunpack.c.l.b16 %v91
    %v1089 = vunpack.c.l.b16 %v92
    %v1090 = vunpack.c.l.b16 %v93
    %v1091 = vunpack.c.l.b16 %v94
    %v1092 = vunpack.c.l.b16 %v95
    %v1093 = vunpack.c.l.b16 %v96
    %v1094 = vunpack.c.l.b16 %v97
    %v1095 = vunpack.c.l.b16 %v98
    %v1096 = vunpack.c.l.b16 %v99
    %v1097 = vunpack.c.l.b16 %v100
    %v1098 = vunpack.c.l.b16 %v101
    %v1099 = vunpack.c.l.b16 %v102
    %v1100 = vunpack.c.l.b16 %v103
    %v1101 = vunpack.c.l.b16 %v104
    %v1102 = vunpack.c.l.b16 %v105
    %v1103 = vunpack.c.l.b16 %v106
    %v1104 = vunpack.c.l.b16 %v107
    %v1105 = vunpack.c.l.b16 %v108
    %v1106 = vunpack.c.l.b16 %v109
    %v1107 = vunpack.c.l.b16 %v110
    %v1108 = vunpack.c.l.b16 %v111
    %v1109 = vunpack.c.l.b16 %v112
    %v1110 = vunpack.c.l.b16 %v113
    %v1111 = vunpack.c.l.b16 %v114
    %v1112 = vunpack.c.l.b16 %v115
    %v1113 = vunpack.c.l.b16 %v116
    %v1114 = vunpack.c.l.b16 %v117
    %v1115 = vunpack.c.l.b16 %v118
    %v1116 = vunpack.c.l.b16 %v119
    %v1117 = vunpack.c.l.b16 %v120
    %v1118 = vunpack.c.l.b16 %v121
    %v1119 = vunpack.c.l.b16 %v122
    %v1120 = vunpack.c.l.b16 %v123
    %v1121 = vunpack.c.l.b16 %v124
    %v1122 = vunpack.c.l.b16 %v125
    %v1123 = vunpack.c.l.b16 %v126
    %v1124 = vunpack.c.l.b16 %v127
    %v1125 = vunpack.c.l.b16 %v128
    %v1126 = vunpack.c.l.b16 %v129
    %v1127 = vunpack.c.l.b16 %v130
    %v1128 = vunpack.c.l.b16 %v131
    %v1129 = vunpack.c.l.b16 %v132
    %v1130 = vunpack.c.l.b16 %v133
    %v1131 = vunpack.c.l.b16 %v134
    %v1132 = vunpack.c.l.b16 %v135
    %v1133 = vunpack.c.l.b16 %v136
    %v1134 = vunpack.c.l.b16 %v137
    %v1135 = vunpack.c.l.b16 %v138
    %v1136 = vunpack.c.l.b16 %v139
    %v1137 = vunpack.c.l.b16 %v140
    %v1138 = vunpack.c.l.b16 %v141
    %v1139 = vunpack.c.l.b16 %v142
    %v1140 = vunpack.c.l.b16 %v143
    %v1141 = vunpack.c.l.b16 %v144
    %v1142 = vunpack.c.l.b16 %v145
    %v1143 = vunpack.c.l.b16 %v146
    %v1144 = vunpack.c.l.b16 %v147
    %v1145 = vunpack.c.l.b16 %v148
    %v1146 = vunpack.c.l.b16 %v149
    %v1147 = vunpack.c.l.b16 %v150
    %v1148 = vunpack.c.l.b16 %v151
    %v1149 = vunpack.c.l.b16 %v152
    %v1150 = vunpack.c.l.b16 %v153
    %v1151 = vunpack.c.l.b16 %v154
    %v1152 = vunpack.c.l.b16 %v155
    %v1153 = vunpack.c.l.b16 %v156
    %v1154 = vunpack.c.l.b16 %v157
    %v1155 = vunpack.c.l.b16 %v158
    %v1156 = vunpack.c.l.b16 %v159
    %v1157 = vunpack.c.l.b16 %v160
    %v1158 = vunpack.c.l.b16 %v161
    %v1159 = vunpack.c.l.b16 %v162
    %v1160 = vunpack.c.l.b16 %v163
    %v1161 = vunpack.c.l.b16 %v164
    %v1162 = vunpack.c.l.b16 %v165
    %v1163 = vunpack.c.l.b16 %v166
    %v1164 = vunpack.c.l.b16 %v167
    %v1165 = vunpack.c.l.b16 %v168
    %v1166 = vunpack.c.l.b16 %v169
    %v1167 = vunpack.c.l.b16 %v170
    %v1168 = vunpack.c.l.b16 %v171
    %v1169 = vunpack.c.l.b16 %v172
    %v1170 = vunpack.c.l.b16 %v173
    %v1171 = vunpack.c.l.b16 %v174
    %v1172 = vunpack.c.l.b16 %v175
    %v1173 = vunpack.c.l.b16 %v176
    %v1174 = vunpack.c.l.b16 %v177
    %v1175 = vunpack.c.l.b16 %v178
    %v1176 = vunpack.c.l.b16 %v179
    %v1177 = vunpack.c.l.b16 %v180
    %v1178 = vunpack.c.l.b16 %v181
    %v1179 = vunpack.c.l.b16 %v182
    %v1180 = vunpack.c.l.b16 %v183
    %v1181 = vunpack.c.l.b16 %v184
    %v1182 = vunpack.c.l.b16 %v185
    %v1183 = vunpack.c.l.b16 %v186
    %v1184 = vunpack.c.l.b16 %v187
    %v1185 = vunpack.c.l.b16 %v188
    %v1186 = vunpack.c.l.b16 %v189
    %v1187 = vunpack.c.l.b16 %v190
    %v1188 = vunpack.c.l.b16 %v191
    %v1189 = vunpack.c.l.b16 %v192
    %v1190 = vunpack.c.l.b16 %v193
    %v1191 = vunpack.c.l.b16 %v194
    %v1192 = vunpack.c.l.b16 %v195
    %v1193 = vunpack.c.l.b16 %v196
    %v1194 = vunpack.c.l.b16 %v197
    %v1195 = vunpack.c.l.b16 %v198
    %v1196 = vunpack.c.l.b16 %v199
    %v1197 = vunpack.c.l.b16 %v200
    %v1198 = vunpack.c.l.b16 %v201
    %v1199 = vunpack.c.l.b16 %v202
    %v1200 = vunpack.c.l.b16 %v203
    %v1201 = vunpack.c.l.b16 %v204
    %v1202 = vunpack.c.l.b16 %v205
    %v1203 = vunpack.c.l.b16 %v206
    %v1204 = vunpack.c.l.b16 %v207
    %v1205 = vunpack.c.l.b16 %v208
    %v1206 = vunpack.c.l.b16 %v209
    %v1207 = vunpack.c.l.b16 %v210
    %v1208 = vunpack.c.l.b16 %v211
    %v1209 = vunpack.c.l.b16 %v212
    %v1210 = vunpack.c.l.b16 %v213
    %v1211 = vunpack.c.l.b16 %v214
    %v1212 = vunpack.c.l.b16 %v215
    %v1213 = vunpack.c.l.b16 %v216
    %v1214 = vunpack.c.l.b16 %v217
    %v1215 = vunpack.c.l.b16 %v218
    %v1216 = vunpack.c.l.b16 %v219
    %v1217 = vunpack.c.l.b16 %v220
    %v1218 = vunpack.c.l.b16 %v221
    %v1219 = vunpack.c.l.b16 %v222
    %v1220 = vunpack.c.l.b16 %v223
    %v1221 = vunpack.c.l.b16 %v224
    %v1222 = vunpack.c.l.b16 %v225
    %v1223 = vunpack.c.l.b16 %v226
    %v1224 = vunpack.c.l.b16 %v227
    %v1225 = vunpack.c.l.b16 %v228
    %v1226 = vunpack.c.l.b16 %v229
    %v1227 = vunpack.c.l.b16 %v230
    %v1228 = vunpack.c.l.b16 %v231
    %v1229 = vunpack.c.l.b16 %v232
    %v1230 = vunpack.c.l.b16 %v233
    %v1231 = vunpack.c.l.b16 %v234
    %v1232 = vunpack.c.l.b16 %v235
    %v1233 = vunpack.c.l.b16 %v236
    %v1234 = vunpack.c.l.b16 %v237
    %v1235 = vunpack.c.l.b16 %v238
    %v1236 = vunpack.c.l.b16 %v239
    %v1237 = vunpack.c.l.b16 %v240
    %v1238 = vunpack.c.l.b16 %v241
    %v1239 = vunpack.c.l.b16 %v242
    %v1240 = vunpack.c.l.b16 %v243
    %v1241 = vunpack.c.l.b16 %v244
    %v1242 = vunpack.c.l.b16 %v245
    %v1243 = vunpack.c.l.b16 %v246
    %v1244 = vunpack.c.l.b16 %v247
    %v1245 = vunpack.c.l.b16 %v248
    %v1246 = vunpack.c.l.b16 %v249
    %v1247 = vunpack.c.l.b16 %v250
    %v1248 = vunpack.c.l.b16 %v251
    %v1249 = vunpack.c.l.b16 %v252
    %v1250 = vunpack.c.l.b16 %v253
    %v1251 = vunpack.c.l.b16 %v254
    %v1252 = vunpack.c.l.b16 %v255
    %v1253 = vunpack.c.l.b16 %v256
    %v1254 = vunpack.c.l.b16 %v257
    %v1255 = vunpack.c.l.b16 %v258
    %v1256 = vunpack.c.l.b16 %v259
    %v1257 = vunpack.c.l.b16 %v260
    %v1258 = vunpack.c.l.b16 %v261
    %v1259 = vunpack.c.l.b16 %v262
    %v1260 = vunpack.c.l.b16 %v263
    %v1261 = vunpack.c.l.b16 %v264
    %v1262 = vunpack.c.l.b16 %v265
    %v1263 = vunpack.c.l.b16 %v266
    %v1264 = vunpack.c.l.b16 %v267
    %v1265 = vunpack.c.l.b16 %v268
    %v1266 = vunpack.c.l.b16 %v269
    %v1267 = vunpack.c.l.b16 %v270
    %v1268 = vunpack.c.l.b16 %v271
    %v1269 = vunpack.c.l.b16 %v272
    %v1270 = vunpack.c.l.b16 %v273
    %v1271 = vunpack.c.l.b16 %v274
    %v1272 = vunpack.c.l.b16 %v275
    %v1273 = vunpack.c.l.b16 %v276
    %v1274 = vunpack.c.l.b16 %v277
    %v1275 = vunpack.c.l.b16 %v278
    %v1276 = vunpack.c.l.b16 %v279
    %v1277 = vunpack.c.l.b16 %v280
    %v1278 = vunpack.c.l.b16 %v281
    %v1279 = vunpack.c.l.b16 %v282
    %v1280 = vunpack.c.l.b16 %v283
    %v1281 = vunpack.c.l.b16 %v284
    %v1282 = vunpack.c.l.b16 %v285
    %v1283 = vunpack.c.l.b16 %v286
    %v1284 = vunpack.c.l.b16 %v287
    %v1285 = vunpack.c.l.b16 %v288
    %v1286 = vunpack.c.l.b16 %v289
    %v1287 = vunpack.c.l.b16 %v290
    %v1288 = vunpack.c.l.b16 %v291
    %v1289 = vunpack.c.l.b16 %v292
    %v1290 = vunpack.c.l.b16 %v293
    %v1291 = vunpack.c.l.b16 %v294
    %v1292 = vunpack.c.l.b16 %v295
    %v1293 = vunpack.c.l.b16 %v296
    %v1294 = vunpack.c.l.b16 %v297
    %v1295 = vunpack.c.l.b16 %v298
    %v1296 = vunpack.c.l.b16 %v299
    %v1297 = vunpack.c.l.b16 %v300
    %v1298 = vunpack.c.l.b16 %v301
    %v1299 = vunpack.c.l.b16 %v302
    %v1300 = vunpack.c.l.b16 %v303
    %v1301 = vunpack.c.l.b16 %v304
    %v1302 = vunpack.c.l.b16 %v305
    %v1303 = vunpack.c.l.b16 %v306
    %v1304 = vunpack.c.l.b16 %v307
    %v1305 = vunpack.c.l.b16 %v308
    %v1306 = vunpack.c.l.b16 %v309
    %v1307 = vunpack.c.l.b16 %v310
    %v1308 = vunpack.c.l.b16 %v311
    %v1309 = vunpack.c.l.b16 %v312
    %v1310 = vunpack.c.l.b16 %v313
    %v1311 = vunpack.c.l.b16 %v314
    %v1312 = vunpack.c.l.b16 %v315
    %v1313 = vunpack.c.l.b16 %v316
    %v1314 = vunpack.c.l.b16 %v317
    %v1315 = vunpack.c.l.b16 %v318
    %v1316 = vunpack.c.l.b16 %v319
    %v1317 = vunpack.c.l.b16 %v320
    %v1318 = vunpack.c.l.b16 %v321
    %v1319 = vunpack.c.l.b16 %v322
    %v1320 = vunpack.c.l.b16 %v323
    %v1321 = vunpack.c.l.b16 %v324
    %v1322 = vunpack.c.l.b16 %v325
    %v1323 = vunpack.c.l.b16 %v326
    %v1324 = vunpack.c.l.b16 %v327
    %v1325 = vunpack.c.l.b16 %v328
    %v1326 = vunpack.c.l.b16 %v329
    %v1327 = vunpack.c.l.b16 %v330
    %v1328 = vunpack.c.l.b16 %v331
    %v1329 = vunpack.c.l.b16 %v332
    %v1330 = vunpack.c.l.b16 %v333
    %v1331 = vunpack.c.l.b16 %v334
    %v1332 = vunpack.c.l.b16 %v335
    %v1333 = vunpack.c.l.b16 %v336
    %v1334 = vunpack.c.l.b16 %v337
    %v1335 = vunpack.c.l.b16 %v338
    %v1336 = vunpack.c.l.b16 %v339
    %v1337 = vunpack.c.l.b16 %v340
    %v1338 = vunpack.c.l.b16 %v341
    %v1339 = vunpack.c.l.b16 %v342
    %v1340 = vunpack.c.l.b16 %v343
    %v1341 = vunpack.c.l.b16 %v344
    %v1342 = vunpack.c.l.b16 %v345
    %v1343 = vunpack.c.l.b16 %v346
    %v1344 = vunpack.c.l.b16 %v347
    %v1345 = vunpack.c.l.b16 %v348
    %v1346 = vunpack.c.l.b16 %v349
    %v1347 = vunpack.c.l.b16 %v350
    %v1348 = vunpack.c.l.b16 %v351
    %v1349 = vunpack.c.l.b16 %v352
    %v1350 = vunpack.c.l.b16 %v353
    %v1351 = vunpack.c.l.b16 %v354
    %v1352 = vunpack.c.l.b16 %v355
    %v1353 = vunpack.c.l.b16 %v356
    %v1354 = vunpack.c.l.b16 %v357
    %v1355 = vunpack.c.l.b16 %v358
    %v1356 = vunpack.c.l.b16 %v359
    %v1357 = vunpack.c.l.b16 %v360
    %v1358 = vunpack.c.l.b16 %v361
    %v1359 = vunpack.c.l.b16 %v362
    %v1360 = vunpack.c.l.b16 %v363
    %v1361 = vunpack.c.l.b16 %v364
    %v1362 = vunpack.c.l.b16 %v365
    %v1363 = vunpack.c.l.b16 %v366
    %v1364 = vunpack.c.l.b16 %v367
    %v1365 = vunpack.c.l.b16 %v368
    %v1366 = vunpack.c.l.b16 %v369
    %v1367 = vunpack.c.l.b16 %v370
    %v1368 = vunpack.c.l.b16 %v371
    %v1369 = vunpack.c.l.b16 %v372
    %v1370 = vunpack.c.l.b16 %v373
    %v1371 = vunpack.c.l.b16 %v374
    %v1372 = vunpack.c.l.b16 %v375
    %v1373 = vunpack.c.l.b16 %v376
    %v1374 = vunpack.c.l.b16 %v377
    %v1375 = vunpack.c.l.b16 %v378
    %v1376 = vunpack.c.l.b16 %v379
    %v1377 = vunpack.c.l.b16 %v380
    %v1378 = vunpack.c.l.b16 %v381
    %v1379 = vunpack.c.l.b16 %v382
    %v1380 = vunpack.c.l.b16 %v383
    %v1381 = vunpack.c.l.b16 %v384
    %v1382 = vunpack.c.l.b16 %v385
    %v1383 = vunpack.c.l.b16 %v386
    %v1384 = vunpack.c.l.b16 %v387
    %v1385 = vunpack.c.l.b16 %v388
    %v1386 = vunpack.c.l.b16 %v389
    %v1387 = vunpack.c.l.b16 %v390
    %v1388 = vunpack.c.l.b16 %v391
    %v1389 = vunpack.c.l.b16 %v392
    %v1390 = vunpack.c.l.b16 %v393
    %v1391 = vunpack.c.l.b16 %v394
    %v1392 = vunpack.c.l.b16 %v395
    %v1393 = vunpack.c.l.b16 %v396
    %v1394 = vunpack.c.l.b16 %v397
    %v1395 = vunpack.c.l.b16 %v398
    %v1396 = vunpack.c.l.b16 %v399
    %v1397 = vunpack.c.l.b16 %v400
    %v1398 = vunpack.c.l.b16 %v401
    %v1399 = vunpack.c.l.b16 %v402
    %v1400 = vunpack.c.l.b16 %v403
    %v1401 = vunpack.c.l.b16 %v404
    %v1402 = vunpack.c.l.b16 %v405
    %v1403 = vunpack.c.l.b16 %v406
    %v1404 = vunpack.c.l.b16 %v407
    %v1405 = vunpack.c.l.b16 %v408
    %v1406 = vunpack.c.l.b16 %v409
    %v1407 = vunpack.c.l.b16 %v410
    %v1408 = vunpack.c.l.b16 %v411
    %v1409 = vunpack.c.l.b16 %v412
    %v1410 = vunpack.c.l.b16 %v413
    %v1411 = vunpack.c.l.b16 %v414
    %v1412 = vunpack.c.l.b16 %v415
    %v1413 = vunpack.c.l.b16 %v416
    %v1414 = vunpack.c.l.b16 %v417
    %v1415 = vunpack.c.l.b16 %v418
    %v1416 = vunpack.c.l.b16 %v419
    %v1417 = vunpack.c.l.b16 %v420
    %v1418 = vunpack.c.l.b16 %v421
    %v1419 = vunpack.c.l.b16 %v422
    %v1420 = vunpack.c.l.b16 %v423
    %v1421 = vunpack.c.l.b16 %v424
    %v1422 = vunpack.c.l.b16 %v425
    %v1423 = vunpack.c.l.b16 %v426
    %v1424 = vunpack.c.l.b16 %v427
    %v1425 = vunpack.c.l.b16 %v428
    %v1426 = vunpack.c.l.b16 %v429
    %v1427 = vunpack.c.l.b16 %v430
    %v1428 = vunpack.c.l.b16 %v431
    %v1429 = vpack.c.b16 %v1030, %v1029
    %v1430 = vpack.c.b16 %v1032, %v1031
    %v1431 = vpack.c.b16 %v1034, %v1033
    %v1432 = vpack.c.b16 %v1036, %v1035
    %v1433 = vpack.c.b16 %v1038, %v1037
    %v1434 = vpack.c.b16 %v1040, %v1039
    %v1435 = vpack.c.b16 %v1042, %v1041
    %v1436 = vpack.c.b16 %v1044, %v1043
    %v1437 = vpack.c.b16 %v1046, %v1045
    %v1438 = vpack.c.b16 %v1048, %v1047
    %v1439 = vpack.c.b16 %v1050, %v1049
    %v1440 = vpack.c.b16 %v1052, %v1051
    %v1441 = vpack.c.b16 %v1054, %v1053
    %v1442 = vpack.c.b16 %v1056, %v1055
    %v1443 = vpack.c.b16 %v1058, %v1057
    %v1444 = vpack.c.b16 %v1060, %v1059
    %v1445 = vpack.c.b16 %v1062, %v1061
    %v1446 = vpack.c.b16 %v1064, %v1063
    %v1447 = vpack.c.b16 %v1066, %v1065
    %v1448 = vpack.c.b16 %v1068, %v1067
    %v1449 = vpack.c.b16 %v1070, %v1069
    %v1450 = vpack.c.b16 %v1072, %v1071
    %v1451 = vpack.c.b16 %v1074, %v1073
    %v1452 = vpack.c.b16 %v1076, %v1075
    %v1453 = vpack.c.b16 %v1078, %v1077
    %v1454 = vpack.c.b16 %v1080, %v1079
    %v1455 = vpack.c.b16 %v1082, %v1081
    %v1456 = vpack.c.b16 %v1084, %v1083
    %v1457 = vpack.c.b16 %v1086, %v1085
    %v1458 = vpack.c.b16 %v1088, %v1087
    %v1459 = vpack.c.b16 %v1090, %v1089
    %v1460 = vpack.c.b16 %v1092, %v1091
    %v1461 = vpack.c.b16 %v1094, %v1093
    %v1462 = vpack.c.b16 %v1096, %v1095
    %v1463 = vpack.c.b16 %v1098, %v1097
    %v1464 = vpack.c.b16 %v1100, %v1099
    %v1465 = vpack.c.b16 %v1102, %v1101
    %v1466 = vpack.c.b16 %v1104, %v1103
    %v1467 = vpack.c.b16 %v1106, %v1105
    %v1468 = vpack.c.b16 %v1108, %v1107
    %v1469 = vpack.c.b16 %v1110, %v1109
    %v1470 = vpack.c.b16 %v1112, %v1111
    %v1471 = vpack.c.b16 %v1114, %v1113
    %v1472 = vpack.c.b16 %v1116, %v1115
    %v1473 = vpack.c.b16 %v1118, %v1117
    %v1474 = vpack.c.b16 %v1120, %v1119
    %v1475 = vpack.c.b16 %v1122, %v1121
    %v1476 = vpack.c.b16 %v1124, %v1123
    %v1477 = vpack.c.b16 %v1126, %v1125
    %v1478 = vpack.c.b16 %v1128, %v1127
    %v1479 = vpack.c.b16 %v1130, %v1129
    %v1480 = vpack.c.b16 %v1132, %v1131
    %v1481 = vpack.c.b16 %v1134, %v1133
    %v1482 = vpack.c.b16 %v1136, %v1135
    %v1483 = vpack.c.b16 %v1138, %v1137
    %v1484 = vpack.c.b16 %v1140, %v1139
    %v1485 = vpack.c.b16 %v1142, %v1141
    %v1486 = vpack.c.b16 %v1144, %v1143
    %v1487 = vpack.c.b16 %v1146, %v1145
    %v1488 = vpack.c.b16 %v1148, %v1147
    %v1489 = vpack.c.b16 %v1150, %v1149
    %v1490 = vpack.c.b16 %v1152, %v1151
    %v1491 = vpack.c.b16 %v1154, %v1153
    %v1492 = vpack.c.b16 %v1156, %v1155
    %v1493 = vpack.c.b16 %v1158, %v1157
    %v1494 = vpack.c.b16 %v1160, %v1159
    %v1495 = vpack.c.b16 %v1162, %v1161
    %v1496 = vpack.c.b16 %v1164, %v1163
    %v1497 = vpack.c.b16 %v1166, %v1165
    %v1498 = vpack.c.b16 %v1168, %v1167
    %v1499 = vpack.c.b16 %v1170, %v1169
    %v1500 = vpack.c.b16 %v1172, %v1171
    %v1501 = vpack.c.b16 %v1174, %v1173
    %v1502 = vpack.c.b16 %v1176, %v1175
    %v1503 = vpack.c.b16 %v1178, %v1177
    %v1504 = vpack.c.b16 %v1180, %v1179
    %v1505 = vpack.c.b16 %v1182, %v1181
    %v1506 = vpack.c.b16 %v1184, %v1183
    %v1507 = vpack.c.b16 %v1186, %v1185
    %v1508 = vpack.c.b16 %v1188, %v1187
    %v1509 = vpack.c.b16 %v1190, %v1189
    %v1510 = vpack.c.b16 %v1192, %v1191
    %v1511 = vpack.c.b16 %v1194, %v1193
    %v1512 = vpack.c.b16 %v1196, %v1195
    %v1513 = vpack.c.b16 %v1198, %v1197
    %v1514 = vpack.c.b16 %v1200, %v1199
    %v1515 = vpack.c.b16 %v1202, %v1201
    %v1516 = vpack.c.b16 %v1204, %v1203
    %v1517 = vpack.c.b16 %v1206, %v1205
    %v1518 = vpack.c.b16 %v1208, %v1207
    %v1519 = vpack.c.b16 %v1210, %v1209
    %v1520 = vpack.c.b16 %v1212, %v1211
    %v1521 = vpack.c.b16 %v1214, %v1213
    %v1522 = vpack.c.b16 %v1216, %v1215
    %v1523 = vpack.c.b16 %v1218, %v1217
    %v1524 = vpack.c.b16 %v1220, %v1219
    %v1525 = vpack.c.b16 %v1222, %v1221
    %v1526 = vpack.c.b16 %v1224, %v1223
    %v1527 = vpack.c.b16 %v1226, %v1225
    %v1528 = vpack.c.b16 %v1228, %v1227
    %v1529 = vpack.c.b16 %v1230, %v1229
    %v1530 = vpack.c.b16 %v1232, %v1231
    %v1531 = vpack.c.b16 %v1234, %v1233
    %v1532 = vpack.c.b16 %v1236, %v1235
    %v1533 = vpack.c.b16 %v1238, %v1237
    %v1534 = vpack.c.b16 %v1240, %v1239
    %v1535 = vpack.c.b16 %v1242, %v1241
    %v1536 = vpack.c.b16 %v1244, %v1243
    %v1537 = vpack.c.b16 %v1246, %v1245
    %v1538 = vpack.c.b16 %v1248, %v1247
    %v1539 = vpack.c.b16 %v1250, %v1249
    %v1540 = vpack.c.b16 %v1252, %v1251
    %v1541 = vpack.c.b16 %v1254, %v1253
    %v1542 = vpack.c.b16 %v1256, %v1255
    %v1543 = vpack.c.b16 %v1258, %v1257
    %v1544 = vpack.c.b16 %v1260, %v1259
    %v1545 = vpack.c.b16 %v1262, %v1261
    %v1546 = vpack.c.b16 %v1264, %v1263
    %v1547 = vpack.c.b16 %v1266, %v1265
    %v1548 = vpack.c.b16 %v1268, %v1267
    %v1549 = vpack.c.b16 %v1270, %v1269
    %v1550 = vpack.c.b16 %v1272, %v1271
    %v1551 = vpack.c.b16 %v1274, %v1273
    %v1552 = vpack.c.b16 %v1276, %v1275
    %v1553 = vpack.c.b16 %v1278, %v1277
    %v1554 = vpack.c.b16 %v1280, %v1279
    %v1555 = vpack.c.b16 %v1282, %v1281
    %v1556 = vpack.c.b16 %v1284, %v1283
    %v1557 = vpack.c.b16 %v1286, %v1285
    %v1558 = vpack.c.b16 %v1288, %v1287
    %v1559 = vpack.c.b16 %v1290, %v1289
    %v1560 = vpack.c.b16 %v1292, %v1291
    %v1561 = vpack.c.b16 %v1294, %v1293
    %v1562 = vpack.c.b16 %v1296, %v1295
    %v1563 = vpack.c.b16 %v1298, %v1297
    %v1564 = vpack.c.b16 %v1300, %v1299
    %v1565 = vpack.c.b16 %v1302, %v1301
    %v1566 = vpack.c.b16 %v1304, %v1303
    %v1567 = vpack.c.b16 %v1306, %v1305
    %v1568 = vpack.c.b16 %v1308, %v1307
    %v1569 = vpack.c.b16 %v1310, %v1309
    %v1570 = vpack.c.b16 %v1312, %v1311
    %v1571 = vpack.c.b16 %v1314, %v1313
    %v1572 = vpack.c.b16 %v1316, %v1315
    %v1573 = vpack.c.b16 %v1318, %v1317
    %v1574 = vpack.c.b16 %v1320, %v1319
    %v1575 = vpack.c.b16 %v1322, %v1321
    %v1576 = vpack.c.b16 %v1324, %v1323
    %v1577 = vpack.c.b16 %v1326, %v1325
    %v1578 = vpack.c.b16 %v1328, %v1327
    %v1579 = vpack.c.b16 %v1330, %v1329
    %v1580 = vpack.c.b16 %v1332, %v1331
    %v1581 = vpack.c.b16 %v1334, %v1333
    %v1582 = vpack.c.b16 %v1336, %v1335
    %v1583 = vpack.c.b16 %v1338, %v1337
    %v1584 = vpack.c.b16 %v1340, %v1339
    %v1585 = vpack.c.b16 %v1342, %v1341
    %v1586 = vpack.c.b16 %v1344, %v1343
    %v1587 = vpack.c.b16 %v1346, %v1345
    %v1588 = vpack.c.b16 %v1348, %v1347
    %v1589 = vpack.c.b16 %v1350, %v1349
    %v1590 = vpack.c.b16 %v1352, %v1351
    %v1591 = vpack.c.b16 %v1354, %v1353
    %v1592 = vpack.c.b16 %v1356, %v1355
    %v1593 = vpack.c.b16 %v1358, %v1357
    %v1594 = vpack.c.b16 %v1360, %v1359
    %v1595 = vpack.c.b16 %v1362, %v1361
    %v1596 = vpack.c.b16 %v1364, %v1363
    %v1597 = vpack.c.b16 %v1366, %v1365
    %v1598 = vpack.c.b16 %v1368, %v1367
    %v1599 = vpack.c.b16 %v1370, %v1369
    %v1600 = vpack.c.b16 %v1372, %v1371
    %v1601 = vpack.c.b16 %v1374, %v1373
    %v1602 = vpack.c.b16 %v1376, %v1375
    %v1603 = vpack.c.b16 %v1378, %v1377
    %v1604 = vpack.c.b16 %v1380, %v1379
    %v1605 = vpack.c.b16 %v1382, %v1381
    %v1606 = vpack.c.b16 %v1384, %v1383
    %v1607 = vpack.c.b16 %v1386, %v1385
    %v1608 = vpack.c.b16 %v1388, %v1387
    %v1609 = vpack.c.b16 %v1390, %v1389
    %v1610 = vpack.c.b16 %v1392, %v1391
    %v1611 = vpack.c.b16 %v1394, %v1393
    %v1612 = vpack.c.b16 %v1396, %v1395
    %v1613 = vpack.c.b16 %v1398, %v1397
    %v1614 = vpack.c.b16 %v1400, %v1399
    %v1615 = vpack.c.b16 %v1402, %v1401
    %v1616 = vpack.c.b16 %v1404, %v1403
    %v1617 = vpack.c.b16 %v1406, %v1405
    %v1618 = vpack.c.b16 %v1408, %v1407
    %v1619 = vpack.c.b16 %v1410, %v1409
    %v1620 = vpack.c.b16 %v1412, %v1411
    %v1621 = vpack.c.b16 %v1414, %v1413
    %v1622 = vpack.c.b16 %v1416, %v1415
    %v1623 = vpack.c.b16 %v1418, %v1417
    %v1624 = vpack.c.b16 %v1420, %v1419
    %v1625 = vpack.c.b16 %v1422, %v1421
    %v1626 = vpack.c.b16 %v1424, %v1423
    %v1627 = vpack.c.b16 %v1426, %v1425
    %v1628 = vpack.c.b16 %v1428, %v1427
    %1829 = vmatprep.subr.bf16.mxu0 0
    %1830 = vmatpush1.bf16.msra.mxu0 %v1436
    %1831 = vmatprep.subr.bf16.mxu0 0
    %1832 = vmatpush1.bf16.msra.mxu0 %v1435
    %1833 = vmatprep.subr.bf16.mxu0 0
    %1834 = vmatpush1.bf16.msra.mxu0 %v1434
    %1835 = vmatprep.subr.bf16.mxu0 0
    %1836 = vmatpush1.bf16.msra.mxu0 %v1433
    %1837 = vmatprep.subr.bf16.mxu0 0
    %1838 = vmatpush1.bf16.msra.mxu0 %v1432
    %1839 = vmatprep.subr.bf16.mxu0 0
    %1840 = vmatpush1.bf16.msra.mxu0 %v1431
    %1841 = vmatprep.subr.bf16.mxu0 0
    %1842 = vmatpush1.bf16.msra.mxu0 %v1430
    %1843 = vmatprep.subr.bf16.mxu0 0
    %1844 = vmatpush1.bf16.msra.mxu0 %v1429
    %1845 = vmatprep.subr.bf16.mxu0 0
    %1846 = vmatpush2.bf16.msra.mxu0 %v1444
    %1847 = vmatprep.subr.bf16.mxu0 0
    %1848 = vmatpush2.bf16.msra.mxu0 %v1443
    %1849 = vmatprep.subr.bf16.mxu0 0
    %1850 = vmatpush2.bf16.msra.mxu0 %v1442
    %1851 = vmatprep.subr.bf16.mxu0 0
    %1852 = vmatpush2.bf16.msra.mxu0 %v1441
    %1853 = vmatprep.subr.bf16.mxu0 0
    %1854 = vmatpush2.bf16.msra.mxu0 %v1440
    %1855 = vmatprep.subr.bf16.mxu0 0
    %1856 = vmatpush2.bf16.msra.mxu0 %v1439
    %1857 = vmatprep.subr.bf16.mxu0 0
    %1858 = vmatpush2.bf16.msra.mxu0 %v1438
    %1859 = vmatprep.subr.bf16.mxu0 0
    %1860 = vmatpush2.bf16.msra.mxu0 %v1437
    %1861 = vmatprep.mubr.bf16.mxu0 %v480
    %1862 = vmatmul.mubr.bf16.gmra.mxu0 %v466
    %v1863 = vpop.f32.mrf.mxu0
    %v1864 = vadd.f32 %v437, %v1863
    %v1865 = vpop.f32.mrf.mxu0
    %v1866 = vpop.f32.mrf.mxu0
    %v1867 = vpop.f32.mrf.mxu0
    %1868 = vdwg.mxu0
    %1869 = vmatprep.subr.bf16.mxu0 0
    %1870 = vmatpush1.bf16.msra.mxu0 %v1452
    %1871 = vmatprep.subr.bf16.mxu0 0
    %1872 = vmatpush1.bf16.msra.mxu0 %v1451
    %1873 = vmatprep.subr.bf16.mxu0 0
    %1874 = vmatpush1.bf16.msra.mxu0 %v1450
    %1875 = vmatprep.subr.bf16.mxu0 0
    %1876 = vmatpush1.bf16.msra.mxu0 %v1449
    %1877 = vmatprep.subr.bf16.mxu0 0
    %1878 = vmatpush1.bf16.msra.mxu0 %v1448
    %1879 = vmatprep.subr.bf16.mxu0 0
    %1880 = vmatpush1.bf16.msra.mxu0 %v1447
    %1881 = vmatprep.subr.bf16.mxu0 0
    %1882 = vmatpush1.bf16.msra.mxu0 %v1446
    %1883 = vmatprep.subr.bf16.mxu0 0
    %1884 = vmatpush1.bf16.msra.mxu0 %v1445
    %1885 = vmatprep.subr.bf16.mxu0 0
    %1886 = vmatpush2.bf16.msra.mxu0 %v1460
    %1887 = vmatprep.subr.bf16.mxu0 0
    %1888 = vmatpush2.bf16.msra.mxu0 %v1459
    %1889 = vmatprep.subr.bf16.mxu0 0
    %1890 = vmatpush2.bf16.msra.mxu0 %v1458
    %1891 = vmatprep.subr.bf16.mxu0 0
    %1892 = vmatpush2.bf16.msra.mxu0 %v1457
    %1893 = vmatprep.subr.bf16.mxu0 0
    %1894 = vmatpush2.bf16.msra.mxu0 %v1456
    %1895 = vmatprep.subr.bf16.mxu0 0
    %1896 = vmatpush2.bf16.msra.mxu0 %v1455
    %1897 = vmatprep.subr.bf16.mxu0 0
    %1898 = vmatpush2.bf16.msra.mxu0 %v1454
    %1899 = vmatprep.subr.bf16.mxu0 0
    %1900 = vmatpush2.bf16.msra.mxu0 %v1453
    %1901 = vmatprep.mubr.bf16.mxu0 %v490
    %1902 = vmatmul.mubr.bf16.gmra.mxu0 %v488
    %v1903 = vpop.f32.mrf.mxu0
    %v1904 = vadd.f32 %v1864, %v1903
    %v1905 = vpop.f32.mrf.mxu0
    %v1906 = vpop.f32.mrf.mxu0
    %v1907 = vpop.f32.mrf.mxu0
    %1908 = vdwg.mxu0
    %1909 = vmatprep.subr.bf16.mxu0 0
    %1910 = vmatpush1.bf16.msra.mxu0 %v1468
    %1911 = vmatprep.subr.bf16.mxu0 0
    %1912 = vmatpush1.bf16.msra.mxu0 %v1467
    %1913 = vmatprep.subr.bf16.mxu0 0
    %1914 = vmatpush1.bf16.msra.mxu0 %v1466
    %1915 = vmatprep.subr.bf16.mxu0 0
    %1916 = vmatpush1.bf16.msra.mxu0 %v1465
    %1917 = vmatprep.subr.bf16.mxu0 0
    %1918 = vmatpush1.bf16.msra.mxu0 %v1464
    %1919 = vmatprep.subr.bf16.mxu0 0
    %1920 = vmatpush1.bf16.msra.mxu0 %v1463
    %1921 = vmatprep.subr.bf16.mxu0 0
    %1922 = vmatpush1.bf16.msra.mxu0 %v1462
    %1923 = vmatprep.subr.bf16.mxu0 0
    %1924 = vmatpush1.bf16.msra.mxu0 %v1461
    %1925 = vmatprep.subr.bf16.mxu0 0
    %1926 = vmatpush2.bf16.msra.mxu0 %v1476
    %1927 = vmatprep.subr.bf16.mxu0 0
    %1928 = vmatpush2.bf16.msra.mxu0 %v1475
    %1929 = vmatprep.subr.bf16.mxu0 0
    %1930 = vmatpush2.bf16.msra.mxu0 %v1474
    %1931 = vmatprep.subr.bf16.mxu0 0
    %1932 = vmatpush2.bf16.msra.mxu0 %v1473
    %1933 = vmatprep.subr.bf16.mxu0 0
    %1934 = vmatpush2.bf16.msra.mxu0 %v1472
    %1935 = vmatprep.subr.bf16.mxu0 0
    %1936 = vmatpush2.bf16.msra.mxu0 %v1471
    %1937 = vmatprep.subr.bf16.mxu0 0
    %1938 = vmatpush2.bf16.msra.mxu0 %v1470
    %1939 = vmatprep.subr.bf16.mxu0 0
    %1940 = vmatpush2.bf16.msra.mxu0 %v1469
    %1941 = vmatprep.mubr.bf16.mxu0 %v487
    %1942 = vmatmul.mubr.bf16.gmra.mxu0 %v473
    %v1943 = vpop.f32.mrf.mxu0
    %v1944 = vadd.f32 %v1904, %v1943
    %v1945 = vpop.f32.mrf.mxu0
    %v1946 = vpop.f32.mrf.mxu0
    %v1947 = vpop.f32.mrf.mxu0
    %1948 = vdwg.mxu0
    %1949 = vmatprep.subr.bf16.mxu0 0
    %1950 = vmatpush1.bf16.msra.mxu0 %v1484
    %1951 = vmatprep.subr.bf16.mxu0 0
    %1952 = vmatpush1.bf16.msra.mxu0 %v1483
    %1953 = vmatprep.subr.bf16.mxu0 0
    %1954 = vmatpush1.bf16.msra.mxu0 %v1482
    %1955 = vmatprep.subr.bf16.mxu0 0
    %1956 = vmatpush1.bf16.msra.mxu0 %v1481
    %1957 = vmatprep.subr.bf16.mxu0 0
    %1958 = vmatpush1.bf16.msra.mxu0 %v1480
    %1959 = vmatprep.subr.bf16.mxu0 0
    %1960 = vmatpush1.bf16.msra.mxu0 %v1479
    %1961 = vmatprep.subr.bf16.mxu0 0
    %1962 = vmatpush1.bf16.msra.mxu0 %v1478
    %1963 = vmatprep.subr.bf16.mxu0 0
    %1964 = vmatpush1.bf16.msra.mxu0 %v1477
    %1965 = vmatprep.subr.bf16.mxu0 0
    %1966 = vmatpush2.bf16.msra.mxu0 %v1492
    %1967 = vmatprep.subr.bf16.mxu0 0
    %1968 = vmatpush2.bf16.msra.mxu0 %v1491
    %1969 = vmatprep.subr.bf16.mxu0 0
    %1970 = vmatpush2.bf16.msra.mxu0 %v1490
    %1971 = vmatprep.subr.bf16.mxu0 0
    %1972 = vmatpush2.bf16.msra.mxu0 %v1489
    %1973 = vmatprep.subr.bf16.mxu0 0
    %1974 = vmatpush2.bf16.msra.mxu0 %v1488
    %1975 = vmatprep.subr.bf16.mxu0 0
    %1976 = vmatpush2.bf16.msra.mxu0 %v1487
    %1977 = vmatprep.subr.bf16.mxu0 0
    %1978 = vmatpush2.bf16.msra.mxu0 %v1486
    %1979 = vmatprep.subr.bf16.mxu0 0
    %1980 = vmatpush2.bf16.msra.mxu0 %v1485
    %1981 = vmatprep.mubr.bf16.mxu0 %v491
    %1982 = vmatmul.mubr.bf16.gmra.mxu0 %v489
    %v1983 = vpop.f32.mrf.mxu0
    %v1984 = vadd.f32 %v1944, %v1983
    %v1985 = vpop.f32.mrf.mxu0
    %v1986 = vpop.f32.mrf.mxu0
    %v1987 = vpop.f32.mrf.mxu0
    %1988 = vdwg.mxu0
    %1989 = vmatprep.subr.bf16.mxu0 0
    %1990 = vmatpush1.bf16.msra.mxu0 %v1500
    %1991 = vmatprep.subr.bf16.mxu0 0
    %1992 = vmatpush1.bf16.msra.mxu0 %v1499
    %1993 = vmatprep.subr.bf16.mxu0 0
    %1994 = vmatpush1.bf16.msra.mxu0 %v1498
    %1995 = vmatprep.subr.bf16.mxu0 0
    %1996 = vmatpush1.bf16.msra.mxu0 %v1497
    %1997 = vmatprep.subr.bf16.mxu0 0
    %1998 = vmatpush1.bf16.msra.mxu0 %v1496
    %1999 = vmatprep.subr.bf16.mxu0 0
    %2000 = vmatpush1.bf16.msra.mxu0 %v1495
    %2001 = vmatprep.subr.bf16.mxu0 0
    %2002 = vmatpush1.bf16.msra.mxu0 %v1494
    %2003 = vmatprep.subr.bf16.mxu0 0
    %2004 = vmatpush1.bf16.msra.mxu0 %v1493
    %2005 = vmatprep.subr.bf16.mxu0 0
    %2006 = vmatpush2.bf16.msra.mxu0 %v1508
    %2007 = vmatprep.subr.bf16.mxu0 0
    %2008 = vmatpush2.bf16.msra.mxu0 %v1507
    %2009 = vmatprep.subr.bf16.mxu0 0
    %2010 = vmatpush2.bf16.msra.mxu0 %v1506
    %2011 = vmatprep.subr.bf16.mxu0 0
    %2012 = vmatpush2.bf16.msra.mxu0 %v1505
    %2013 = vmatprep.subr.bf16.mxu0 0
    %2014 = vmatpush2.bf16.msra.mxu0 %v1504
    %2015 = vmatprep.subr.bf16.mxu0 0
    %2016 = vmatpush2.bf16.msra.mxu0 %v1503
    %2017 = vmatprep.subr.bf16.mxu0 0
    %2018 = vmatpush2.bf16.msra.mxu0 %v1502
    %2019 = vmatprep.subr.bf16.mxu0 0
    %2020 = vmatpush2.bf16.msra.mxu0 %v1501
    %2021 = vmatprep.mubr.bf16.mxu0 %v529
    %2022 = vmatmul.mubr.bf16.gmra.mxu0 %v515
    %v2023 = vpop.f32.mrf.mxu0
    %v2024 = vadd.f32 %v1984, %v2023
    %v2025 = vpop.f32.mrf.mxu0
    %v2026 = vpop.f32.mrf.mxu0
    %v2027 = vpop.f32.mrf.mxu0
    %2028 = vdwg.mxu0
    %2029 = vmatprep.subr.bf16.mxu0 0
    %2030 = vmatpush1.bf16.msra.mxu0 %v1516
    %2031 = vmatprep.subr.bf16.mxu0 0
    %2032 = vmatpush1.bf16.msra.mxu0 %v1515
    %2033 = vmatprep.subr.bf16.mxu0 0
    %2034 = vmatpush1.bf16.msra.mxu0 %v1514
    %2035 = vmatprep.subr.bf16.mxu0 0
    %2036 = vmatpush1.bf16.msra.mxu0 %v1513
    %2037 = vmatprep.subr.bf16.mxu0 0
    %2038 = vmatpush1.bf16.msra.mxu0 %v1512
    %2039 = vmatprep.subr.bf16.mxu0 0
    %2040 = vmatpush1.bf16.msra.mxu0 %v1511
    %2041 = vmatprep.subr.bf16.mxu0 0
    %2042 = vmatpush1.bf16.msra.mxu0 %v1510
    %2043 = vmatprep.subr.bf16.mxu0 0
    %2044 = vmatpush1.bf16.msra.mxu0 %v1509
    %2045 = vmatprep.subr.bf16.mxu0 0
    %2046 = vmatpush2.bf16.msra.mxu0 %v1524
    %2047 = vmatprep.subr.bf16.mxu0 0
    %2048 = vmatpush2.bf16.msra.mxu0 %v1523
    %2049 = vmatprep.subr.bf16.mxu0 0
    %2050 = vmatpush2.bf16.msra.mxu0 %v1522
    %2051 = vmatprep.subr.bf16.mxu0 0
    %2052 = vmatpush2.bf16.msra.mxu0 %v1521
    %2053 = vmatprep.subr.bf16.mxu0 0
    %2054 = vmatpush2.bf16.msra.mxu0 %v1520
    %2055 = vmatprep.subr.bf16.mxu0 0
    %2056 = vmatpush2.bf16.msra.mxu0 %v1519
    %2057 = vmatprep.subr.bf16.mxu0 0
    %2058 = vmatpush2.bf16.msra.mxu0 %v1518
    %2059 = vmatprep.subr.bf16.mxu0 0
    %2060 = vmatpush2.bf16.msra.mxu0 %v1517
    %2061 = vmatprep.mubr.bf16.mxu0 %v539
    %2062 = vmatmul.mubr.bf16.gmra.mxu0 %v537
    %v2063 = vpop.f32.mrf.mxu0
    %v2064 = vadd.f32 %v2024, %v2063
    %v2065 = vpop.f32.mrf.mxu0
    %v2066 = vpop.f32.mrf.mxu0
    %v2067 = vpop.f32.mrf.mxu0
    %2068 = vdwg.mxu0
    %2069 = vmatprep.subr.bf16.mxu0 0
    %2070 = vmatpush1.bf16.msra.mxu0 %v1532
    %2071 = vmatprep.subr.bf16.mxu0 0
    %2072 = vmatpush1.bf16.msra.mxu0 %v1531
    %2073 = vmatprep.subr.bf16.mxu0 0
    %2074 = vmatpush1.bf16.msra.mxu0 %v1530
    %2075 = vmatprep.subr.bf16.mxu0 0
    %2076 = vmatpush1.bf16.msra.mxu0 %v1529
    %2077 = vmatprep.subr.bf16.mxu0 0
    %2078 = vmatpush1.bf16.msra.mxu0 %v1528
    %2079 = vmatprep.subr.bf16.mxu0 0
    %2080 = vmatpush1.bf16.msra.mxu0 %v1527
    %2081 = vmatprep.subr.bf16.mxu0 0
    %2082 = vmatpush1.bf16.msra.mxu0 %v1526
    %2083 = vmatprep.subr.bf16.mxu0 0
    %2084 = vmatpush1.bf16.msra.mxu0 %v1525
    %2085 = vmatprep.subr.bf16.mxu0 0
    %2086 = vmatpush2.bf16.msra.mxu0 %v1540
    %2087 = vmatprep.subr.bf16.mxu0 0
    %2088 = vmatpush2.bf16.msra.mxu0 %v1539
    %2089 = vmatprep.subr.bf16.mxu0 0
    %2090 = vmatpush2.bf16.msra.mxu0 %v1538
    %2091 = vmatprep.subr.bf16.mxu0 0
    %2092 = vmatpush2.bf16.msra.mxu0 %v1537
    %2093 = vmatprep.subr.bf16.mxu0 0
    %2094 = vmatpush2.bf16.msra.mxu0 %v1536
    %2095 = vmatprep.subr.bf16.mxu0 0
    %2096 = vmatpush2.bf16.msra.mxu0 %v1535
    %2097 = vmatprep.subr.bf16.mxu0 0
    %2098 = vmatpush2.bf16.msra.mxu0 %v1534
    %2099 = vmatprep.subr.bf16.mxu0 0
    %2100 = vmatpush2.bf16.msra.mxu0 %v1533
    %2101 = vmatprep.mubr.bf16.mxu0 %v536
    %2102 = vmatmul.mubr.bf16.gmra.mxu0 %v522
    %v2103 = vpop.f32.mrf.mxu0
    %v2104 = vadd.f32 %v2064, %v2103
    %v2105 = vpop.f32.mrf.mxu0
    %v2106 = vpop.f32.mrf.mxu0
    %v2107 = vpop.f32.mrf.mxu0
    %2108 = vdwg.mxu0
    %2109 = vmatprep.subr.bf16.mxu0 0
    %2110 = vmatpush1.bf16.msra.mxu0 %v1548
    %2111 = vmatprep.subr.bf16.mxu0 0
    %2112 = vmatpush1.bf16.msra.mxu0 %v1547
    %2113 = vmatprep.subr.bf16.mxu0 0
    %2114 = vmatpush1.bf16.msra.mxu0 %v1546
    %2115 = vmatprep.subr.bf16.mxu0 0
    %2116 = vmatpush1.bf16.msra.mxu0 %v1545
    %2117 = vmatprep.subr.bf16.mxu0 0
    %2118 = vmatpush1.bf16.msra.mxu0 %v1544
    %2119 = vmatprep.subr.bf16.mxu0 0
    %2120 = vmatpush1.bf16.msra.mxu0 %v1543
    %2121 = vmatprep.subr.bf16.mxu0 0
    %2122 = vmatpush1.bf16.msra.mxu0 %v1542
    %2123 = vmatprep.subr.bf16.mxu0 0
    %2124 = vmatpush1.bf16.msra.mxu0 %v1541
    %2125 = vmatprep.subr.bf16.mxu0 0
    %2126 = vmatpush2.bf16.msra.mxu0 %v1556
    %2127 = vmatprep.subr.bf16.mxu0 0
    %2128 = vmatpush2.bf16.msra.mxu0 %v1555
    %2129 = vmatprep.subr.bf16.mxu0 0
    %2130 = vmatpush2.bf16.msra.mxu0 %v1554
    %2131 = vmatprep.subr.bf16.mxu0 0
    %2132 = vmatpush2.bf16.msra.mxu0 %v1553
    %2133 = vmatprep.subr.bf16.mxu0 0
    %2134 = vmatpush2.bf16.msra.mxu0 %v1552
    %2135 = vmatprep.subr.bf16.mxu0 0
    %2136 = vmatpush2.bf16.msra.mxu0 %v1551
    %2137 = vmatprep.subr.bf16.mxu0 0
    %2138 = vmatpush2.bf16.msra.mxu0 %v1550
    %2139 = vmatprep.subr.bf16.mxu0 0
    %2140 = vmatpush2.bf16.msra.mxu0 %v1549
    %2141 = vmatprep.mubr.bf16.mxu0 %v540
    %2142 = vmatmul.mubr.bf16.gmra.mxu0 %v538
    %v2143 = vpop.f32.mrf.mxu0
    %v2144 = vadd.f32 %v2104, %v2143
    %v2145 = vpop.f32.mrf.mxu0
    %v2146 = vpop.f32.mrf.mxu0
    %v2147 = vpop.f32.mrf.mxu0
    %2148 = vdwg.mxu0
    %2149 = vmatprep.subr.bf16.mxu0 0
    %2150 = vmatpush1.bf16.msra.mxu0 %v1564
    %2151 = vmatprep.subr.bf16.mxu0 0
    %2152 = vmatpush1.bf16.msra.mxu0 %v1563
    %2153 = vmatprep.subr.bf16.mxu0 0
    %2154 = vmatpush1.bf16.msra.mxu0 %v1562
    %2155 = vmatprep.subr.bf16.mxu0 0
    %2156 = vmatpush1.bf16.msra.mxu0 %v1561
    %2157 = vmatprep.subr.bf16.mxu0 0
    %2158 = vmatpush1.bf16.msra.mxu0 %v1560
    %2159 = vmatprep.subr.bf16.mxu0 0
    %2160 = vmatpush1.bf16.msra.mxu0 %v1559
    %2161 = vmatprep.subr.bf16.mxu0 0
    %2162 = vmatpush1.bf16.msra.mxu0 %v1558
    %2163 = vmatprep.subr.bf16.mxu0 0
    %2164 = vmatpush1.bf16.msra.mxu0 %v1557
    %2165 = vmatprep.subr.bf16.mxu0 0
    %2166 = vmatpush2.bf16.msra.mxu0 %v1572
    %2167 = vmatprep.subr.bf16.mxu0 0
    %2168 = vmatpush2.bf16.msra.mxu0 %v1571
    %2169 = vmatprep.subr.bf16.mxu0 0
    %2170 = vmatpush2.bf16.msra.mxu0 %v1570
    %2171 = vmatprep.subr.bf16.mxu0 0
    %2172 = vmatpush2.bf16.msra.mxu0 %v1569
    %2173 = vmatprep.subr.bf16.mxu0 0
    %2174 = vmatpush2.bf16.msra.mxu0 %v1568
    %2175 = vmatprep.subr.bf16.mxu0 0
    %2176 = vmatpush2.bf16.msra.mxu0 %v1567
    %2177 = vmatprep.subr.bf16.mxu0 0
    %2178 = vmatpush2.bf16.msra.mxu0 %v1566
    %2179 = vmatprep.subr.bf16.mxu0 0
    %2180 = vmatpush2.bf16.msra.mxu0 %v1565
    %2181 = vmatprep.mubr.bf16.mxu0 %v578
    %2182 = vmatmul.mubr.bf16.gmra.mxu0 %v564
    %v2183 = vpop.f32.mrf.mxu0
    %v2184 = vadd.f32 %v2144, %v2183
    %v2185 = vpop.f32.mrf.mxu0
    %v2186 = vpop.f32.mrf.mxu0
    %v2187 = vpop.f32.mrf.mxu0
    %2188 = vdwg.mxu0
    %2189 = vmatprep.subr.bf16.mxu0 0
    %2190 = vmatpush1.bf16.msra.mxu0 %v1580
    %2191 = vmatprep.subr.bf16.mxu0 0
    %2192 = vmatpush1.bf16.msra.mxu0 %v1579
    %2193 = vmatprep.subr.bf16.mxu0 0
    %2194 = vmatpush1.bf16.msra.mxu0 %v1578
    %2195 = vmatprep.subr.bf16.mxu0 0
    %2196 = vmatpush1.bf16.msra.mxu0 %v1577
    %2197 = vmatprep.subr.bf16.mxu0 0
    %2198 = vmatpush1.bf16.msra.mxu0 %v1576
    %2199 = vmatprep.subr.bf16.mxu0 0
    %2200 = vmatpush1.bf16.msra.mxu0 %v1575
    %2201 = vmatprep.subr.bf16.mxu0 0
    %2202 = vmatpush1.bf16.msra.mxu0 %v1574
    %2203 = vmatprep.subr.bf16.mxu0 0
    %2204 = vmatpush1.bf16.msra.mxu0 %v1573
    %2205 = vmatprep.subr.bf16.mxu0 0
    %2206 = vmatpush2.bf16.msra.mxu0 %v1588
    %2207 = vmatprep.subr.bf16.mxu0 0
    %2208 = vmatpush2.bf16.msra.mxu0 %v1587
    %2209 = vmatprep.subr.bf16.mxu0 0
    %2210 = vmatpush2.bf16.msra.mxu0 %v1586
    %2211 = vmatprep.subr.bf16.mxu0 0
    %2212 = vmatpush2.bf16.msra.mxu0 %v1585
    %2213 = vmatprep.subr.bf16.mxu0 0
    %2214 = vmatpush2.bf16.msra.mxu0 %v1584
    %2215 = vmatprep.subr.bf16.mxu0 0
    %2216 = vmatpush2.bf16.msra.mxu0 %v1583
    %2217 = vmatprep.subr.bf16.mxu0 0
    %2218 = vmatpush2.bf16.msra.mxu0 %v1582
    %2219 = vmatprep.subr.bf16.mxu0 0
    %2220 = vmatpush2.bf16.msra.mxu0 %v1581
    %2221 = vmatprep.mubr.bf16.mxu0 %v588
    %2222 = vmatmul.mubr.bf16.gmra.mxu0 %v586
    %v2223 = vpop.f32.mrf.mxu0
    %v2224 = vadd.f32 %v2184, %v2223
    %v2225 = vpop.f32.mrf.mxu0
    %v2226 = vpop.f32.mrf.mxu0
    %v2227 = vpop.f32.mrf.mxu0
    %2228 = vdwg.mxu0
    %2229 = vmatprep.subr.bf16.mxu0 0
    %2230 = vmatpush1.bf16.msra.mxu0 %v1596
    %2231 = vmatprep.subr.bf16.mxu0 0
    %2232 = vmatpush1.bf16.msra.mxu0 %v1595
    %2233 = vmatprep.subr.bf16.mxu0 0
    %2234 = vmatpush1.bf16.msra.mxu0 %v1594
    %2235 = vmatprep.subr.bf16.mxu0 0
    %2236 = vmatpush1.bf16.msra.mxu0 %v1593
    %2237 = vmatprep.subr.bf16.mxu0 0
    %2238 = vmatpush1.bf16.msra.mxu0 %v1592
    %2239 = vmatprep.subr.bf16.mxu0 0
    %2240 = vmatpush1.bf16.msra.mxu0 %v1591
    %2241 = vmatprep.subr.bf16.mxu0 0
    %2242 = vmatpush1.bf16.msra.mxu0 %v1590
    %2243 = vmatprep.subr.bf16.mxu0 0
    %2244 = vmatpush1.bf16.msra.mxu0 %v1589
    %2245 = vmatprep.subr.bf16.mxu0 0
    %2246 = vmatpush2.bf16.msra.mxu0 %v1604
    %2247 = vmatprep.subr.bf16.mxu0 0
    %2248 = vmatpush2.bf16.msra.mxu0 %v1603
    %2249 = vmatprep.subr.bf16.mxu0 0
    %2250 = vmatpush2.bf16.msra.mxu0 %v1602
    %2251 = vmatprep.subr.bf16.mxu0 0
    %2252 = vmatpush2.bf16.msra.mxu0 %v1601
    %2253 = vmatprep.subr.bf16.mxu0 0
    %2254 = vmatpush2.bf16.msra.mxu0 %v1600
    %2255 = vmatprep.subr.bf16.mxu0 0
    %2256 = vmatpush2.bf16.msra.mxu0 %v1599
    %2257 = vmatprep.subr.bf16.mxu0 0
    %2258 = vmatpush2.bf16.msra.mxu0 %v1598
    %2259 = vmatprep.subr.bf16.mxu0 0
    %2260 = vmatpush2.bf16.msra.mxu0 %v1597
    %2261 = vmatprep.mubr.bf16.mxu0 %v585
    %2262 = vmatmul.mubr.bf16.gmra.mxu0 %v571
    %v2263 = vpop.f32.mrf.mxu0
    %v2264 = vadd.f32 %v2224, %v2263
    %v2265 = vpop.f32.mrf.mxu0
    %v2266 = vpop.f32.mrf.mxu0
    %v2267 = vpop.f32.mrf.mxu0
    %2268 = vdwg.mxu0
    %2269 = vmatprep.subr.bf16.mxu0 0
    %2270 = vmatpush1.bf16.msra.mxu0 %v1612
    %2271 = vmatprep.subr.bf16.mxu0 0
    %2272 = vmatpush1.bf16.msra.mxu0 %v1611
    %2273 = vmatprep.subr.bf16.mxu0 0
    %2274 = vmatpush1.bf16.msra.mxu0 %v1610
    %2275 = vmatprep.subr.bf16.mxu0 0
    %2276 = vmatpush1.bf16.msra.mxu0 %v1609
    %2277 = vmatprep.subr.bf16.mxu0 0
    %2278 = vmatpush1.bf16.msra.mxu0 %v1608
    %2279 = vmatprep.subr.bf16.mxu0 0
    %2280 = vmatpush1.bf16.msra.mxu0 %v1607
    %2281 = vmatprep.subr.bf16.mxu0 0
    %2282 = vmatpush1.bf16.msra.mxu0 %v1606
    %2283 = vmatprep.subr.bf16.mxu0 0
    %2284 = vmatpush1.bf16.msra.mxu0 %v1605
    %2285 = vmatprep.subr.bf16.mxu0 0
    %2286 = vmatpush2.bf16.msra.mxu0 %v1620
    %2287 = vmatprep.subr.bf16.mxu0 0
    %2288 = vmatpush2.bf16.msra.mxu0 %v1619
    %2289 = vmatprep.subr.bf16.mxu0 0
    %2290 = vmatpush2.bf16.msra.mxu0 %v1618
    %2291 = vmatprep.subr.bf16.mxu0 0
    %2292 = vmatpush2.bf16.msra.mxu0 %v1617
    %2293 = vmatprep.subr.bf16.mxu0 0
    %2294 = vmatpush2.bf16.msra.mxu0 %v1616
    %2295 = vmatprep.subr.bf16.mxu0 0
    %2296 = vmatpush2.bf16.msra.mxu0 %v1615
    %2297 = vmatprep.subr.bf16.mxu0 0
    %2298 = vmatpush2.bf16.msra.mxu0 %v1614
    %2299 = vmatprep.subr.bf16.mxu0 0
    %2300 = vmatpush2.bf16.msra.mxu0 %v1613
    %2301 = vmatprep.mubr.bf16.mxu0 %v589
    %2302 = vmatmul.mubr.bf16.gmra.mxu0 %v587
    %v2303 = vpop.f32.mrf.mxu0
    %v2304 = vadd.f32 %v2264, %v2303
    %v2305 = vpop.f32.mrf.mxu0
    %v2306 = vpop.f32.mrf.mxu0
    %v2307 = vpop.f32.mrf.mxu0
    %2308 = vdwg.mxu0
    %2309 = vmatprep.subr.bf16.mxu0 0
    %2310 = vmatpush1.bf16.msra.mxu0 %v1628
    %2311 = vmatprep.subr.bf16.mxu0 0
    %2312 = vmatpush1.bf16.msra.mxu0 %v1627
    %2313 = vmatprep.subr.bf16.mxu0 0
    %2314 = vmatpush1.bf16.msra.mxu0 %v1626
    %2315 = vmatprep.subr.bf16.mxu0 0
    %2316 = vmatpush1.bf16.msra.mxu0 %v1625
    %2317 = vmatprep.subr.bf16.mxu0 0
    %2318 = vmatpush1.bf16.msra.mxu0 %v1624
    %2319 = vmatprep.subr.bf16.mxu0 0
    %2320 = vmatpush1.bf16.msra.mxu0 %v1623
    %2321 = vmatprep.subr.bf16.mxu0 0
    %2322 = vmatpush1.bf16.msra.mxu0 %v1622
    %2323 = vmatprep.subr.bf16.mxu0 0
    %2324 = vmatpush1.bf16.msra.mxu0 %v1621
    %2325 = vmatprep.subr.bf16.mxu0 0
    %2326 = vmatpush2.bf16.msra.mxu0 0
    %2327 = vmatprep.subr.bf16.mxu0 0
    %2328 = vmatpush2.bf16.msra.mxu0 0
    %2329 = vmatprep.subr.bf16.mxu0 0
    %2330 = vmatpush2.bf16.msra.mxu0 0
    %2331 = vmatprep.subr.bf16.mxu0 0
    %2332 = vmatpush2.bf16.msra.mxu0 0
    %2333 = vmatprep.subr.bf16.mxu0 0
    %2334 = vmatpush2.bf16.msra.mxu0 0
    %2335 = vmatprep.subr.bf16.mxu0 0
    %2336 = vmatpush2.bf16.msra.mxu0 0
    %2337 = vmatprep.subr.bf16.mxu0 0
    %2338 = vmatpush2.bf16.msra.mxu0 0
    %2339 = vmatprep.subr.bf16.mxu0 0
    %2340 = vmatpush2.bf16.msra.mxu0 0
    %2341 = vmatprep.mubr.bf16.mxu0 0
    %2342 = vmatmul.mubr.bf16.gmra.mxu0 %v603
    %v2343 = vpop.f32.mrf.mxu0
    %v2344 = vadd.f32 %v2304, %v2343
    %v2345 = vpop.f32.mrf.mxu0
    %v2346 = vpop.f32.mrf.mxu0
    %v2347 = vpop.f32.mrf.mxu0
    %2348 = vdwg.mxu0
    %v2349 = vmax.f32 %v2344, 0.0
    %v2350 = vpack.c.bf16 %v2349, %v2349
    %v2351 = vld [vmem:[%s3] sm:$0xf]
    %v2352 = vld [vmem:[%s3 + $0x4] sm:$0xf]
    %v2353 = vld [vmem:[%s3 + $0x8] sm:$0xf]
    %v2354 = vld [vmem:[%s3 + $0xc] sm:$0xf]
    %v2355 = vld [vmem:[%s3 + $0x10] sm:$0xf]
    %v2356 = vld [vmem:[%s3 + $0x14] sm:$0xf]
    %v2357 = vld [vmem:[%s3 + $0x18] sm:$0xf]
    %v2358 = vld [vmem:[%s3 + $0x1c] sm:$0xf]
    %v2359 = vld [vmem:[%s3 + $0x20] sm:$0xf]
    %v2360 = vld [vmem:[%s3 + $0x24] sm:$0xf]
    %v2361 = vld [vmem:[%s3 + $0x28] sm:$0xf]
    %v2362 = vld [vmem:[%s3 + $0x2c] sm:$0xf]
    %v2363 = vld [vmem:[%s3 + $0x30] sm:$0xf]
    %v2364 = vld [vmem:[%s3 + $0x34] sm:$0xf]
    %v2365 = vld [vmem:[%s3 + $0x38] sm:$0xf]
    %v2366 = vld [vmem:[%s3 + $0x3c] sm:$0xf]
    %v2367 = vld [vmem:[%s4] sm:$0x1]
    %v2369 = vlaneseq
    %v2370 = vshrl.u32 %v2369, 7
    %v2371 = vsub.s32 0, %v2370
    %v2372 = vrot.slane %v2367, %v2371
    %v2390 = vunpack.c.l.b16 %v2351
    %v2391 = vunpack.c.l.b16 %v2352
    %v2392 = vunpack.c.l.b16 %v2353
    %v2393 = vunpack.c.l.b16 %v2354
    %v2394 = vunpack.c.l.b16 %v2355
    %v2395 = vunpack.c.l.b16 %v2356
    %v2396 = vunpack.c.l.b16 %v2357
    %v2397 = vunpack.c.l.b16 %v2358
    %v2398 = vunpack.c.l.b16 %v2359
    %v2399 = vunpack.c.l.b16 %v2360
    %v2400 = vunpack.c.l.b16 %v2361
    %v2401 = vunpack.c.l.b16 %v2362
    %v2402 = vunpack.c.l.b16 %v2363
    %v2403 = vunpack.c.l.b16 %v2364
    %v2404 = vunpack.c.l.b16 %v2365
    %v2405 = vunpack.c.l.b16 %v2366
    %v2406 = vpack.c.b16 %v2391, %v2390
    %v2407 = vpack.c.b16 %v2393, %v2392
    %v2408 = vpack.c.b16 %v2395, %v2394
    %v2409 = vpack.c.b16 %v2397, %v2396
    %v2410 = vpack.c.b16 %v2399, %v2398
    %v2411 = vpack.c.b16 %v2401, %v2400
    %v2412 = vpack.c.b16 %v2403, %v2402
    %v2413 = vpack.c.b16 %v2405, %v2404
    %2422 = vmatprep.subr.bf16.mxu0 0
    %2423 = vmatpush1.bf16.msra.mxu0 %v2413
    %2424 = vmatprep.subr.bf16.mxu0 0
    %2425 = vmatpush1.bf16.msra.mxu0 %v2412
    %2426 = vmatprep.subr.bf16.mxu0 0
    %2427 = vmatpush1.bf16.msra.mxu0 %v2411
    %2428 = vmatprep.subr.bf16.mxu0 0
    %2429 = vmatpush1.bf16.msra.mxu0 %v2410
    %2430 = vmatprep.subr.bf16.mxu0 0
    %2431 = vmatpush1.bf16.msra.mxu0 %v2409
    %2432 = vmatprep.subr.bf16.mxu0 0
    %2433 = vmatpush1.bf16.msra.mxu0 %v2408
    %2434 = vmatprep.subr.bf16.mxu0 0
    %2435 = vmatpush1.bf16.msra.mxu0 %v2407
    %2436 = vmatprep.subr.bf16.mxu0 0
    %2437 = vmatpush1.bf16.msra.mxu0 %v2406
    %2438 = vmatprep.subr.bf16.mxu0 0
    %2439 = vmatpush2.bf16.msra.mxu0 0
    %2440 = vmatprep.subr.bf16.mxu0 0
    %2441 = vmatpush2.bf16.msra.mxu0 0
    %2442 = vmatprep.subr.bf16.mxu0 0
    %2443 = vmatpush2.bf16.msra.mxu0 0
    %2444 = vmatprep.subr.bf16.mxu0 0
    %2445 = vmatpush2.bf16.msra.mxu0 0
    %2446 = vmatprep.subr.bf16.mxu0 0
    %2447 = vmatpush2.bf16.msra.mxu0 0
    %2448 = vmatprep.subr.bf16.mxu0 0
    %2449 = vmatpush2.bf16.msra.mxu0 0
    %2450 = vmatprep.subr.bf16.mxu0 0
    %2451 = vmatpush2.bf16.msra.mxu0 0
    %2452 = vmatprep.subr.bf16.mxu0 0
    %2453 = vmatpush2.bf16.msra.mxu0 0
    %2454 = vmatprep.mubr.bf16.mxu0 0
    %2455 = vmatmul.mubr.bf16.gmra.mxu0 %v2350
    %v2456 = vpop.f32.mrf.mxu0
    %v2457 = vadd.f32 %v2372, %v2456
    %v2458 = vpop.f32.mrf.mxu0
    %v2459 = vpop.f32.mrf.mxu0
    %v2460 = vpop.f32.mrf.mxu0
    %2461 = vdwg.mxu0
    %v2462 = vmax.f32 %v2457, 0.0
    %v2463 = vpack.c.bf16 %v2462, %v2462
    %v2464 = vld [vmem:[%s5] sm:$0xf]
    %v2465 = vld [vmem:[%s5 + $0x4] sm:$0xf]
    %v2466 = vld [vmem:[%s5 + $0x8] sm:$0xf]
    %v2467 = vld [vmem:[%s5 + $0xc] sm:$0xf]
    %v2468 = vld [vmem:[%s5 + $0x10] sm:$0xf]
    %v2469 = vld [vmem:[%s5 + $0x14] sm:$0xf]
    %v2470 = vld [vmem:[%s5 + $0x18] sm:$0xf]
    %v2471 = vld [vmem:[%s5 + $0x1c] sm:$0xf]
    %v2472 = vld [vmem:[%s5 + $0x20] sm:$0xf]
    %v2473 = vld [vmem:[%s5 + $0x24] sm:$0xf]
    %v2474 = vld [vmem:[%s5 + $0x28] sm:$0xf]
    %v2475 = vld [vmem:[%s5 + $0x2c] sm:$0xf]
    %v2476 = vld [vmem:[%s5 + $0x30] sm:$0xf]
    %v2477 = vld [vmem:[%s5 + $0x34] sm:$0xf]
    %v2478 = vld [vmem:[%s5 + $0x38] sm:$0xf]
    %v2479 = vld [vmem:[%s5 + $0x3c] sm:$0xf]
    %v2480 = vld [vmem:[%s6] sm:$0x1]
    %v2482 = vlaneseq
    %v2483 = vshrl.u32 %v2482, 7
    %v2484 = vsub.s32 0, %v2483
    %v2485 = vrot.slane %v2480, %v2484
    %v2503 = vunpack.c.l.b16 %v2464
    %v2504 = vunpack.c.l.b16 %v2465
    %v2505 = vunpack.c.l.b16 %v2466
    %v2506 = vunpack.c.l.b16 %v2467
    %v2507 = vunpack.c.l.b16 %v2468
    %v2508 = vunpack.c.l.b16 %v2469
    %v2509 = vunpack.c.l.b16 %v2470
    %v2510 = vunpack.c.l.b16 %v2471
    %v2511 = vunpack.c.l.b16 %v2472
    %v2512 = vunpack.c.l.b16 %v2473
    %v2513 = vunpack.c.l.b16 %v2474
    %v2514 = vunpack.c.l.b16 %v2475
    %v2515 = vunpack.c.l.b16 %v2476
    %v2516 = vunpack.c.l.b16 %v2477
    %v2517 = vunpack.c.l.b16 %v2478
    %v2518 = vunpack.c.l.b16 %v2479
    %v2519 = vpack.c.b16 %v2504, %v2503
    %v2520 = vpack.c.b16 %v2506, %v2505
    %v2521 = vpack.c.b16 %v2508, %v2507
    %v2522 = vpack.c.b16 %v2510, %v2509
    %v2523 = vpack.c.b16 %v2512, %v2511
    %v2524 = vpack.c.b16 %v2514, %v2513
    %v2525 = vpack.c.b16 %v2516, %v2515
    %v2526 = vpack.c.b16 %v2518, %v2517
    %2535 = vmatprep.subr.bf16.mxu0 0
    %2536 = vmatpush1.bf16.msra.mxu0 %v2526
    %2537 = vmatprep.subr.bf16.mxu0 0
    %2538 = vmatpush1.bf16.msra.mxu0 %v2525
    %2539 = vmatprep.subr.bf16.mxu0 0
    %2540 = vmatpush1.bf16.msra.mxu0 %v2524
    %2541 = vmatprep.subr.bf16.mxu0 0
    %2542 = vmatpush1.bf16.msra.mxu0 %v2523
    %2543 = vmatprep.subr.bf16.mxu0 0
    %2544 = vmatpush1.bf16.msra.mxu0 %v2522
    %2545 = vmatprep.subr.bf16.mxu0 0
    %2546 = vmatpush1.bf16.msra.mxu0 %v2521
    %2547 = vmatprep.subr.bf16.mxu0 0
    %2548 = vmatpush1.bf16.msra.mxu0 %v2520
    %2549 = vmatprep.subr.bf16.mxu0 0
    %2550 = vmatpush1.bf16.msra.mxu0 %v2519
    %2551 = vmatprep.subr.bf16.mxu0 0
    %2552 = vmatpush2.bf16.msra.mxu0 0
    %2553 = vmatprep.subr.bf16.mxu0 0
    %2554 = vmatpush2.bf16.msra.mxu0 0
    %2555 = vmatprep.subr.bf16.mxu0 0
    %2556 = vmatpush2.bf16.msra.mxu0 0
    %2557 = vmatprep.subr.bf16.mxu0 0
    %2558 = vmatpush2.bf16.msra.mxu0 0
    %2559 = vmatprep.subr.bf16.mxu0 0
    %2560 = vmatpush2.bf16.msra.mxu0 0
    %2561 = vmatprep.subr.bf16.mxu0 0
    %2562 = vmatpush2.bf16.msra.mxu0 0
    %2563 = vmatprep.subr.bf16.mxu0 0
    %2564 = vmatpush2.bf16.msra.mxu0 0
    %2565 = vmatprep.subr.bf16.mxu0 0
    %2566 = vmatpush2.bf16.msra.mxu0 0
    %2567 = vmatprep.mubr.bf16.mxu0 0
    %2568 = vmatmul.mubr.bf16.gmra.mxu0 %v2463
    %v2569 = vpop.f32.mrf.mxu0
    %v2570 = vadd.f32 %v2485, %v2569
    %v2571 = vpop.f32.mrf.mxu0
    %v2572 = vpop.f32.mrf.mxu0
    %v2573 = vpop.f32.mrf.mxu0
    %2574 = vdwg.mxu0
    %2575 = vst [vmem:[#allocation2] sm:$0x3] %v2570
    // Predicated region
    $region30: #{net_forward.5} parent=1 // pred_check
      _
    $region31: #{net_forward.5} parent=1 // pred_check_branch
      %2577 = sbr.rel (0) target = $region33
    $region32: #{net_forward.5} parent=1 // pred_region
      %s2579 = ssub.s32 32, 32
      %2580 = vsyncadd [#allocation3], %s2579
      %s2582 = sshll.u32 [#allocation2], 4
      %s2583 = int_to_ptr.vmem [resolvable:$true] %s2582
      %2585 = dma.vmem_to_hbm [thread:$0]  %s2583, 32, %s7, [#allocation3]
    $region33: #{net_forward.5} parent=1 // pred_fallthru
      _
    // Predicated region
    $region34: #{net_forward.5} parent=1 // pred_check
      _
    $region35: #{net_forward.5} parent=1 // pred_check_branch
      %2587 = sbr.rel (0) target = $region37
    $region36: #{net_forward.5} parent=1 // pred_region
      %2588 = dma.done [#allocation3], 32
    $region37: #{net_forward.5} parent=1 // pred_fallthru
      _
    %2589 = vsyncpa [#allocation3], 1

</llo_original>
